<compile_context>
chip_gen: v7x
topology: tpu7x:2x2x1
jax: 0.10.0
libtpu: 0.0.40
codegen_flags: <defaults>
</compile_context>

<pallas_src>
import functools

import jax
import jax.numpy as jnp
from jax.experimental import pallas as pl
from jax.experimental.pallas import tpu as pltpu

# ---------------- small synthetic BERT config (logical sizes) ----------------
VOCAB = 128
TYPE_VOCAB = 2
MAX_POS = 16
HIDDEN = 32
NUM_HEADS = 4
HEAD_DIM = HIDDEN // NUM_HEADS          # 8
INTERMEDIATE = 64
NUM_LAYERS = 2
PROJECT_DIM = 16
LN_EPS = 1e-12

BATCH = 2
SEQ = 8

# ---------------- lane-padded sizes used inside the kernel ----------------
HP = 128                                 # padded hidden (lane-dense)
IP = 128                                 # padded intermediate
PP = 128                                 # padded projection
DP = HP // NUM_HEADS                     # 32, padded per-head dim


# ---------------- fused encoder kernel (whole batch in one grid step) ----------------
def fused_encoder_kernel(B, S, rep_pos,
                         emb_ref, bias_ref, emb_g_ref, emb_b_ref,
                         wqkv_ref, bqkv_ref, wo_ref, bo_ref,
                         ln1g_ref, ln1b_ref, w1_ref, b1_ref,
                         w2_ref, b2_ref, ln2g_ref, ln2b_ref,
                         projw_ref, projb_ref,
                         seq_ref, pooled_ref):
    rows = B * S

    # validity mask over padded hidden lanes (true dims < HIDDEN); built once, hoisted
    lane_ids = jax.lax.broadcasted_iota(jnp.int32, (1, HP), 1)
    h_mask = (lane_ids < HIDDEN).astype(jnp.float32)
    inv_h = 1.0 / HIDDEN

    def ln(x, g, b):
        # torch.nn.LayerNorm over the TRUE hidden dims only (padded lanes masked out).
        mu = jnp.sum(x, axis=-1, keepdims=True) * inv_h
        dm = (x - mu) * h_mask
        var = jnp.sum(dm * dm, axis=-1, keepdims=True) * inv_h
        return dm * jax.lax.rsqrt(var + LN_EPS) * g + b

    # embedding LayerNorm (fused into the same kernel); bf16 input upcast to f32
    x = ln(emb_ref[...].astype(jnp.float32), emb_g_ref[...], emb_b_ref[...])   # (rows, HP)

    bias = bias_ref[...]                          # (B, 1, S) additive attention-mask bias
    scale = 1.0 / (HEAD_DIM ** 0.5)

    # TODO(synk): replace with lax.fori_loop (or a streamed layer grid axis) at real depth.
    for l in range(NUM_LAYERS):                   # static unroll (toy depth)
        xb = x.astype(jnp.bfloat16)

        # fused QKV: one lane-dense (rows, HP) @ (HP, 3*HP) MXU matmul, f32 accumulate
        qkv = jnp.dot(xb, wqkv_ref[l], preferred_element_type=jnp.float32) + bqkv_ref[l]
        q = (qkv[:, 0:HP] * scale).astype(jnp.bfloat16)        # 128-aligned slices,
        k = qkv[:, HP:2 * HP].astype(jnp.bfloat16)             # one bf16 cast each
        v = qkv[:, 2 * HP:3 * HP].astype(jnp.bfloat16)

        # multi-head attention: context stays in vregs; WO applied per head-row-block
        attn = jnp.zeros((rows, HP), jnp.float32)
        for h in range(NUM_HEADS):
            sl = slice(h * DP, (h + 1) * DP)
            q_h = q[:, sl].reshape(B, S, DP)
            k_h = k[:, sl].reshape(B, S, DP)
            v_h = v[:, sl].reshape(B, S, DP)
            # batched over batch dim, no explicit K transpose
            s_h = jnp.einsum('bqd,bkd->bqk', q_h, k_h,
                             preferred_element_type=jnp.float32) + bias       # (B,S,S)
            s_h = s_h - jnp.max(s_h, axis=-1, keepdims=True)
            p = jnp.exp(s_h)
            p = p * pl.reciprocal(jnp.sum(p, axis=-1, keepdims=True), approx=True)
            ctx = jnp.einsum('bqk,bkd->bqd', p.astype(jnp.bfloat16), v_h,
                             preferred_element_type=jnp.float32)              # (B,S,DP)
            # output projection decomposed per head -> no ctx concat, no VMEM scratch
            attn = attn + jnp.dot(ctx.reshape(rows, DP).astype(jnp.bfloat16),
                                  wo_ref[l, h * DP:(h + 1) * DP, :],
                                  preferred_element_type=jnp.float32)

        h1 = ln(attn + bo_ref[l] + x, ln1g_ref[l], ln1b_ref[l])

        inter = jnp.dot(h1.astype(jnp.bfloat16), w1_ref[l],
                        preferred_element_type=jnp.float32) + b1_ref[l]
        # TODO(synk): HF BERT uses exact erf-GELU; tanh approximation used here because
        # erf lowering support in Mosaic is not guaranteed.
        inter = jax.nn.gelu(inter, approximate=True)
        ffn = jnp.dot(inter.astype(jnp.bfloat16), w2_ref[l],
                      preferred_element_type=jnp.float32) + b2_ref[l]
        x = ln(ffn + h1, ln2g_ref[l], ln2b_ref[l])

    seq_ref[...] = x                                            # (rows, HP) lane-dense store

    # pooled_output = sequence_output[:, rep_pos, :] ; then encode_proj, all fused
    pooled = x.reshape(B, S, HP)[:, rep_pos, :]                 # (B, HP)
    pooled_ref[...] = (jnp.dot(pooled.astype(jnp.bfloat16), projw_ref[...],
                               preferred_element_type=jnp.float32) + projb_ref[...])


# ---------------- Pallas wrapper ----------------
def fused_encoder_pallas(emb_pad, attn_bias, p, rep_pos, B, S):
    rows = B * S

    weights = [p['emb_ln_g'], p['emb_ln_b'],
               p['wqkv'], p['bqkv'], p['wo'], p['bo'],
               p['ln1_g'], p['ln1_b'], p['w1'], p['b1'],
               p['w2'], p['b2'], p['ln2_g'], p['ln2_b'],
               p['proj_w'], p['proj_b']]

    def full_spec(arr):
        nd = arr.ndim
        return pl.BlockSpec(arr.shape, lambda i, nd=nd: (0,) * nd)

    in_specs = ([full_spec(emb_pad), full_spec(attn_bias)]
                + [full_spec(w) for w in weights])

    out_shape = (jax.ShapeDtypeStruct((rows, HP), jnp.float32),   # lane-dense seq slab
                 jax.ShapeDtypeStruct((B, PP), jnp.float32))      # lane-dense pooled slab
    out_specs = (pl.BlockSpec((rows, HP), lambda i: (0, 0)),
                 pl.BlockSpec((B, PP), lambda i: (0, 0)))

    seq_flat, pooled_pad = pl.pallas_call(
        functools.partial(fused_encoder_kernel, B, S, rep_pos),
        out_shape=out_shape,
        grid=(1,),                                   # whole batch per step (toy size)
        in_specs=in_specs,
        out_specs=out_specs,
        compiler_params=pltpu.CompilerParams(
            dimension_semantics=("arbitrary",)),
    )(emb_pad, attn_bias, *weights)

    seq = seq_flat.reshape(B, S, HP)[:, :, :HIDDEN]
    pooled = pooled_pad[:, :PROJECT_DIM]
    return seq, pooled


# ---------------- parameters (deterministic synthetic init, lane-padded) ----------------
def init_params(key):
    ks = jax.random.split(key, 8)

    def nrm(k, shape):
        return 0.02 * jax.random.normal(k, shape, jnp.float32)

    def pad_axis(a, axis, new):
        cfg = [(0, 0)] * a.ndim
        cfg[axis] = (0, new - a.shape[axis])
        return jnp.pad(a, cfg)

    def head_pad_last(a):
        # last axis is a concat-of-heads hidden axis [h0(d), h1(d), ...]:
        # pad each head block from HEAD_DIM to DP lanes
        lead = a.shape[:-1]
        a = a.reshape(lead + (NUM_HEADS, HEAD_DIM))
        a = pad_axis(a, a.ndim - 1, DP)
        return a.reshape(lead + (NUM_HEADS * DP,))

    def head_pad_axis(a, axis):
        a = jnp.moveaxis(a, axis, -1)
        a = head_pad_last(a)
        return jnp.moveaxis(a, -1, axis)

    L, H, I = NUM_LAYERS, HIDDEN, INTERMEDIATE

    # logical weights (as the torch module would hold) -> padded layouts for the kernel
    wqkv = nrm(ks[3], (L, H, 3 * H))
    wq, wk, wv = wqkv[..., :H], wqkv[..., H:2 * H], wqkv[..., 2 * H:]
    wqkv_pad = jnp.concatenate(
        [head_pad_last(wq), head_pad_last(wk), head_pad_last(wv)], axis=-1)   # (L, H, 3*HP)
    wqkv_pad = pad_axis(wqkv_pad, 1, HP).astype(jnp.bfloat16)                  # (L, HP, 3*HP)

    wo = nrm(ks[4], (L, H, H))
    wo_pad = pad_axis(head_pad_axis(wo, 1), 2, HP).astype(jnp.bfloat16)        # (L, HP, HP)

    w1 = nrm(ks[5], (L, H, I))
    w1_pad = pad_axis(pad_axis(w1, 1, HP), 2, IP).astype(jnp.bfloat16)         # (L, HP, IP)
    w2 = nrm(ks[6], (L, I, H))
    w2_pad = pad_axis(pad_axis(w2, 1, IP), 2, HP).astype(jnp.bfloat16)         # (L, IP, HP)

    proj_w = nrm(ks[7], (H, PROJECT_DIM))
    proj_pad = pad_axis(pad_axis(proj_w, 0, HP), 1, PP).astype(jnp.bfloat16)   # (HP, PP)

    return dict(
        word_emb=nrm(ks[0], (VOCAB, H)),
        pos_emb=nrm(ks[1], (MAX_POS, H)),
        type_emb=nrm(ks[2], (TYPE_VOCAB, H)),
        emb_ln_g=pad_axis(jnp.ones((1, H), jnp.float32), 1, HP),
        emb_ln_b=jnp.zeros((1, HP), jnp.float32),
        wqkv=wqkv_pad,
        bqkv=jnp.zeros((L, 1, 3 * HP), jnp.float32),
        wo=wo_pad,
        bo=jnp.zeros((L, 1, HP), jnp.float32),
        ln1_g=pad_axis(jnp.ones((L, 1, H), jnp.float32), 2, HP),
        ln1_b=jnp.zeros((L, 1, HP), jnp.float32),
        w1=w1_pad,
        b1=jnp.zeros((L, 1, IP), jnp.float32),
        w2=w2_pad,
        b2=jnp.zeros((L, 1, HP), jnp.float32),
        ln2_g=pad_axis(jnp.ones((L, 1, H), jnp.float32), 2, HP),
        ln2_b=jnp.zeros((L, 1, HP), jnp.float32),
        proj_w=proj_pad,
        proj_b=jnp.zeros((1, PP), jnp.float32),
    )


# ---------------- HFBertEncoder.forward equivalent ----------------
def hf_bert_encoder_forward(params, input_ids, token_type_ids, attention_mask,
                            representation_token_pos=0):
    B, S = input_ids.shape
    pos_ids = jnp.arange(S, dtype=jnp.int32)

    # embedding gathers = plain-JAX glue; LN is done inside the fused kernel
    emb = (params['word_emb'][input_ids]
           + params['pos_emb'][pos_ids][None, :, :]
           + params['type_emb'][token_type_ids])                               # (B, S, H) f32
    # zero-pad hidden to 128 lanes, flatten rows, feed as bf16 (halves activation DMA)
    emb_pad = jnp.pad(emb, ((0, 0), (0, 0), (0, HP - HIDDEN)))
    emb_pad = emb_pad.reshape(B * S, HP).astype(jnp.bfloat16)

    # HF extended attention mask: (1 - mask) * -10000, broadcast over query positions
    attn_bias = ((1.0 - attention_mask.astype(jnp.float32)) * -10000.0)[:, None, :]  # (B,1,S)

    static_pos = representation_token_pos if isinstance(representation_token_pos, int) else 0
    sequence_output, pooled_output = fused_encoder_pallas(
        emb_pad, attn_bias, params, static_pos, B, S)

    if not isinstance(representation_token_pos, int):
        # dynamic per-example token positions: gather + tiny projection in plain JAX
        rows = sequence_output[jnp.arange(B), representation_token_pos[:, 1], :]
        pooled_output = (rows @ params['proj_w'][:HIDDEN, :PROJECT_DIM].astype(jnp.float32)
                         + params['proj_b'][:, :PROJECT_DIM])

    hidden_states = None  # config.output_hidden_states is False
    return sequence_output, pooled_output, hidden_states


if __name__ == "__main__":
    key = jax.random.PRNGKey(0)
    pkey, ikey = jax.random.split(key)
    params = init_params(pkey)

    input_ids = jax.random.randint(ikey, (BATCH, SEQ), 0, VOCAB, dtype=jnp.int32)
    token_type_ids = jnp.zeros((BATCH, SEQ), jnp.int32)
    attention_mask = jnp.ones((BATCH, SEQ), jnp.float32)

    seq_out, pooled, hidden = hf_bert_encoder_forward(
        params, input_ids, token_type_ids, attention_mask, representation_token_pos=0)
    jax.block_until_ready(seq_out)
    jax.block_until_ready(pooled)
    assert seq_out.shape == (BATCH, SEQ, HIDDEN)
    assert pooled.shape == (BATCH, PROJECT_DIM)
    assert hidden is None
    print("KERNEL_OK")
</pallas_src>

<mosaic_0001>
module attributes {stable_mosaic.version = 11 : i64} {
  func.func @fused_encoder_kernel(%arg0: i32, %arg1: memref<16x128xbf16, #tpu.memory_space<vmem>>, %arg2: memref<2x1x8xf32, #tpu.memory_space<vmem>>, %arg3: memref<1x128xf32, #tpu.memory_space<vmem>>, %arg4: memref<1x128xf32, #tpu.memory_space<vmem>>, %arg5: memref<2x128x384xbf16, #tpu.memory_space<vmem>>, %arg6: memref<2x1x384xf32, #tpu.memory_space<vmem>>, %arg7: memref<2x128x128xbf16, #tpu.memory_space<vmem>>, %arg8: memref<2x1x128xf32, #tpu.memory_space<vmem>>, %arg9: memref<2x1x128xf32, #tpu.memory_space<vmem>>, %arg10: memref<2x1x128xf32, #tpu.memory_space<vmem>>, %arg11: memref<2x128x128xbf16, #tpu.memory_space<vmem>>, %arg12: memref<2x1x128xf32, #tpu.memory_space<vmem>>, %arg13: memref<2x128x128xbf16, #tpu.memory_space<vmem>>, %arg14: memref<2x1x128xf32, #tpu.memory_space<vmem>>, %arg15: memref<2x1x128xf32, #tpu.memory_space<vmem>>, %arg16: memref<2x1x128xf32, #tpu.memory_space<vmem>>, %arg17: memref<128x128xbf16, #tpu.memory_space<vmem>>, %arg18: memref<1x128xf32, #tpu.memory_space<vmem>>, %arg19: memref<16x128xf32, #tpu.memory_space<vmem>>, %arg20: memref<2x128xf32, #tpu.memory_space<vmem>>) attributes {dimension_semantics = [#tpu.dimension_semantics<arbitrary>], iteration_bounds = array<i64: 1>, scalar_prefetch = 0 : i64, scratch_operands = 0 : i64, tpu.core_type = #tpu.core_type<tc>, window_params = [{pipeline_mode = #tpu.pipeline_mode<synchronous>, transform_indices = @transform_0, window_bounds = array<i64: 16, 128>}, {pipeline_mode = #tpu.pipeline_mode<synchronous>, transform_indices = @transform_1, window_bounds = array<i64: 2, 1, 8>}, {pipeline_mode = #tpu.pipeline_mode<synchronous>, transform_indices = @transform_2, window_bounds = array<i64: 1, 128>}, {pipeline_mode = #tpu.pipeline_mode<synchronous>, transform_indices = @transform_3, window_bounds = array<i64: 1, 128>}, {pipeline_mode = #tpu.pipeline_mode<synchronous>, transform_indices = @transform_4, window_bounds = array<i64: 2, 128, 384>}, {pipeline_mode = #tpu.pipeline_mode<synchronous>, transform_indices = @transform_5, window_bounds = array<i64: 2, 1, 384>}, {pipeline_mode = #tpu.pipeline_mode<synchronous>, transform_indices = @transform_6, window_bounds = array<i64: 2, 128, 128>}, {pipeline_mode = #tpu.pipeline_mode<synchronous>, transform_indices = @transform_7, window_bounds = array<i64: 2, 1, 128>}, {pipeline_mode = #tpu.pipeline_mode<synchronous>, transform_indices = @transform_8, window_bounds = array<i64: 2, 1, 128>}, {pipeline_mode = #tpu.pipeline_mode<synchronous>, transform_indices = @transform_9, window_bounds = array<i64: 2, 1, 128>}, {pipeline_mode = #tpu.pipeline_mode<synchronous>, transform_indices = @transform_10, window_bounds = array<i64: 2, 128, 128>}, {pipeline_mode = #tpu.pipeline_mode<synchronous>, transform_indices = @transform_11, window_bounds = array<i64: 2, 1, 128>}, {pipeline_mode = #tpu.pipeline_mode<synchronous>, transform_indices = @transform_12, window_bounds = array<i64: 2, 128, 128>}, {pipeline_mode = #tpu.pipeline_mode<synchronous>, transform_indices = @transform_13, window_bounds = array<i64: 2, 1, 128>}, {pipeline_mode = #tpu.pipeline_mode<synchronous>, transform_indices = @transform_14, window_bounds = array<i64: 2, 1, 128>}, {pipeline_mode = #tpu.pipeline_mode<synchronous>, transform_indices = @transform_15, window_bounds = array<i64: 2, 1, 128>}, {pipeline_mode = #tpu.pipeline_mode<synchronous>, transform_indices = @transform_16, window_bounds = array<i64: 128, 128>}, {pipeline_mode = #tpu.pipeline_mode<synchronous>, transform_indices = @transform_17, window_bounds = array<i64: 1, 128>}, {pipeline_mode = #tpu.pipeline_mode<synchronous>, transform_indices = @transform_18, window_bounds = array<i64: 16, 128>}, {pipeline_mode = #tpu.pipeline_mode<synchronous>, transform_indices = @transform_19, window_bounds = array<i64: 2, 128>}]} {
    %0 = tpu.iota {dimensions = array<i32: 1>} : vector<1x128xi32>
    %c32_i32 = arith.constant 32 : i32
    %1 = vector.broadcast %c32_i32 : i32 to vector<1x128xi32>
    %2 = arith.cmpi slt, %0, %1 : vector<1x128xi32>
    %3 = arith.extui %2 : vector<1x128xi1> to vector<1x128xi32>
    %4 = arith.sitofp %3 : vector<1x128xi32> to vector<1x128xf32>
    %c0 = arith.constant 0 : index
    %c0_0 = arith.constant 0 : index
    %5 = vector.load %arg1[%c0, %c0_0] : memref<16x128xbf16, #tpu.memory_space<vmem>>, vector<16x128xbf16>
    %6 = arith.extf %5 : vector<16x128xbf16> to vector<16x128xf32>
    %c0_1 = arith.constant 0 : index
    %c0_2 = arith.constant 0 : index
    %7 = vector.load %arg3[%c0_1, %c0_2] : memref<1x128xf32, #tpu.memory_space<vmem>>, vector<1x128xf32>
    %c0_3 = arith.constant 0 : index
    %c0_4 = arith.constant 0 : index
    %8 = vector.load %arg4[%c0_3, %c0_4] : memref<1x128xf32, #tpu.memory_space<vmem>>, vector<1x128xf32>
    %cst = arith.constant dense<0.000000e+00> : vector<16xf32>
    %9 = vector.multi_reduction <add>, %6, %cst [1] : vector<16x128xf32> to vector<16xf32>
    %10 = vector.shape_cast %9 : vector<16xf32> to vector<16x1xf32>
    %cst_5 = arith.constant 3.125000e-02 : f32
    %11 = vector.broadcast %cst_5 : f32 to vector<16x1xf32>
    %12 = arith.mulf %10, %11 : vector<16x1xf32>
    %13 = vector.broadcast %12 : vector<16x1xf32> to vector<16x128xf32>
    %14 = arith.subf %6, %13 : vector<16x128xf32>
    %15 = vector.broadcast %4 : vector<1x128xf32> to vector<16x128xf32>
    %16 = arith.mulf %14, %15 : vector<16x128xf32>
    %17 = arith.mulf %16, %16 : vector<16x128xf32>
    %cst_6 = arith.constant dense<0.000000e+00> : vector<16xf32>
    %18 = vector.multi_reduction <add>, %17, %cst_6 [1] : vector<16x128xf32> to vector<16xf32>
    %19 = vector.shape_cast %18 : vector<16xf32> to vector<16x1xf32>
    %cst_7 = arith.constant 3.125000e-02 : f32
    %20 = vector.broadcast %cst_7 : f32 to vector<16x1xf32>
    %21 = arith.mulf %19, %20 : vector<16x1xf32>
    %cst_8 = arith.constant 9.99999996E-13 : f32
    %22 = vector.broadcast %cst_8 : f32 to vector<16x1xf32>
    %23 = arith.addf %21, %22 : vector<16x1xf32>
    %24 = math.rsqrt %23 : vector<16x1xf32>
    %25 = vector.broadcast %24 : vector<16x1xf32> to vector<16x128xf32>
    %26 = arith.mulf %16, %25 : vector<16x128xf32>
    %27 = vector.broadcast %7 : vector<1x128xf32> to vector<16x128xf32>
    %28 = arith.mulf %26, %27 : vector<16x128xf32>
    %29 = vector.broadcast %8 : vector<1x128xf32> to vector<16x128xf32>
    %30 = arith.addf %28, %29 : vector<16x128xf32>
    %c0_9 = arith.constant 0 : index
    %c0_10 = arith.constant 0 : index
    %c0_11 = arith.constant 0 : index
    %31 = vector.load %arg2[%c0_9, %c0_10, %c0_11] : memref<2x1x8xf32, #tpu.memory_space<vmem>>, vector<2x1x8xf32>
    %32 = arith.truncf %30 : vector<16x128xf32> to vector<16x128xbf16>
    %c0_12 = arith.constant 0 : index
    %c0_13 = arith.constant 0 : index
    %c0_14 = arith.constant 0 : index
    %33 = vector.load %arg5[%c0_12, %c0_13, %c0_14] : memref<2x128x384xbf16, #tpu.memory_space<vmem>>, vector<1x128x384xbf16>
    %34 = vector.shape_cast %33 : vector<1x128x384xbf16> to vector<128x384xbf16>
    %cst_15 = arith.constant dense<0.000000e+00> : vector<16x384xf32>
    %35 = tpu.matmul %32, %34, %cst_15 {dimension_numbers = #tpu.dot_dimension_numbers<[1], [0], [0], [1], [0, 0, 1, 1], [], []>} : vector<16x128xbf16>, vector<128x384xbf16>, vector<16x384xf32> -> vector<16x384xf32>
    %c0_16 = arith.constant 0 : index
    %c0_17 = arith.constant 0 : index
    %c0_18 = arith.constant 0 : index
    %36 = vector.load %arg6[%c0_16, %c0_17, %c0_18] : memref<2x1x384xf32, #tpu.memory_space<vmem>>, vector<1x1x384xf32>
    %37 = vector.shape_cast %36 : vector<1x1x384xf32> to vector<1x384xf32>
    %38 = vector.broadcast %37 : vector<1x384xf32> to vector<16x384xf32>
    %39 = arith.addf %35, %38 : vector<16x384xf32>
    %40 = vector.extract_strided_slice %39 {offsets = [0, 0], sizes = [16, 128], strides = [1, 1]} : vector<16x384xf32> to vector<16x128xf32>
    %cst_19 = arith.constant 0.353553385 : f32
    %41 = vector.broadcast %cst_19 : f32 to vector<16x128xf32>
    %42 = arith.mulf %40, %41 : vector<16x128xf32>
    %43 = arith.truncf %42 : vector<16x128xf32> to vector<16x128xbf16>
    %44 = vector.extract_strided_slice %39 {offsets = [0, 128], sizes = [16, 128], strides = [1, 1]} : vector<16x384xf32> to vector<16x128xf32>
    %45 = arith.truncf %44 : vector<16x128xf32> to vector<16x128xbf16>
    %46 = vector.extract_strided_slice %39 {offsets = [0, 256], sizes = [16, 128], strides = [1, 1]} : vector<16x384xf32> to vector<16x128xf32>
    %47 = arith.truncf %46 : vector<16x128xf32> to vector<16x128xbf16>
    %cst_20 = arith.constant 0.000000e+00 : f32
    %48 = vector.broadcast %cst_20 : f32 to vector<16x128xf32>
    %49 = vector.extract_strided_slice %43 {offsets = [0, 0], sizes = [16, 32], strides = [1, 1]} : vector<16x128xbf16> to vector<16x32xbf16>
    %50 = vector.shape_cast %49 : vector<16x32xbf16> to vector<2x8x32xbf16>
    %51 = vector.extract_strided_slice %45 {offsets = [0, 0], sizes = [16, 32], strides = [1, 1]} : vector<16x128xbf16> to vector<16x32xbf16>
    %52 = vector.shape_cast %51 : vector<16x32xbf16> to vector<2x8x32xbf16>
    %53 = vector.extract_strided_slice %47 {offsets = [0, 0], sizes = [16, 32], strides = [1, 1]} : vector<16x128xbf16> to vector<16x32xbf16>
    %54 = vector.shape_cast %53 : vector<16x32xbf16> to vector<2x8x32xbf16>
    "tpu.trace_start"() <{level = 10 : i32, message = "bqd,bkd->bqk"}> : () -> ()
    %cst_21 = arith.constant dense<0.000000e+00> : vector<2x8x8xf32>
    %55 = tpu.matmul %50, %52, %cst_21 {dimension_numbers = #tpu.dot_dimension_numbers<[2], [2], [1], [1], [0, 0, 0, 1, 1, 1], [0], [0]>} : vector<2x8x32xbf16>, vector<2x8x32xbf16>, vector<2x8x8xf32> -> vector<2x8x8xf32>
    "tpu.trace_stop"() : () -> ()
    %56 = vector.broadcast %31 : vector<2x1x8xf32> to vector<2x8x8xf32>
    %57 = arith.addf %55, %56 : vector<2x8x8xf32>
    %cst_22 = arith.constant dense<0xFF800000> : vector<2x8xf32>
    %58 = vector.multi_reduction <maximumf>, %57, %cst_22 [2] : vector<2x8x8xf32> to vector<2x8xf32>
    %59 = vector.shape_cast %58 : vector<2x8xf32> to vector<2x8x1xf32>
    %60 = vector.broadcast %59 : vector<2x8x1xf32> to vector<2x8x8xf32>
    %61 = arith.subf %57, %60 : vector<2x8x8xf32>
    %62 = math.exp %61 : vector<2x8x8xf32>
    %cst_23 = arith.constant dense<0.000000e+00> : vector<2x8xf32>
    %63 = vector.multi_reduction <add>, %62, %cst_23 [2] : vector<2x8x8xf32> to vector<2x8xf32>
    %64 = vector.shape_cast %63 : vector<2x8xf32> to vector<2x8x1xf32>
    %65 = tpu.reciprocal %64 {approx = true} : vector<2x8x1xf32> -> vector<2x8x1xf32>
    %66 = vector.broadcast %65 : vector<2x8x1xf32> to vector<2x8x8xf32>
    %67 = arith.mulf %62, %66 : vector<2x8x8xf32>
    %68 = arith.truncf %67 : vector<2x8x8xf32> to vector<2x8x8xbf16>
    "tpu.trace_start"() <{level = 10 : i32, message = "bqk,bkd->bqd"}> : () -> ()
    %cst_24 = arith.constant dense<0.000000e+00> : vector<2x8x32xf32>
    %69 = tpu.matmul %68, %54, %cst_24 {dimension_numbers = #tpu.dot_dimension_numbers<[2], [1], [1], [2], [0, 0, 0, 1, 1, 2], [0], [0]>} : vector<2x8x8xbf16>, vector<2x8x32xbf16>, vector<2x8x32xf32> -> vector<2x8x32xf32>
    "tpu.trace_stop"() : () -> ()
    %70 = vector.shape_cast %69 : vector<2x8x32xf32> to vector<16x32xf32>
    %71 = arith.truncf %70 : vector<16x32xf32> to vector<16x32xbf16>
    %c0_25 = arith.constant 0 : index
    %c0_26 = arith.constant 0 : index
    %c0_27 = arith.constant 0 : index
    %72 = vector.load %arg7[%c0_25, %c0_26, %c0_27] : memref<2x128x128xbf16, #tpu.memory_space<vmem>>, vector<1x32x128xbf16>
    %73 = vector.shape_cast %72 : vector<1x32x128xbf16> to vector<32x128xbf16>
    %cst_28 = arith.constant dense<0.000000e+00> : vector<16x128xf32>
    %74 = tpu.matmul %71, %73, %cst_28 {dimension_numbers = #tpu.dot_dimension_numbers<[1], [0], [0], [1], [0, 0, 1, 1], [], []>} : vector<16x32xbf16>, vector<32x128xbf16>, vector<16x128xf32> -> vector<16x128xf32>
    %75 = arith.addf %48, %74 : vector<16x128xf32>
    %76 = vector.extract_strided_slice %43 {offsets = [0, 32], sizes = [16, 32], strides = [1, 1]} : vector<16x128xbf16> to vector<16x32xbf16>
    %77 = vector.shape_cast %76 : vector<16x32xbf16> to vector<2x8x32xbf16>
    %78 = vector.extract_strided_slice %45 {offsets = [0, 32], sizes = [16, 32], strides = [1, 1]} : vector<16x128xbf16> to vector<16x32xbf16>
    %79 = vector.shape_cast %78 : vector<16x32xbf16> to vector<2x8x32xbf16>
    %80 = vector.extract_strided_slice %47 {offsets = [0, 32], sizes = [16, 32], strides = [1, 1]} : vector<16x128xbf16> to vector<16x32xbf16>
    %81 = vector.shape_cast %80 : vector<16x32xbf16> to vector<2x8x32xbf16>
    "tpu.trace_start"() <{level = 10 : i32, message = "bqd,bkd->bqk"}> : () -> ()
    %cst_29 = arith.constant dense<0.000000e+00> : vector<2x8x8xf32>
    %82 = tpu.matmul %77, %79, %cst_29 {dimension_numbers = #tpu.dot_dimension_numbers<[2], [2], [1], [1], [0, 0, 0, 1, 1, 1], [0], [0]>} : vector<2x8x32xbf16>, vector<2x8x32xbf16>, vector<2x8x8xf32> -> vector<2x8x8xf32>
    "tpu.trace_stop"() : () -> ()
    %83 = vector.broadcast %31 : vector<2x1x8xf32> to vector<2x8x8xf32>
    %84 = arith.addf %82, %83 : vector<2x8x8xf32>
    %cst_30 = arith.constant dense<0xFF800000> : vector<2x8xf32>
    %85 = vector.multi_reduction <maximumf>, %84, %cst_30 [2] : vector<2x8x8xf32> to vector<2x8xf32>
    %86 = vector.shape_cast %85 : vector<2x8xf32> to vector<2x8x1xf32>
    %87 = vector.broadcast %86 : vector<2x8x1xf32> to vector<2x8x8xf32>
    %88 = arith.subf %84, %87 : vector<2x8x8xf32>
    %89 = math.exp %88 : vector<2x8x8xf32>
    %cst_31 = arith.constant dense<0.000000e+00> : vector<2x8xf32>
    %90 = vector.multi_reduction <add>, %89, %cst_31 [2] : vector<2x8x8xf32> to vector<2x8xf32>
    %91 = vector.shape_cast %90 : vector<2x8xf32> to vector<2x8x1xf32>
    %92 = tpu.reciprocal %91 {approx = true} : vector<2x8x1xf32> -> vector<2x8x1xf32>
    %93 = vector.broadcast %92 : vector<2x8x1xf32> to vector<2x8x8xf32>
    %94 = arith.mulf %89, %93 : vector<2x8x8xf32>
    %95 = arith.truncf %94 : vector<2x8x8xf32> to vector<2x8x8xbf16>
    "tpu.trace_start"() <{level = 10 : i32, message = "bqk,bkd->bqd"}> : () -> ()
    %cst_32 = arith.constant dense<0.000000e+00> : vector<2x8x32xf32>
    %96 = tpu.matmul %95, %81, %cst_32 {dimension_numbers = #tpu.dot_dimension_numbers<[2], [1], [1], [2], [0, 0, 0, 1, 1, 2], [0], [0]>} : vector<2x8x8xbf16>, vector<2x8x32xbf16>, vector<2x8x32xf32> -> vector<2x8x32xf32>
    "tpu.trace_stop"() : () -> ()
    %97 = vector.shape_cast %96 : vector<2x8x32xf32> to vector<16x32xf32>
    %98 = arith.truncf %97 : vector<16x32xf32> to vector<16x32xbf16>
    %c0_33 = arith.constant 0 : index
    %c32 = arith.constant 32 : index
    %c0_34 = arith.constant 0 : index
    %99 = vector.load %arg7[%c0_33, %c32, %c0_34] : memref<2x128x128xbf16, #tpu.memory_space<vmem>>, vector<1x32x128xbf16>
    %100 = vector.shape_cast %99 : vector<1x32x128xbf16> to vector<32x128xbf16>
    %cst_35 = arith.constant dense<0.000000e+00> : vector<16x128xf32>
    %101 = tpu.matmul %98, %100, %cst_35 {dimension_numbers = #tpu.dot_dimension_numbers<[1], [0], [0], [1], [0, 0, 1, 1], [], []>} : vector<16x32xbf16>, vector<32x128xbf16>, vector<16x128xf32> -> vector<16x128xf32>
    %102 = arith.addf %75, %101 : vector<16x128xf32>
    %103 = vector.extract_strided_slice %43 {offsets = [0, 64], sizes = [16, 32], strides = [1, 1]} : vector<16x128xbf16> to vector<16x32xbf16>
    %104 = vector.shape_cast %103 : vector<16x32xbf16> to vector<2x8x32xbf16>
    %105 = vector.extract_strided_slice %45 {offsets = [0, 64], sizes = [16, 32], strides = [1, 1]} : vector<16x128xbf16> to vector<16x32xbf16>
    %106 = vector.shape_cast %105 : vector<16x32xbf16> to vector<2x8x32xbf16>
    %107 = vector.extract_strided_slice %47 {offsets = [0, 64], sizes = [16, 32], strides = [1, 1]} : vector<16x128xbf16> to vector<16x32xbf16>
    %108 = vector.shape_cast %107 : vector<16x32xbf16> to vector<2x8x32xbf16>
    "tpu.trace_start"() <{level = 10 : i32, message = "bqd,bkd->bqk"}> : () -> ()
    %cst_36 = arith.constant dense<0.000000e+00> : vector<2x8x8xf32>
    %109 = tpu.matmul %104, %106, %cst_36 {dimension_numbers = #tpu.dot_dimension_numbers<[2], [2], [1], [1], [0, 0, 0, 1, 1, 1], [0], [0]>} : vector<2x8x32xbf16>, vector<2x8x32xbf16>, vector<2x8x8xf32> -> vector<2x8x8xf32>
    "tpu.trace_stop"() : () -> ()
    %110 = vector.broadcast %31 : vector<2x1x8xf32> to vector<2x8x8xf32>
    %111 = arith.addf %109, %110 : vector<2x8x8xf32>
    %cst_37 = arith.constant dense<0xFF800000> : vector<2x8xf32>
    %112 = vector.multi_reduction <maximumf>, %111, %cst_37 [2] : vector<2x8x8xf32> to vector<2x8xf32>
    %113 = vector.shape_cast %112 : vector<2x8xf32> to vector<2x8x1xf32>
    %114 = vector.broadcast %113 : vector<2x8x1xf32> to vector<2x8x8xf32>
    %115 = arith.subf %111, %114 : vector<2x8x8xf32>
    %116 = math.exp %115 : vector<2x8x8xf32>
    %cst_38 = arith.constant dense<0.000000e+00> : vector<2x8xf32>
    %117 = vector.multi_reduction <add>, %116, %cst_38 [2] : vector<2x8x8xf32> to vector<2x8xf32>
    %118 = vector.shape_cast %117 : vector<2x8xf32> to vector<2x8x1xf32>
    %119 = tpu.reciprocal %118 {approx = true} : vector<2x8x1xf32> -> vector<2x8x1xf32>
    %120 = vector.broadcast %119 : vector<2x8x1xf32> to vector<2x8x8xf32>
    %121 = arith.mulf %116, %120 : vector<2x8x8xf32>
    %122 = arith.truncf %121 : vector<2x8x8xf32> to vector<2x8x8xbf16>
    "tpu.trace_start"() <{level = 10 : i32, message = "bqk,bkd->bqd"}> : () -> ()
    %cst_39 = arith.constant dense<0.000000e+00> : vector<2x8x32xf32>
    %123 = tpu.matmul %122, %108, %cst_39 {dimension_numbers = #tpu.dot_dimension_numbers<[2], [1], [1], [2], [0, 0, 0, 1, 1, 2], [0], [0]>} : vector<2x8x8xbf16>, vector<2x8x32xbf16>, vector<2x8x32xf32> -> vector<2x8x32xf32>
    "tpu.trace_stop"() : () -> ()
    %124 = vector.shape_cast %123 : vector<2x8x32xf32> to vector<16x32xf32>
    %125 = arith.truncf %124 : vector<16x32xf32> to vector<16x32xbf16>
    %c0_40 = arith.constant 0 : index
    %c64 = arith.constant 64 : index
    %c0_41 = arith.constant 0 : index
    %126 = vector.load %arg7[%c0_40, %c64, %c0_41] : memref<2x128x128xbf16, #tpu.memory_space<vmem>>, vector<1x32x128xbf16>
    %127 = vector.shape_cast %126 : vector<1x32x128xbf16> to vector<32x128xbf16>
    %cst_42 = arith.constant dense<0.000000e+00> : vector<16x128xf32>
    %128 = tpu.matmul %125, %127, %cst_42 {dimension_numbers = #tpu.dot_dimension_numbers<[1], [0], [0], [1], [0, 0, 1, 1], [], []>} : vector<16x32xbf16>, vector<32x128xbf16>, vector<16x128xf32> -> vector<16x128xf32>
    %129 = arith.addf %102, %128 : vector<16x128xf32>
    %130 = vector.extract_strided_slice %43 {offsets = [0, 96], sizes = [16, 32], strides = [1, 1]} : vector<16x128xbf16> to vector<16x32xbf16>
    %131 = vector.shape_cast %130 : vector<16x32xbf16> to vector<2x8x32xbf16>
    %132 = vector.extract_strided_slice %45 {offsets = [0, 96], sizes = [16, 32], strides = [1, 1]} : vector<16x128xbf16> to vector<16x32xbf16>
    %133 = vector.shape_cast %132 : vector<16x32xbf16> to vector<2x8x32xbf16>
    %134 = vector.extract_strided_slice %47 {offsets = [0, 96], sizes = [16, 32], strides = [1, 1]} : vector<16x128xbf16> to vector<16x32xbf16>
    %135 = vector.shape_cast %134 : vector<16x32xbf16> to vector<2x8x32xbf16>
    "tpu.trace_start"() <{level = 10 : i32, message = "bqd,bkd->bqk"}> : () -> ()
    %cst_43 = arith.constant dense<0.000000e+00> : vector<2x8x8xf32>
    %136 = tpu.matmul %131, %133, %cst_43 {dimension_numbers = #tpu.dot_dimension_numbers<[2], [2], [1], [1], [0, 0, 0, 1, 1, 1], [0], [0]>} : vector<2x8x32xbf16>, vector<2x8x32xbf16>, vector<2x8x8xf32> -> vector<2x8x8xf32>
    "tpu.trace_stop"() : () -> ()
    %137 = vector.broadcast %31 : vector<2x1x8xf32> to vector<2x8x8xf32>
    %138 = arith.addf %136, %137 : vector<2x8x8xf32>
    %cst_44 = arith.constant dense<0xFF800000> : vector<2x8xf32>
    %139 = vector.multi_reduction <maximumf>, %138, %cst_44 [2] : vector<2x8x8xf32> to vector<2x8xf32>
    %140 = vector.shape_cast %139 : vector<2x8xf32> to vector<2x8x1xf32>
    %141 = vector.broadcast %140 : vector<2x8x1xf32> to vector<2x8x8xf32>
    %142 = arith.subf %138, %141 : vector<2x8x8xf32>
    %143 = math.exp %142 : vector<2x8x8xf32>
    %cst_45 = arith.constant dense<0.000000e+00> : vector<2x8xf32>
    %144 = vector.multi_reduction <add>, %143, %cst_45 [2] : vector<2x8x8xf32> to vector<2x8xf32>
    %145 = vector.shape_cast %144 : vector<2x8xf32> to vector<2x8x1xf32>
    %146 = tpu.reciprocal %145 {approx = true} : vector<2x8x1xf32> -> vector<2x8x1xf32>
    %147 = vector.broadcast %146 : vector<2x8x1xf32> to vector<2x8x8xf32>
    %148 = arith.mulf %143, %147 : vector<2x8x8xf32>
    %149 = arith.truncf %148 : vector<2x8x8xf32> to vector<2x8x8xbf16>
    "tpu.trace_start"() <{level = 10 : i32, message = "bqk,bkd->bqd"}> : () -> ()
    %cst_46 = arith.constant dense<0.000000e+00> : vector<2x8x32xf32>
    %150 = tpu.matmul %149, %135, %cst_46 {dimension_numbers = #tpu.dot_dimension_numbers<[2], [1], [1], [2], [0, 0, 0, 1, 1, 2], [0], [0]>} : vector<2x8x8xbf16>, vector<2x8x32xbf16>, vector<2x8x32xf32> -> vector<2x8x32xf32>
    "tpu.trace_stop"() : () -> ()
    %151 = vector.shape_cast %150 : vector<2x8x32xf32> to vector<16x32xf32>
    %152 = arith.truncf %151 : vector<16x32xf32> to vector<16x32xbf16>
    %c0_47 = arith.constant 0 : index
    %c96 = arith.constant 96 : index
    %c0_48 = arith.constant 0 : index
    %153 = vector.load %arg7[%c0_47, %c96, %c0_48] : memref<2x128x128xbf16, #tpu.memory_space<vmem>>, vector<1x32x128xbf16>
    %154 = vector.shape_cast %153 : vector<1x32x128xbf16> to vector<32x128xbf16>
    %cst_49 = arith.constant dense<0.000000e+00> : vector<16x128xf32>
    %155 = tpu.matmul %152, %154, %cst_49 {dimension_numbers = #tpu.dot_dimension_numbers<[1], [0], [0], [1], [0, 0, 1, 1], [], []>} : vector<16x32xbf16>, vector<32x128xbf16>, vector<16x128xf32> -> vector<16x128xf32>
    %156 = arith.addf %129, %155 : vector<16x128xf32>
    %c0_50 = arith.constant 0 : index
    %c0_51 = arith.constant 0 : index
    %c0_52 = arith.constant 0 : index
    %157 = vector.load %arg8[%c0_50, %c0_51, %c0_52] : memref<2x1x128xf32, #tpu.memory_space<vmem>>, vector<1x1x128xf32>
    %158 = vector.shape_cast %157 : vector<1x1x128xf32> to vector<1x128xf32>
    %159 = vector.broadcast %158 : vector<1x128xf32> to vector<16x128xf32>
    %160 = arith.addf %156, %159 : vector<16x128xf32>
    %161 = arith.addf %160, %30 : vector<16x128xf32>
    %c0_53 = arith.constant 0 : index
    %c0_54 = arith.constant 0 : index
    %c0_55 = arith.constant 0 : index
    %162 = vector.load %arg9[%c0_53, %c0_54, %c0_55] : memref<2x1x128xf32, #tpu.memory_space<vmem>>, vector<1x1x128xf32>
    %163 = vector.shape_cast %162 : vector<1x1x128xf32> to vector<1x128xf32>
    %c0_56 = arith.constant 0 : index
    %c0_57 = arith.constant 0 : index
    %c0_58 = arith.constant 0 : index
    %164 = vector.load %arg10[%c0_56, %c0_57, %c0_58] : memref<2x1x128xf32, #tpu.memory_space<vmem>>, vector<1x1x128xf32>
    %165 = vector.shape_cast %164 : vector<1x1x128xf32> to vector<1x128xf32>
    %cst_59 = arith.constant dense<0.000000e+00> : vector<16xf32>
    %166 = vector.multi_reduction <add>, %161, %cst_59 [1] : vector<16x128xf32> to vector<16xf32>
    %167 = vector.shape_cast %166 : vector<16xf32> to vector<16x1xf32>
    %cst_60 = arith.constant 3.125000e-02 : f32
    %168 = vector.broadcast %cst_60 : f32 to vector<16x1xf32>
    %169 = arith.mulf %167, %168 : vector<16x1xf32>
    %170 = vector.broadcast %169 : vector<16x1xf32> to vector<16x128xf32>
    %171 = arith.subf %161, %170 : vector<16x128xf32>
    %172 = vector.broadcast %4 : vector<1x128xf32> to vector<16x128xf32>
    %173 = arith.mulf %171, %172 : vector<16x128xf32>
    %174 = arith.mulf %173, %173 : vector<16x128xf32>
    %cst_61 = arith.constant dense<0.000000e+00> : vector<16xf32>
    %175 = vector.multi_reduction <add>, %174, %cst_61 [1] : vector<16x128xf32> to vector<16xf32>
    %176 = vector.shape_cast %175 : vector<16xf32> to vector<16x1xf32>
    %cst_62 = arith.constant 3.125000e-02 : f32
    %177 = vector.broadcast %cst_62 : f32 to vector<16x1xf32>
    %178 = arith.mulf %176, %177 : vector<16x1xf32>
    %cst_63 = arith.constant 9.99999996E-13 : f32
    %179 = vector.broadcast %cst_63 : f32 to vector<16x1xf32>
    %180 = arith.addf %178, %179 : vector<16x1xf32>
    %181 = math.rsqrt %180 : vector<16x1xf32>
    %182 = vector.broadcast %181 : vector<16x1xf32> to vector<16x128xf32>
    %183 = arith.mulf %173, %182 : vector<16x128xf32>
    %184 = vector.broadcast %163 : vector<1x128xf32> to vector<16x128xf32>
    %185 = arith.mulf %183, %184 : vector<16x128xf32>
    %186 = vector.broadcast %165 : vector<1x128xf32> to vector<16x128xf32>
    %187 = arith.addf %185, %186 : vector<16x128xf32>
    %188 = arith.truncf %187 : vector<16x128xf32> to vector<16x128xbf16>
    %c0_64 = arith.constant 0 : index
    %c0_65 = arith.constant 0 : index
    %c0_66 = arith.constant 0 : index
    %189 = vector.load %arg11[%c0_64, %c0_65, %c0_66] : memref<2x128x128xbf16, #tpu.memory_space<vmem>>, vector<1x128x128xbf16>
    %190 = vector.shape_cast %189 : vector<1x128x128xbf16> to vector<128x128xbf16>
    %cst_67 = arith.constant dense<0.000000e+00> : vector<16x128xf32>
    %191 = tpu.matmul %188, %190, %cst_67 {dimension_numbers = #tpu.dot_dimension_numbers<[1], [0], [0], [1], [0, 0, 1, 1], [], []>} : vector<16x128xbf16>, vector<128x128xbf16>, vector<16x128xf32> -> vector<16x128xf32>
    %c0_68 = arith.constant 0 : index
    %c0_69 = arith.constant 0 : index
    %c0_70 = arith.constant 0 : index
    %192 = vector.load %arg12[%c0_68, %c0_69, %c0_70] : memref<2x1x128xf32, #tpu.memory_space<vmem>>, vector<1x1x128xf32>
    %193 = vector.shape_cast %192 : vector<1x1x128xf32> to vector<1x128xf32>
    %194 = vector.broadcast %193 : vector<1x128xf32> to vector<16x128xf32>
    %195 = arith.addf %191, %194 : vector<16x128xf32>
    %196 = arith.mulf %195, %195 : vector<16x128xf32>
    %197 = arith.mulf %195, %196 : vector<16x128xf32>
    %cst_71 = arith.constant 4.471500e-02 : f32
    %198 = vector.broadcast %cst_71 : f32 to vector<16x128xf32>
    %199 = arith.mulf %198, %197 : vector<16x128xf32>
    %200 = arith.addf %195, %199 : vector<16x128xf32>
    %cst_72 = arith.constant 0.797884583 : f32
    %201 = vector.broadcast %cst_72 : f32 to vector<16x128xf32>
    %202 = arith.mulf %201, %200 : vector<16x128xf32>
    %203 = math.tanh %202 : vector<16x128xf32>
    %cst_73 = arith.constant 1.000000e+00 : f32
    %204 = vector.broadcast %cst_73 : f32 to vector<16x128xf32>
    %205 = arith.addf %204, %203 : vector<16x128xf32>
    %cst_74 = arith.constant 5.000000e-01 : f32
    %206 = vector.broadcast %cst_74 : f32 to vector<16x128xf32>
    %207 = arith.mulf %206, %205 : vector<16x128xf32>
    %208 = arith.mulf %195, %207 : vector<16x128xf32>
    %209 = arith.truncf %208 : vector<16x128xf32> to vector<16x128xbf16>
    %c0_75 = arith.constant 0 : index
    %c0_76 = arith.constant 0 : index
    %c0_77 = arith.constant 0 : index
    %210 = vector.load %arg13[%c0_75, %c0_76, %c0_77] : memref<2x128x128xbf16, #tpu.memory_space<vmem>>, vector<1x128x128xbf16>
    %211 = vector.shape_cast %210 : vector<1x128x128xbf16> to vector<128x128xbf16>
    %cst_78 = arith.constant dense<0.000000e+00> : vector<16x128xf32>
    %212 = tpu.matmul %209, %211, %cst_78 {dimension_numbers = #tpu.dot_dimension_numbers<[1], [0], [0], [1], [0, 0, 1, 1], [], []>} : vector<16x128xbf16>, vector<128x128xbf16>, vector<16x128xf32> -> vector<16x128xf32>
    %c0_79 = arith.constant 0 : index
    %c0_80 = arith.constant 0 : index
    %c0_81 = arith.constant 0 : index
    %213 = vector.load %arg14[%c0_79, %c0_80, %c0_81] : memref<2x1x128xf32, #tpu.memory_space<vmem>>, vector<1x1x128xf32>
    %214 = vector.shape_cast %213 : vector<1x1x128xf32> to vector<1x128xf32>
    %215 = vector.broadcast %214 : vector<1x128xf32> to vector<16x128xf32>
    %216 = arith.addf %212, %215 : vector<16x128xf32>
    %217 = arith.addf %216, %187 : vector<16x128xf32>
    %c0_82 = arith.constant 0 : index
    %c0_83 = arith.constant 0 : index
    %c0_84 = arith.constant 0 : index
    %218 = vector.load %arg15[%c0_82, %c0_83, %c0_84] : memref<2x1x128xf32, #tpu.memory_space<vmem>>, vector<1x1x128xf32>
    %219 = vector.shape_cast %218 : vector<1x1x128xf32> to vector<1x128xf32>
    %c0_85 = arith.constant 0 : index
    %c0_86 = arith.constant 0 : index
    %c0_87 = arith.constant 0 : index
    %220 = vector.load %arg16[%c0_85, %c0_86, %c0_87] : memref<2x1x128xf32, #tpu.memory_space<vmem>>, vector<1x1x128xf32>
    %221 = vector.shape_cast %220 : vector<1x1x128xf32> to vector<1x128xf32>
    %cst_88 = arith.constant dense<0.000000e+00> : vector<16xf32>
    %222 = vector.multi_reduction <add>, %217, %cst_88 [1] : vector<16x128xf32> to vector<16xf32>
    %223 = vector.shape_cast %222 : vector<16xf32> to vector<16x1xf32>
    %cst_89 = arith.constant 3.125000e-02 : f32
    %224 = vector.broadcast %cst_89 : f32 to vector<16x1xf32>
    %225 = arith.mulf %223, %224 : vector<16x1xf32>
    %226 = vector.broadcast %225 : vector<16x1xf32> to vector<16x128xf32>
    %227 = arith.subf %217, %226 : vector<16x128xf32>
    %228 = vector.broadcast %4 : vector<1x128xf32> to vector<16x128xf32>
    %229 = arith.mulf %227, %228 : vector<16x128xf32>
    %230 = arith.mulf %229, %229 : vector<16x128xf32>
    %cst_90 = arith.constant dense<0.000000e+00> : vector<16xf32>
    %231 = vector.multi_reduction <add>, %230, %cst_90 [1] : vector<16x128xf32> to vector<16xf32>
    %232 = vector.shape_cast %231 : vector<16xf32> to vector<16x1xf32>
    %cst_91 = arith.constant 3.125000e-02 : f32
    %233 = vector.broadcast %cst_91 : f32 to vector<16x1xf32>
    %234 = arith.mulf %232, %233 : vector<16x1xf32>
    %cst_92 = arith.constant 9.99999996E-13 : f32
    %235 = vector.broadcast %cst_92 : f32 to vector<16x1xf32>
    %236 = arith.addf %234, %235 : vector<16x1xf32>
    %237 = math.rsqrt %236 : vector<16x1xf32>
    %238 = vector.broadcast %237 : vector<16x1xf32> to vector<16x128xf32>
    %239 = arith.mulf %229, %238 : vector<16x128xf32>
    %240 = vector.broadcast %219 : vector<1x128xf32> to vector<16x128xf32>
    %241 = arith.mulf %239, %240 : vector<16x128xf32>
    %242 = vector.broadcast %221 : vector<1x128xf32> to vector<16x128xf32>
    %243 = arith.addf %241, %242 : vector<16x128xf32>
    %244 = arith.truncf %243 : vector<16x128xf32> to vector<16x128xbf16>
    %c1 = arith.constant 1 : index
    %c0_93 = arith.constant 0 : index
    %c0_94 = arith.constant 0 : index
    %245 = vector.load %arg5[%c1, %c0_93, %c0_94] : memref<2x128x384xbf16, #tpu.memory_space<vmem>>, vector<1x128x384xbf16>
    %246 = vector.shape_cast %245 : vector<1x128x384xbf16> to vector<128x384xbf16>
    %cst_95 = arith.constant dense<0.000000e+00> : vector<16x384xf32>
    %247 = tpu.matmul %244, %246, %cst_95 {dimension_numbers = #tpu.dot_dimension_numbers<[1], [0], [0], [1], [0, 0, 1, 1], [], []>} : vector<16x128xbf16>, vector<128x384xbf16>, vector<16x384xf32> -> vector<16x384xf32>
    %c1_96 = arith.constant 1 : index
    %c0_97 = arith.constant 0 : index
    %c0_98 = arith.constant 0 : index
    %248 = vector.load %arg6[%c1_96, %c0_97, %c0_98] : memref<2x1x384xf32, #tpu.memory_space<vmem>>, vector<1x1x384xf32>
    %249 = vector.shape_cast %248 : vector<1x1x384xf32> to vector<1x384xf32>
    %250 = vector.broadcast %249 : vector<1x384xf32> to vector<16x384xf32>
    %251 = arith.addf %247, %250 : vector<16x384xf32>
    %252 = vector.extract_strided_slice %251 {offsets = [0, 0], sizes = [16, 128], strides = [1, 1]} : vector<16x384xf32> to vector<16x128xf32>
    %cst_99 = arith.constant 0.353553385 : f32
    %253 = vector.broadcast %cst_99 : f32 to vector<16x128xf32>
    %254 = arith.mulf %252, %253 : vector<16x128xf32>
    %255 = arith.truncf %254 : vector<16x128xf32> to vector<16x128xbf16>
    %256 = vector.extract_strided_slice %251 {offsets = [0, 128], sizes = [16, 128], strides = [1, 1]} : vector<16x384xf32> to vector<16x128xf32>
    %257 = arith.truncf %256 : vector<16x128xf32> to vector<16x128xbf16>
    %258 = vector.extract_strided_slice %251 {offsets = [0, 256], sizes = [16, 128], strides = [1, 1]} : vector<16x384xf32> to vector<16x128xf32>
    %259 = arith.truncf %258 : vector<16x128xf32> to vector<16x128xbf16>
    %cst_100 = arith.constant 0.000000e+00 : f32
    %260 = vector.broadcast %cst_100 : f32 to vector<16x128xf32>
    %261 = vector.extract_strided_slice %255 {offsets = [0, 0], sizes = [16, 32], strides = [1, 1]} : vector<16x128xbf16> to vector<16x32xbf16>
    %262 = vector.shape_cast %261 : vector<16x32xbf16> to vector<2x8x32xbf16>
    %263 = vector.extract_strided_slice %257 {offsets = [0, 0], sizes = [16, 32], strides = [1, 1]} : vector<16x128xbf16> to vector<16x32xbf16>
    %264 = vector.shape_cast %263 : vector<16x32xbf16> to vector<2x8x32xbf16>
    %265 = vector.extract_strided_slice %259 {offsets = [0, 0], sizes = [16, 32], strides = [1, 1]} : vector<16x128xbf16> to vector<16x32xbf16>
    %266 = vector.shape_cast %265 : vector<16x32xbf16> to vector<2x8x32xbf16>
    "tpu.trace_start"() <{level = 10 : i32, message = "bqd,bkd->bqk"}> : () -> ()
    %cst_101 = arith.constant dense<0.000000e+00> : vector<2x8x8xf32>
    %267 = tpu.matmul %262, %264, %cst_101 {dimension_numbers = #tpu.dot_dimension_numbers<[2], [2], [1], [1], [0, 0, 0, 1, 1, 1], [0], [0]>} : vector<2x8x32xbf16>, vector<2x8x32xbf16>, vector<2x8x8xf32> -> vector<2x8x8xf32>
    "tpu.trace_stop"() : () -> ()
    %268 = vector.broadcast %31 : vector<2x1x8xf32> to vector<2x8x8xf32>
    %269 = arith.addf %267, %268 : vector<2x8x8xf32>
    %cst_102 = arith.constant dense<0xFF800000> : vector<2x8xf32>
    %270 = vector.multi_reduction <maximumf>, %269, %cst_102 [2] : vector<2x8x8xf32> to vector<2x8xf32>
    %271 = vector.shape_cast %270 : vector<2x8xf32> to vector<2x8x1xf32>
    %272 = vector.broadcast %271 : vector<2x8x1xf32> to vector<2x8x8xf32>
    %273 = arith.subf %269, %272 : vector<2x8x8xf32>
    %274 = math.exp %273 : vector<2x8x8xf32>
    %cst_103 = arith.constant dense<0.000000e+00> : vector<2x8xf32>
    %275 = vector.multi_reduction <add>, %274, %cst_103 [2] : vector<2x8x8xf32> to vector<2x8xf32>
    %276 = vector.shape_cast %275 : vector<2x8xf32> to vector<2x8x1xf32>
    %277 = tpu.reciprocal %276 {approx = true} : vector<2x8x1xf32> -> vector<2x8x1xf32>
    %278 = vector.broadcast %277 : vector<2x8x1xf32> to vector<2x8x8xf32>
    %279 = arith.mulf %274, %278 : vector<2x8x8xf32>
    %280 = arith.truncf %279 : vector<2x8x8xf32> to vector<2x8x8xbf16>
    "tpu.trace_start"() <{level = 10 : i32, message = "bqk,bkd->bqd"}> : () -> ()
    %cst_104 = arith.constant dense<0.000000e+00> : vector<2x8x32xf32>
    %281 = tpu.matmul %280, %266, %cst_104 {dimension_numbers = #tpu.dot_dimension_numbers<[2], [1], [1], [2], [0, 0, 0, 1, 1, 2], [0], [0]>} : vector<2x8x8xbf16>, vector<2x8x32xbf16>, vector<2x8x32xf32> -> vector<2x8x32xf32>
    "tpu.trace_stop"() : () -> ()
    %282 = vector.shape_cast %281 : vector<2x8x32xf32> to vector<16x32xf32>
    %283 = arith.truncf %282 : vector<16x32xf32> to vector<16x32xbf16>
    %c1_105 = arith.constant 1 : index
    %c0_106 = arith.constant 0 : index
    %c0_107 = arith.constant 0 : index
    %284 = vector.load %arg7[%c1_105, %c0_106, %c0_107] : memref<2x128x128xbf16, #tpu.memory_space<vmem>>, vector<1x32x128xbf16>
    %285 = vector.shape_cast %284 : vector<1x32x128xbf16> to vector<32x128xbf16>
    %cst_108 = arith.constant dense<0.000000e+00> : vector<16x128xf32>
    %286 = tpu.matmul %283, %285, %cst_108 {dimension_numbers = #tpu.dot_dimension_numbers<[1], [0], [0], [1], [0, 0, 1, 1], [], []>} : vector<16x32xbf16>, vector<32x128xbf16>, vector<16x128xf32> -> vector<16x128xf32>
    %287 = arith.addf %260, %286 : vector<16x128xf32>
    %288 = vector.extract_strided_slice %255 {offsets = [0, 32], sizes = [16, 32], strides = [1, 1]} : vector<16x128xbf16> to vector<16x32xbf16>
    %289 = vector.shape_cast %288 : vector<16x32xbf16> to vector<2x8x32xbf16>
    %290 = vector.extract_strided_slice %257 {offsets = [0, 32], sizes = [16, 32], strides = [1, 1]} : vector<16x128xbf16> to vector<16x32xbf16>
    %291 = vector.shape_cast %290 : vector<16x32xbf16> to vector<2x8x32xbf16>
    %292 = vector.extract_strided_slice %259 {offsets = [0, 32], sizes = [16, 32], strides = [1, 1]} : vector<16x128xbf16> to vector<16x32xbf16>
    %293 = vector.shape_cast %292 : vector<16x32xbf16> to vector<2x8x32xbf16>
    "tpu.trace_start"() <{level = 10 : i32, message = "bqd,bkd->bqk"}> : () -> ()
    %cst_109 = arith.constant dense<0.000000e+00> : vector<2x8x8xf32>
    %294 = tpu.matmul %289, %291, %cst_109 {dimension_numbers = #tpu.dot_dimension_numbers<[2], [2], [1], [1], [0, 0, 0, 1, 1, 1], [0], [0]>} : vector<2x8x32xbf16>, vector<2x8x32xbf16>, vector<2x8x8xf32> -> vector<2x8x8xf32>
    "tpu.trace_stop"() : () -> ()
    %295 = vector.broadcast %31 : vector<2x1x8xf32> to vector<2x8x8xf32>
    %296 = arith.addf %294, %295 : vector<2x8x8xf32>
    %cst_110 = arith.constant dense<0xFF800000> : vector<2x8xf32>
    %297 = vector.multi_reduction <maximumf>, %296, %cst_110 [2] : vector<2x8x8xf32> to vector<2x8xf32>
    %298 = vector.shape_cast %297 : vector<2x8xf32> to vector<2x8x1xf32>
    %299 = vector.broadcast %298 : vector<2x8x1xf32> to vector<2x8x8xf32>
    %300 = arith.subf %296, %299 : vector<2x8x8xf32>
    %301 = math.exp %300 : vector<2x8x8xf32>
    %cst_111 = arith.constant dense<0.000000e+00> : vector<2x8xf32>
    %302 = vector.multi_reduction <add>, %301, %cst_111 [2] : vector<2x8x8xf32> to vector<2x8xf32>
    %303 = vector.shape_cast %302 : vector<2x8xf32> to vector<2x8x1xf32>
    %304 = tpu.reciprocal %303 {approx = true} : vector<2x8x1xf32> -> vector<2x8x1xf32>
    %305 = vector.broadcast %304 : vector<2x8x1xf32> to vector<2x8x8xf32>
    %306 = arith.mulf %301, %305 : vector<2x8x8xf32>
    %307 = arith.truncf %306 : vector<2x8x8xf32> to vector<2x8x8xbf16>
    "tpu.trace_start"() <{level = 10 : i32, message = "bqk,bkd->bqd"}> : () -> ()
    %cst_112 = arith.constant dense<0.000000e+00> : vector<2x8x32xf32>
    %308 = tpu.matmul %307, %293, %cst_112 {dimension_numbers = #tpu.dot_dimension_numbers<[2], [1], [1], [2], [0, 0, 0, 1, 1, 2], [0], [0]>} : vector<2x8x8xbf16>, vector<2x8x32xbf16>, vector<2x8x32xf32> -> vector<2x8x32xf32>
    "tpu.trace_stop"() : () -> ()
    %309 = vector.shape_cast %308 : vector<2x8x32xf32> to vector<16x32xf32>
    %310 = arith.truncf %309 : vector<16x32xf32> to vector<16x32xbf16>
    %c1_113 = arith.constant 1 : index
    %c32_114 = arith.constant 32 : index
    %c0_115 = arith.constant 0 : index
    %311 = vector.load %arg7[%c1_113, %c32_114, %c0_115] : memref<2x128x128xbf16, #tpu.memory_space<vmem>>, vector<1x32x128xbf16>
    %312 = vector.shape_cast %311 : vector<1x32x128xbf16> to vector<32x128xbf16>
    %cst_116 = arith.constant dense<0.000000e+00> : vector<16x128xf32>
    %313 = tpu.matmul %310, %312, %cst_116 {dimension_numbers = #tpu.dot_dimension_numbers<[1], [0], [0], [1], [0, 0, 1, 1], [], []>} : vector<16x32xbf16>, vector<32x128xbf16>, vector<16x128xf32> -> vector<16x128xf32>
    %314 = arith.addf %287, %313 : vector<16x128xf32>
    %315 = vector.extract_strided_slice %255 {offsets = [0, 64], sizes = [16, 32], strides = [1, 1]} : vector<16x128xbf16> to vector<16x32xbf16>
    %316 = vector.shape_cast %315 : vector<16x32xbf16> to vector<2x8x32xbf16>
    %317 = vector.extract_strided_slice %257 {offsets = [0, 64], sizes = [16, 32], strides = [1, 1]} : vector<16x128xbf16> to vector<16x32xbf16>
    %318 = vector.shape_cast %317 : vector<16x32xbf16> to vector<2x8x32xbf16>
    %319 = vector.extract_strided_slice %259 {offsets = [0, 64], sizes = [16, 32], strides = [1, 1]} : vector<16x128xbf16> to vector<16x32xbf16>
    %320 = vector.shape_cast %319 : vector<16x32xbf16> to vector<2x8x32xbf16>
    "tpu.trace_start"() <{level = 10 : i32, message = "bqd,bkd->bqk"}> : () -> ()
    %cst_117 = arith.constant dense<0.000000e+00> : vector<2x8x8xf32>
    %321 = tpu.matmul %316, %318, %cst_117 {dimension_numbers = #tpu.dot_dimension_numbers<[2], [2], [1], [1], [0, 0, 0, 1, 1, 1], [0], [0]>} : vector<2x8x32xbf16>, vector<2x8x32xbf16>, vector<2x8x8xf32> -> vector<2x8x8xf32>
    "tpu.trace_stop"() : () -> ()
    %322 = vector.broadcast %31 : vector<2x1x8xf32> to vector<2x8x8xf32>
    %323 = arith.addf %321, %322 : vector<2x8x8xf32>
    %cst_118 = arith.constant dense<0xFF800000> : vector<2x8xf32>
    %324 = vector.multi_reduction <maximumf>, %323, %cst_118 [2] : vector<2x8x8xf32> to vector<2x8xf32>
    %325 = vector.shape_cast %324 : vector<2x8xf32> to vector<2x8x1xf32>
    %326 = vector.broadcast %325 : vector<2x8x1xf32> to vector<2x8x8xf32>
    %327 = arith.subf %323, %326 : vector<2x8x8xf32>
    %328 = math.exp %327 : vector<2x8x8xf32>
    %cst_119 = arith.constant dense<0.000000e+00> : vector<2x8xf32>
    %329 = vector.multi_reduction <add>, %328, %cst_119 [2] : vector<2x8x8xf32> to vector<2x8xf32>
    %330 = vector.shape_cast %329 : vector<2x8xf32> to vector<2x8x1xf32>
    %331 = tpu.reciprocal %330 {approx = true} : vector<2x8x1xf32> -> vector<2x8x1xf32>
    %332 = vector.broadcast %331 : vector<2x8x1xf32> to vector<2x8x8xf32>
    %333 = arith.mulf %328, %332 : vector<2x8x8xf32>
    %334 = arith.truncf %333 : vector<2x8x8xf32> to vector<2x8x8xbf16>
    "tpu.trace_start"() <{level = 10 : i32, message = "bqk,bkd->bqd"}> : () -> ()
    %cst_120 = arith.constant dense<0.000000e+00> : vector<2x8x32xf32>
    %335 = tpu.matmul %334, %320, %cst_120 {dimension_numbers = #tpu.dot_dimension_numbers<[2], [1], [1], [2], [0, 0, 0, 1, 1, 2], [0], [0]>} : vector<2x8x8xbf16>, vector<2x8x32xbf16>, vector<2x8x32xf32> -> vector<2x8x32xf32>
    "tpu.trace_stop"() : () -> ()
    %336 = vector.shape_cast %335 : vector<2x8x32xf32> to vector<16x32xf32>
    %337 = arith.truncf %336 : vector<16x32xf32> to vector<16x32xbf16>
    %c1_121 = arith.constant 1 : index
    %c64_122 = arith.constant 64 : index
    %c0_123 = arith.constant 0 : index
    %338 = vector.load %arg7[%c1_121, %c64_122, %c0_123] : memref<2x128x128xbf16, #tpu.memory_space<vmem>>, vector<1x32x128xbf16>
    %339 = vector.shape_cast %338 : vector<1x32x128xbf16> to vector<32x128xbf16>
    %cst_124 = arith.constant dense<0.000000e+00> : vector<16x128xf32>
    %340 = tpu.matmul %337, %339, %cst_124 {dimension_numbers = #tpu.dot_dimension_numbers<[1], [0], [0], [1], [0, 0, 1, 1], [], []>} : vector<16x32xbf16>, vector<32x128xbf16>, vector<16x128xf32> -> vector<16x128xf32>
    %341 = arith.addf %314, %340 : vector<16x128xf32>
    %342 = vector.extract_strided_slice %255 {offsets = [0, 96], sizes = [16, 32], strides = [1, 1]} : vector<16x128xbf16> to vector<16x32xbf16>
    %343 = vector.shape_cast %342 : vector<16x32xbf16> to vector<2x8x32xbf16>
    %344 = vector.extract_strided_slice %257 {offsets = [0, 96], sizes = [16, 32], strides = [1, 1]} : vector<16x128xbf16> to vector<16x32xbf16>
    %345 = vector.shape_cast %344 : vector<16x32xbf16> to vector<2x8x32xbf16>
    %346 = vector.extract_strided_slice %259 {offsets = [0, 96], sizes = [16, 32], strides = [1, 1]} : vector<16x128xbf16> to vector<16x32xbf16>
    %347 = vector.shape_cast %346 : vector<16x32xbf16> to vector<2x8x32xbf16>
    "tpu.trace_start"() <{level = 10 : i32, message = "bqd,bkd->bqk"}> : () -> ()
    %cst_125 = arith.constant dense<0.000000e+00> : vector<2x8x8xf32>
    %348 = tpu.matmul %343, %345, %cst_125 {dimension_numbers = #tpu.dot_dimension_numbers<[2], [2], [1], [1], [0, 0, 0, 1, 1, 1], [0], [0]>} : vector<2x8x32xbf16>, vector<2x8x32xbf16>, vector<2x8x8xf32> -> vector<2x8x8xf32>
    "tpu.trace_stop"() : () -> ()
    %349 = vector.broadcast %31 : vector<2x1x8xf32> to vector<2x8x8xf32>
    %350 = arith.addf %348, %349 : vector<2x8x8xf32>
    %cst_126 = arith.constant dense<0xFF800000> : vector<2x8xf32>
    %351 = vector.multi_reduction <maximumf>, %350, %cst_126 [2] : vector<2x8x8xf32> to vector<2x8xf32>
    %352 = vector.shape_cast %351 : vector<2x8xf32> to vector<2x8x1xf32>
    %353 = vector.broadcast %352 : vector<2x8x1xf32> to vector<2x8x8xf32>
    %354 = arith.subf %350, %353 : vector<2x8x8xf32>
    %355 = math.exp %354 : vector<2x8x8xf32>
    %cst_127 = arith.constant dense<0.000000e+00> : vector<2x8xf32>
    %356 = vector.multi_reduction <add>, %355, %cst_127 [2] : vector<2x8x8xf32> to vector<2x8xf32>
    %357 = vector.shape_cast %356 : vector<2x8xf32> to vector<2x8x1xf32>
    %358 = tpu.reciprocal %357 {approx = true} : vector<2x8x1xf32> -> vector<2x8x1xf32>
    %359 = vector.broadcast %358 : vector<2x8x1xf32> to vector<2x8x8xf32>
    %360 = arith.mulf %355, %359 : vector<2x8x8xf32>
    %361 = arith.truncf %360 : vector<2x8x8xf32> to vector<2x8x8xbf16>
    "tpu.trace_start"() <{level = 10 : i32, message = "bqk,bkd->bqd"}> : () -> ()
    %cst_128 = arith.constant dense<0.000000e+00> : vector<2x8x32xf32>
    %362 = tpu.matmul %361, %347, %cst_128 {dimension_numbers = #tpu.dot_dimension_numbers<[2], [1], [1], [2], [0, 0, 0, 1, 1, 2], [0], [0]>} : vector<2x8x8xbf16>, vector<2x8x32xbf16>, vector<2x8x32xf32> -> vector<2x8x32xf32>
    "tpu.trace_stop"() : () -> ()
    %363 = vector.shape_cast %362 : vector<2x8x32xf32> to vector<16x32xf32>
    %364 = arith.truncf %363 : vector<16x32xf32> to vector<16x32xbf16>
    %c1_129 = arith.constant 1 : index
    %c96_130 = arith.constant 96 : index
    %c0_131 = arith.constant 0 : index
    %365 = vector.load %arg7[%c1_129, %c96_130, %c0_131] : memref<2x128x128xbf16, #tpu.memory_space<vmem>>, vector<1x32x128xbf16>
    %366 = vector.shape_cast %365 : vector<1x32x128xbf16> to vector<32x128xbf16>
    %cst_132 = arith.constant dense<0.000000e+00> : vector<16x128xf32>
    %367 = tpu.matmul %364, %366, %cst_132 {dimension_numbers = #tpu.dot_dimension_numbers<[1], [0], [0], [1], [0, 0, 1, 1], [], []>} : vector<16x32xbf16>, vector<32x128xbf16>, vector<16x128xf32> -> vector<16x128xf32>
    %368 = arith.addf %341, %367 : vector<16x128xf32>
    %c1_133 = arith.constant 1 : index
    %c0_134 = arith.constant 0 : index
    %c0_135 = arith.constant 0 : index
    %369 = vector.load %arg8[%c1_133, %c0_134, %c0_135] : memref<2x1x128xf32, #tpu.memory_space<vmem>>, vector<1x1x128xf32>
    %370 = vector.shape_cast %369 : vector<1x1x128xf32> to vector<1x128xf32>
    %371 = vector.broadcast %370 : vector<1x128xf32> to vector<16x128xf32>
    %372 = arith.addf %368, %371 : vector<16x128xf32>
    %373 = arith.addf %372, %243 : vector<16x128xf32>
    %c1_136 = arith.constant 1 : index
    %c0_137 = arith.constant 0 : index
    %c0_138 = arith.constant 0 : index
    %374 = vector.load %arg9[%c1_136, %c0_137, %c0_138] : memref<2x1x128xf32, #tpu.memory_space<vmem>>, vector<1x1x128xf32>
    %375 = vector.shape_cast %374 : vector<1x1x128xf32> to vector<1x128xf32>
    %c1_139 = arith.constant 1 : index
    %c0_140 = arith.constant 0 : index
    %c0_141 = arith.constant 0 : index
    %376 = vector.load %arg10[%c1_139, %c0_140, %c0_141] : memref<2x1x128xf32, #tpu.memory_space<vmem>>, vector<1x1x128xf32>
    %377 = vector.shape_cast %376 : vector<1x1x128xf32> to vector<1x128xf32>
    %cst_142 = arith.constant dense<0.000000e+00> : vector<16xf32>
    %378 = vector.multi_reduction <add>, %373, %cst_142 [1] : vector<16x128xf32> to vector<16xf32>
    %379 = vector.shape_cast %378 : vector<16xf32> to vector<16x1xf32>
    %cst_143 = arith.constant 3.125000e-02 : f32
    %380 = vector.broadcast %cst_143 : f32 to vector<16x1xf32>
    %381 = arith.mulf %379, %380 : vector<16x1xf32>
    %382 = vector.broadcast %381 : vector<16x1xf32> to vector<16x128xf32>
    %383 = arith.subf %373, %382 : vector<16x128xf32>
    %384 = vector.broadcast %4 : vector<1x128xf32> to vector<16x128xf32>
    %385 = arith.mulf %383, %384 : vector<16x128xf32>
    %386 = arith.mulf %385, %385 : vector<16x128xf32>
    %cst_144 = arith.constant dense<0.000000e+00> : vector<16xf32>
    %387 = vector.multi_reduction <add>, %386, %cst_144 [1] : vector<16x128xf32> to vector<16xf32>
    %388 = vector.shape_cast %387 : vector<16xf32> to vector<16x1xf32>
    %cst_145 = arith.constant 3.125000e-02 : f32
    %389 = vector.broadcast %cst_145 : f32 to vector<16x1xf32>
    %390 = arith.mulf %388, %389 : vector<16x1xf32>
    %cst_146 = arith.constant 9.99999996E-13 : f32
    %391 = vector.broadcast %cst_146 : f32 to vector<16x1xf32>
    %392 = arith.addf %390, %391 : vector<16x1xf32>
    %393 = math.rsqrt %392 : vector<16x1xf32>
    %394 = vector.broadcast %393 : vector<16x1xf32> to vector<16x128xf32>
    %395 = arith.mulf %385, %394 : vector<16x128xf32>
    %396 = vector.broadcast %375 : vector<1x128xf32> to vector<16x128xf32>
    %397 = arith.mulf %395, %396 : vector<16x128xf32>
    %398 = vector.broadcast %377 : vector<1x128xf32> to vector<16x128xf32>
    %399 = arith.addf %397, %398 : vector<16x128xf32>
    %400 = arith.truncf %399 : vector<16x128xf32> to vector<16x128xbf16>
    %c1_147 = arith.constant 1 : index
    %c0_148 = arith.constant 0 : index
    %c0_149 = arith.constant 0 : index
    %401 = vector.load %arg11[%c1_147, %c0_148, %c0_149] : memref<2x128x128xbf16, #tpu.memory_space<vmem>>, vector<1x128x128xbf16>
    %402 = vector.shape_cast %401 : vector<1x128x128xbf16> to vector<128x128xbf16>
    %cst_150 = arith.constant dense<0.000000e+00> : vector<16x128xf32>
    %403 = tpu.matmul %400, %402, %cst_150 {dimension_numbers = #tpu.dot_dimension_numbers<[1], [0], [0], [1], [0, 0, 1, 1], [], []>} : vector<16x128xbf16>, vector<128x128xbf16>, vector<16x128xf32> -> vector<16x128xf32>
    %c1_151 = arith.constant 1 : index
    %c0_152 = arith.constant 0 : index
    %c0_153 = arith.constant 0 : index
    %404 = vector.load %arg12[%c1_151, %c0_152, %c0_153] : memref<2x1x128xf32, #tpu.memory_space<vmem>>, vector<1x1x128xf32>
    %405 = vector.shape_cast %404 : vector<1x1x128xf32> to vector<1x128xf32>
    %406 = vector.broadcast %405 : vector<1x128xf32> to vector<16x128xf32>
    %407 = arith.addf %403, %406 : vector<16x128xf32>
    %408 = arith.mulf %407, %407 : vector<16x128xf32>
    %409 = arith.mulf %407, %408 : vector<16x128xf32>
    %cst_154 = arith.constant 4.471500e-02 : f32
    %410 = vector.broadcast %cst_154 : f32 to vector<16x128xf32>
    %411 = arith.mulf %410, %409 : vector<16x128xf32>
    %412 = arith.addf %407, %411 : vector<16x128xf32>
    %cst_155 = arith.constant 0.797884583 : f32
    %413 = vector.broadcast %cst_155 : f32 to vector<16x128xf32>
    %414 = arith.mulf %413, %412 : vector<16x128xf32>
    %415 = math.tanh %414 : vector<16x128xf32>
    %cst_156 = arith.constant 1.000000e+00 : f32
    %416 = vector.broadcast %cst_156 : f32 to vector<16x128xf32>
    %417 = arith.addf %416, %415 : vector<16x128xf32>
    %cst_157 = arith.constant 5.000000e-01 : f32
    %418 = vector.broadcast %cst_157 : f32 to vector<16x128xf32>
    %419 = arith.mulf %418, %417 : vector<16x128xf32>
    %420 = arith.mulf %407, %419 : vector<16x128xf32>
    %421 = arith.truncf %420 : vector<16x128xf32> to vector<16x128xbf16>
    %c1_158 = arith.constant 1 : index
    %c0_159 = arith.constant 0 : index
    %c0_160 = arith.constant 0 : index
    %422 = vector.load %arg13[%c1_158, %c0_159, %c0_160] : memref<2x128x128xbf16, #tpu.memory_space<vmem>>, vector<1x128x128xbf16>
    %423 = vector.shape_cast %422 : vector<1x128x128xbf16> to vector<128x128xbf16>
    %cst_161 = arith.constant dense<0.000000e+00> : vector<16x128xf32>
    %424 = tpu.matmul %421, %423, %cst_161 {dimension_numbers = #tpu.dot_dimension_numbers<[1], [0], [0], [1], [0, 0, 1, 1], [], []>} : vector<16x128xbf16>, vector<128x128xbf16>, vector<16x128xf32> -> vector<16x128xf32>
    %c1_162 = arith.constant 1 : index
    %c0_163 = arith.constant 0 : index
    %c0_164 = arith.constant 0 : index
    %425 = vector.load %arg14[%c1_162, %c0_163, %c0_164] : memref<2x1x128xf32, #tpu.memory_space<vmem>>, vector<1x1x128xf32>
    %426 = vector.shape_cast %425 : vector<1x1x128xf32> to vector<1x128xf32>
    %427 = vector.broadcast %426 : vector<1x128xf32> to vector<16x128xf32>
    %428 = arith.addf %424, %427 : vector<16x128xf32>
    %429 = arith.addf %428, %399 : vector<16x128xf32>
    %c1_165 = arith.constant 1 : index
    %c0_166 = arith.constant 0 : index
    %c0_167 = arith.constant 0 : index
    %430 = vector.load %arg15[%c1_165, %c0_166, %c0_167] : memref<2x1x128xf32, #tpu.memory_space<vmem>>, vector<1x1x128xf32>
    %431 = vector.shape_cast %430 : vector<1x1x128xf32> to vector<1x128xf32>
    %c1_168 = arith.constant 1 : index
    %c0_169 = arith.constant 0 : index
    %c0_170 = arith.constant 0 : index
    %432 = vector.load %arg16[%c1_168, %c0_169, %c0_170] : memref<2x1x128xf32, #tpu.memory_space<vmem>>, vector<1x1x128xf32>
    %433 = vector.shape_cast %432 : vector<1x1x128xf32> to vector<1x128xf32>
    %cst_171 = arith.constant dense<0.000000e+00> : vector<16xf32>
    %434 = vector.multi_reduction <add>, %429, %cst_171 [1] : vector<16x128xf32> to vector<16xf32>
    %435 = vector.shape_cast %434 : vector<16xf32> to vector<16x1xf32>
    %cst_172 = arith.constant 3.125000e-02 : f32
    %436 = vector.broadcast %cst_172 : f32 to vector<16x1xf32>
    %437 = arith.mulf %435, %436 : vector<16x1xf32>
    %438 = vector.broadcast %437 : vector<16x1xf32> to vector<16x128xf32>
    %439 = arith.subf %429, %438 : vector<16x128xf32>
    %440 = vector.broadcast %4 : vector<1x128xf32> to vector<16x128xf32>
    %441 = arith.mulf %439, %440 : vector<16x128xf32>
    %442 = arith.mulf %441, %441 : vector<16x128xf32>
    %cst_173 = arith.constant dense<0.000000e+00> : vector<16xf32>
    %443 = vector.multi_reduction <add>, %442, %cst_173 [1] : vector<16x128xf32> to vector<16xf32>
    %444 = vector.shape_cast %443 : vector<16xf32> to vector<16x1xf32>
    %cst_174 = arith.constant 3.125000e-02 : f32
    %445 = vector.broadcast %cst_174 : f32 to vector<16x1xf32>
    %446 = arith.mulf %444, %445 : vector<16x1xf32>
    %cst_175 = arith.constant 9.99999996E-13 : f32
    %447 = vector.broadcast %cst_175 : f32 to vector<16x1xf32>
    %448 = arith.addf %446, %447 : vector<16x1xf32>
    %449 = math.rsqrt %448 : vector<16x1xf32>
    %450 = vector.broadcast %449 : vector<16x1xf32> to vector<16x128xf32>
    %451 = arith.mulf %441, %450 : vector<16x128xf32>
    %452 = vector.broadcast %431 : vector<1x128xf32> to vector<16x128xf32>
    %453 = arith.mulf %451, %452 : vector<16x128xf32>
    %454 = vector.broadcast %433 : vector<1x128xf32> to vector<16x128xf32>
    %455 = arith.addf %453, %454 : vector<16x128xf32>
    %c0_176 = arith.constant 0 : index
    %c0_177 = arith.constant 0 : index
    %456 = vector.load %arg19[%c0_176, %c0_177] : memref<16x128xf32, #tpu.memory_space<vmem>>, vector<16x128xf32>
    tpu.vector_store %arg19[%c0_176, %c0_177], %455 {strides = array<i32>} : memref<16x128xf32, #tpu.memory_space<vmem>>, vector<16x128xf32>,
    %457 = vector.shape_cast %455 : vector<16x128xf32> to vector<2x8x128xf32>
    %458 = vector.extract_strided_slice %457 {offsets = [0, 0, 0], sizes = [2, 1, 128], strides = [1, 1, 1]} : vector<2x8x128xf32> to vector<2x1x128xf32>
    %459 = vector.shape_cast %458 : vector<2x1x128xf32> to vector<2x128xf32>
    %460 = arith.truncf %459 : vector<2x128xf32> to vector<2x128xbf16>
    %c0_178 = arith.constant 0 : index
    %c0_179 = arith.constant 0 : index
    %461 = vector.load %arg17[%c0_178, %c0_179] : memref<128x128xbf16, #tpu.memory_space<vmem>>, vector<128x128xbf16>
    %cst_180 = arith.constant dense<0.000000e+00> : vector<2x128xf32>
    %462 = tpu.matmul %460, %461, %cst_180 {dimension_numbers = #tpu.dot_dimension_numbers<[1], [0], [0], [1], [0, 0, 1, 1], [], []>} : vector<2x128xbf16>, vector<128x128xbf16>, vector<2x128xf32> -> vector<2x128xf32>
    %c0_181 = arith.constant 0 : index
    %c0_182 = arith.constant 0 : index
    %463 = vector.load %arg18[%c0_181, %c0_182] : memref<1x128xf32, #tpu.memory_space<vmem>>, vector<1x128xf32>
    %464 = vector.broadcast %463 : vector<1x128xf32> to vector<2x128xf32>
    %465 = arith.addf %462, %464 : vector<2x128xf32>
    %c0_183 = arith.constant 0 : index
    %c0_184 = arith.constant 0 : index
    %466 = vector.load %arg20[%c0_183, %c0_184] : memref<2x128xf32, #tpu.memory_space<vmem>>, vector<2x128xf32>
    tpu.vector_store %arg20[%c0_183, %c0_184], %465 {strides = array<i32>} : memref<2x128xf32, #tpu.memory_space<vmem>>, vector<2x128xf32>,
    return
  }
  func.func @transform_0(%arg0: i32) -> (i32, i32) {
    %c0_i32 = arith.constant 0 : i32
    %c0_i32_0 = arith.constant 0 : i32
    %c0_i32_1 = arith.constant 0 : i32
    return %c0_i32, %c0_i32_0 : i32, i32
  }
  func.func @transform_1(%arg0: i32) -> (i32, i32, i32) {
    %c0_i32 = arith.constant 0 : i32
    %c0_i32_0 = arith.constant 0 : i32
    %c0_i32_1 = arith.constant 0 : i32
    %c0_i32_2 = arith.constant 0 : i32
    return %c0_i32, %c0_i32_0, %c0_i32_1 : i32, i32, i32
  }
  func.func @transform_2(%arg0: i32) -> (i32, i32) {
    %c0_i32 = arith.constant 0 : i32
    %c0_i32_0 = arith.constant 0 : i32
    %c0_i32_1 = arith.constant 0 : i32
    return %c0_i32, %c0_i32_0 : i32, i32
  }
  func.func @transform_3(%arg0: i32) -> (i32, i32) {
    %c0_i32 = arith.constant 0 : i32
    %c0_i32_0 = arith.constant 0 : i32
    %c0_i32_1 = arith.constant 0 : i32
    return %c0_i32, %c0_i32_0 : i32, i32
  }
  func.func @transform_4(%arg0: i32) -> (i32, i32, i32) {
    %c0_i32 = arith.constant 0 : i32
    %c0_i32_0 = arith.constant 0 : i32
    %c0_i32_1 = arith.constant 0 : i32
    %c0_i32_2 = arith.constant 0 : i32
    return %c0_i32, %c0_i32_0, %c0_i32_1 : i32, i32, i32
  }
  func.func @transform_5(%arg0: i32) -> (i32, i32, i32) {
    %c0_i32 = arith.constant 0 : i32
    %c0_i32_0 = arith.constant 0 : i32
    %c0_i32_1 = arith.constant 0 : i32
    %c0_i32_2 = arith.constant 0 : i32
    return %c0_i32, %c0_i32_0, %c0_i32_1 : i32, i32, i32
  }
  func.func @transform_6(%arg0: i32) -> (i32, i32, i32) {
    %c0_i32 = arith.constant 0 : i32
    %c0_i32_0 = arith.constant 0 : i32
    %c0_i32_1 = arith.constant 0 : i32
    %c0_i32_2 = arith.constant 0 : i32
    return %c0_i32, %c0_i32_0, %c0_i32_1 : i32, i32, i32
  }
  func.func @transform_7(%arg0: i32) -> (i32, i32, i32) {
    %c0_i32 = arith.constant 0 : i32
    %c0_i32_0 = arith.constant 0 : i32
    %c0_i32_1 = arith.constant 0 : i32
    %c0_i32_2 = arith.constant 0 : i32
    return %c0_i32, %c0_i32_0, %c0_i32_1 : i32, i32, i32
  }
  func.func @transform_8(%arg0: i32) -> (i32, i32, i32) {
    %c0_i32 = arith.constant 0 : i32
    %c0_i32_0 = arith.constant 0 : i32
    %c0_i32_1 = arith.constant 0 : i32
    %c0_i32_2 = arith.constant 0 : i32
    return %c0_i32, %c0_i32_0, %c0_i32_1 : i32, i32, i32
  }
  func.func @transform_9(%arg0: i32) -> (i32, i32, i32) {
    %c0_i32 = arith.constant 0 : i32
    %c0_i32_0 = arith.constant 0 : i32
    %c0_i32_1 = arith.constant 0 : i32
    %c0_i32_2 = arith.constant 0 : i32
    return %c0_i32, %c0_i32_0, %c0_i32_1 : i32, i32, i32
  }
  func.func @transform_10(%arg0: i32) -> (i32, i32, i32) {
    %c0_i32 = arith.constant 0 : i32
    %c0_i32_0 = arith.constant 0 : i32
    %c0_i32_1 = arith.constant 0 : i32
    %c0_i32_2 = arith.constant 0 : i32
    return %c0_i32, %c0_i32_0, %c0_i32_1 : i32, i32, i32
  }
  func.func @transform_11(%arg0: i32) -> (i32, i32, i32) {
    %c0_i32 = arith.constant 0 : i32
    %c0_i32_0 = arith.constant 0 : i32
    %c0_i32_1 = arith.constant 0 : i32
    %c0_i32_2 = arith.constant 0 : i32
    return %c0_i32, %c0_i32_0, %c0_i32_1 : i32, i32, i32
  }
  func.func @transform_12(%arg0: i32) -> (i32, i32, i32) {
    %c0_i32 = arith.constant 0 : i32
    %c0_i32_0 = arith.constant 0 : i32
    %c0_i32_1 = arith.constant 0 : i32
    %c0_i32_2 = arith.constant 0 : i32
    return %c0_i32, %c0_i32_0, %c0_i32_1 : i32, i32, i32
  }
  func.func @transform_13(%arg0: i32) -> (i32, i32, i32) {
    %c0_i32 = arith.constant 0 : i32
    %c0_i32_0 = arith.constant 0 : i32
    %c0_i32_1 = arith.constant 0 : i32
    %c0_i32_2 = arith.constant 0 : i32
    return %c0_i32, %c0_i32_0, %c0_i32_1 : i32, i32, i32
  }
  func.func @transform_14(%arg0: i32) -> (i32, i32, i32) {
    %c0_i32 = arith.constant 0 : i32
    %c0_i32_0 = arith.constant 0 : i32
    %c0_i32_1 = arith.constant 0 : i32
    %c0_i32_2 = arith.constant 0 : i32
    return %c0_i32, %c0_i32_0, %c0_i32_1 : i32, i32, i32
  }
  func.func @transform_15(%arg0: i32) -> (i32, i32, i32) {
    %c0_i32 = arith.constant 0 : i32
    %c0_i32_0 = arith.constant 0 : i32
    %c0_i32_1 = arith.constant 0 : i32
    %c0_i32_2 = arith.constant 0 : i32
    return %c0_i32, %c0_i32_0, %c0_i32_1 : i32, i32, i32
  }
  func.func @transform_16(%arg0: i32) -> (i32, i32) {
    %c0_i32 = arith.constant 0 : i32
    %c0_i32_0 = arith.constant 0 : i32
    %c0_i32_1 = arith.constant 0 : i32
    return %c0_i32, %c0_i32_0 : i32, i32
  }
  func.func @transform_17(%arg0: i32) -> (i32, i32) {
    %c0_i32 = arith.constant 0 : i32
    %c0_i32_0 = arith.constant 0 : i32
    %c0_i32_1 = arith.constant 0 : i32
    return %c0_i32, %c0_i32_0 : i32, i32
  }
  func.func @transform_18(%arg0: i32) -> (i32, i32) {
    %c0_i32 = arith.constant 0 : i32
    %c0_i32_0 = arith.constant 0 : i32
    %c0_i32_1 = arith.constant 0 : i32
    return %c0_i32, %c0_i32_0 : i32, i32
  }
  func.func @transform_19(%arg0: i32) -> (i32, i32) {
    %c0_i32 = arith.constant 0 : i32
    %c0_i32_0 = arith.constant 0 : i32
    %c0_i32_1 = arith.constant 0 : i32
    return %c0_i32, %c0_i32_0 : i32, i32
  }
}

</mosaic_0001>

<llo_original>
// kernel: tpu_custom_call.1
$region0: #{tpu_custom_call.1}
  #allocation0 [shape = 'u32[]', space=smem, size = 0x4, offset = 0x4, fixed_abs, tag = 'smem constant byte address 0x4 - core index']
  #allocation1 [shape = 'u32[144,128]{1,0:T(1,128)}', space=vmem, size = 0x12000, scoped, tag = 'internal scratch']
  %s0 = inlined_call_operand.hbm [shape: bf16[16,128], index: 0, kind: input, shape index: {}]
  %s1 = inlined_call_operand.vmem [shape: f32[2,1,8], index: 1, kind: input, shape index: {}]
  %s2 = inlined_call_operand.hbm [shape: f32[1,128], index: 2, kind: input, shape index: {}]
  %s3 = inlined_call_operand.hbm [shape: f32[1,128], index: 3, kind: input, shape index: {}]
  %s4 = inlined_call_operand.hbm [shape: bf16[2,128,384], index: 4, kind: input, shape index: {}]
  %s5 = inlined_call_operand.vmem [shape: f32[2,1,384], index: 5, kind: input, shape index: {}]
  %s6 = inlined_call_operand.hbm [shape: bf16[2,128,128], index: 6, kind: input, shape index: {}]
  %s7 = inlined_call_operand.vmem [shape: f32[2,1,128], index: 7, kind: input, shape index: {}]
  %s8 = inlined_call_operand.vmem [shape: f32[2,1,128], index: 8, kind: input, shape index: {}]
  %s9 = inlined_call_operand.vmem [shape: f32[2,1,128], index: 9, kind: input, shape index: {}]
  %s10 = inlined_call_operand.hbm [shape: bf16[2,128,128], index: 10, kind: input, shape index: {}]
  %s11 = inlined_call_operand.vmem [shape: f32[2,1,128], index: 11, kind: input, shape index: {}]
  %s12 = inlined_call_operand.hbm [shape: bf16[2,128,128], index: 12, kind: input, shape index: {}]
  %s13 = inlined_call_operand.vmem [shape: f32[2,1,128], index: 13, kind: input, shape index: {}]
  %s14 = inlined_call_operand.vmem [shape: f32[2,1,128], index: 14, kind: input, shape index: {}]
  %s15 = inlined_call_operand.vmem [shape: f32[2,1,128], index: 15, kind: input, shape index: {}]
  %s16 = inlined_call_operand.hbm [shape: bf16[128,128], index: 16, kind: input, shape index: {}]
  %s17 = inlined_call_operand.vmem [shape: f32[1,128], index: 17, kind: input, shape index: {}]
  %s18 = inlined_call_operand.hbm [shape: f32[16,128], index: 18, kind: output, shape index: {0}]
  %s19 = inlined_call_operand.hbm [shape: f32[2,128], index: 19, kind: output, shape index: {1}]
  %20 = xla_tuple %s18, %s19
  %s21 = sld [smem:[#allocation0]]
  $region122: #{tpu_custom_call.1} parent=0
    _
  %s23 = ssub.s32 1, %s21
  %s24 = scalar_select 0, %s23, %s21
  $region1: #{tpu_custom_call.1} parent=0
    #allocation2 [shape = 'u8[4096]{0}', space=vmem, size = 0x1000, scoped, tag = 'input window, operand 0, single buffered']
    #allocation3 [shape = 's32[1]{0}', space=sflag, size = 0x4, scoped, tag = 'scoped memory for tpu_custom_call.1']
    #allocation4 [shape = 's32[1]{0}', space=sflag, size = 0x4, scoped, tag = 'scoped memory for tpu_custom_call.1']
    #allocation5 [shape = 'u8[512]{0}', space=vmem, size = 0x400, scoped, tag = 'input window, operand 2, single buffered']
    #allocation6 [shape = 's32[1]{0}', space=sflag, size = 0x4, scoped, tag = 'scoped memory for tpu_custom_call.1']
    #allocation7 [shape = 'u8[512]{0}', space=vmem, size = 0x400, scoped, tag = 'input window, operand 3, single buffered']
    #allocation8 [shape = 'u8[196608]{0}', space=vmem, size = 0x30000, scoped, tag = 'input window, operand 4, single buffered']
    #allocation9 [shape = 's32[1]{0}', space=sflag, size = 0x4, scoped, tag = 'scoped memory for tpu_custom_call.1']
    #allocation10 [shape = 'u8[65536]{0}', space=vmem, size = 0x10000, scoped, tag = 'input window, operand 6, single buffered']
    #allocation11 [shape = 'u8[65536]{0}', space=vmem, size = 0x10000, scoped, tag = 'input window, operand 10, single buffered']
    #allocation12 [shape = 's32[1]{0}', space=sflag, size = 0x4, scoped, tag = 'scoped memory for tpu_custom_call.1']
    #allocation13 [shape = 'u8[65536]{0}', space=vmem, size = 0x10000, scoped, tag = 'input window, operand 12, single buffered']
    #allocation14 [shape = 'u8[32768]{0}', space=vmem, size = 0x8000, scoped, tag = 'input window, operand 16, single buffered']
    #allocation15 [shape = 's32[1]{0}', space=sflag, size = 0x4, scoped, tag = 'scoped memory for tpu_custom_call.1']
    #allocation16 [shape = 'u8[8192]{0}', space=vmem, size = 0x2000, scoped, tag = 'output window, operand 0, single buffered']
    #allocation17 [shape = 'u8[1024]{0}', space=vmem, size = 0x400, scoped, tag = 'output window, operand 1, single buffered']
    #allocation18 [shape = 's32[1]{0}', space=sflag, size = 0x4, scoped, tag = 'scoped memory for tpu_custom_call.1']
    %25 = vsyncpa [#allocation3], 0
    %26 = vsyncpa [#allocation6], 0
    %27 = vsyncpa [#allocation9], 0
    %28 = vsyncpa [#allocation12], 0
    %29 = vsyncpa [#allocation15], 0
    %30 = vsyncpa [#allocation4], 0
    %31 = vsyncpa [#allocation18], 0
    // Predicated region
    $region2: #{tpu_custom_call.1} parent=1 // pred_check
      _
    $region3: #{tpu_custom_call.1} parent=1 // pred_check_branch
      %33 = sbr.rel (0) target = $region5
    $region4: #{tpu_custom_call.1} parent=1 // pred_region
      %s35 = ssub.s32 128, 128
      %36 = vsyncadd [#allocation3], %s35
      %s37 = sshll.u32 [#allocation2], 4
      %s38 = int_to_ptr.vmem [resolvable:$true] %s37
      %43 = dma.hbm_to_vmem [thread:$0]  %s0, 128, %s38, [#allocation3], 64, 64, 4
    $region5: #{tpu_custom_call.1} parent=1 // pred_fallthru
      _
    // Predicated region
    $region6: #{tpu_custom_call.1} parent=1 // pred_check
      _
    $region7: #{tpu_custom_call.1} parent=1 // pred_check_branch
      %45 = sbr.rel (0) target = $region9
    $region8: #{tpu_custom_call.1} parent=1 // pred_region
      _
    $region9: #{tpu_custom_call.1} parent=1 // pred_fallthru
      _
    // Predicated region
    $region10: #{tpu_custom_call.1} parent=1 // pred_check
      _
    $region11: #{tpu_custom_call.1} parent=1 // pred_check_branch
      %47 = sbr.rel (0) target = $region13
    $region12: #{tpu_custom_call.1} parent=1 // pred_region
      %s49 = ssub.s32 16, 16
      %50 = vsyncadd [#allocation6], %s49
      %s52 = sshll.u32 [#allocation5], 4
      %s53 = int_to_ptr.vmem [resolvable:$true] %s52
      %55 = dma.hbm_to_vmem [thread:$0]  %s2, 16, %s53, [#allocation6]
    $region13: #{tpu_custom_call.1} parent=1 // pred_fallthru
      _
    // Predicated region
    $region14: #{tpu_custom_call.1} parent=1 // pred_check
      _
    $region15: #{tpu_custom_call.1} parent=1 // pred_check_branch
      %57 = sbr.rel (0) target = $region17
    $region16: #{tpu_custom_call.1} parent=1 // pred_region
      %s59 = ssub.s32 16, 16
      %60 = vsyncadd [#allocation6], %s59
      %s62 = sshll.u32 [#allocation7], 4
      %s63 = int_to_ptr.vmem [resolvable:$true] %s62
      %65 = dma.hbm_to_vmem [thread:$0]  %s3, 16, %s63, [#allocation6]
    $region17: #{tpu_custom_call.1} parent=1 // pred_fallthru
      _
    // Predicated region
    $region18: #{tpu_custom_call.1} parent=1 // pred_check
      _
    $region19: #{tpu_custom_call.1} parent=1 // pred_check_branch
      %67 = sbr.rel (0) target = $region21
    $region20: #{tpu_custom_call.1} parent=1 // pred_region
      %s69 = ssub.s32 6144, 6144
      %70 = vsyncadd [#allocation9], %s69
      %s71 = sshll.u32 [#allocation8], 4
      %s72 = int_to_ptr.vmem [resolvable:$true] %s71
      %77 = dma.hbm_to_vmem [thread:$0]  %s4, 6144, %s72, [#allocation9], 192, 192, 12
    $region21: #{tpu_custom_call.1} parent=1 // pred_fallthru
      _
    // Predicated region
    $region22: #{tpu_custom_call.1} parent=1 // pred_check
      _
    $region23: #{tpu_custom_call.1} parent=1 // pred_check_branch
      %79 = sbr.rel (0) target = $region25
    $region24: #{tpu_custom_call.1} parent=1 // pred_region
      _
    $region25: #{tpu_custom_call.1} parent=1 // pred_fallthru
      _
    // Predicated region
    $region26: #{tpu_custom_call.1} parent=1 // pred_check
      _
    $region27: #{tpu_custom_call.1} parent=1 // pred_check_branch
      %81 = sbr.rel (0) target = $region29
    $region28: #{tpu_custom_call.1} parent=1 // pred_region
      %s83 = ssub.s32 2048, 2048
      %84 = vsyncadd [#allocation9], %s83
      %s85 = sshll.u32 [#allocation10], 4
      %s86 = int_to_ptr.vmem [resolvable:$true] %s85
      %91 = dma.hbm_to_vmem [thread:$0]  %s6, 2048, %s86, [#allocation9], 64, 64, 4
    $region29: #{tpu_custom_call.1} parent=1 // pred_fallthru
      _
    // Predicated region
    $region30: #{tpu_custom_call.1} parent=1 // pred_check
      _
    $region31: #{tpu_custom_call.1} parent=1 // pred_check_branch
      %93 = sbr.rel (0) target = $region33
    $region32: #{tpu_custom_call.1} parent=1 // pred_region
      _
    $region33: #{tpu_custom_call.1} parent=1 // pred_fallthru
      _
    // Predicated region
    $region34: #{tpu_custom_call.1} parent=1 // pred_check
      _
    $region35: #{tpu_custom_call.1} parent=1 // pred_check_branch
      %95 = sbr.rel (0) target = $region37
    $region36: #{tpu_custom_call.1} parent=1 // pred_region
      _
    $region37: #{tpu_custom_call.1} parent=1 // pred_fallthru
      _
    // Predicated region
    $region38: #{tpu_custom_call.1} parent=1 // pred_check
      _
    $region39: #{tpu_custom_call.1} parent=1 // pred_check_branch
      %97 = sbr.rel (0) target = $region41
    $region40: #{tpu_custom_call.1} parent=1 // pred_region
      _
    $region41: #{tpu_custom_call.1} parent=1 // pred_fallthru
      _
    // Predicated region
    $region42: #{tpu_custom_call.1} parent=1 // pred_check
      _
    $region43: #{tpu_custom_call.1} parent=1 // pred_check_branch
      %99 = sbr.rel (0) target = $region45
    $region44: #{tpu_custom_call.1} parent=1 // pred_region
      %s101 = ssub.s32 2048, 2048
      %102 = vsyncadd [#allocation12], %s101
      %s103 = sshll.u32 [#allocation11], 4
      %s104 = int_to_ptr.vmem [resolvable:$true] %s103
      %109 = dma.hbm_to_vmem [thread:$0]  %s10, 2048, %s104, [#allocation12], 64, 64, 4
    $region45: #{tpu_custom_call.1} parent=1 // pred_fallthru
      _
    // Predicated region
    $region46: #{tpu_custom_call.1} parent=1 // pred_check
      _
    $region47: #{tpu_custom_call.1} parent=1 // pred_check_branch
      %111 = sbr.rel (0) target = $region49
    $region48: #{tpu_custom_call.1} parent=1 // pred_region
      _
    $region49: #{tpu_custom_call.1} parent=1 // pred_fallthru
      _
    // Predicated region
    $region50: #{tpu_custom_call.1} parent=1 // pred_check
      _
    $region51: #{tpu_custom_call.1} parent=1 // pred_check_branch
      %113 = sbr.rel (0) target = $region53
    $region52: #{tpu_custom_call.1} parent=1 // pred_region
      %s115 = ssub.s32 2048, 2048
      %116 = vsyncadd [#allocation12], %s115
      %s117 = sshll.u32 [#allocation13], 4
      %s118 = int_to_ptr.vmem [resolvable:$true] %s117
      %123 = dma.hbm_to_vmem [thread:$0]  %s12, 2048, %s118, [#allocation12], 64, 64, 4
    $region53: #{tpu_custom_call.1} parent=1 // pred_fallthru
      _
    // Predicated region
    $region54: #{tpu_custom_call.1} parent=1 // pred_check
      _
    $region55: #{tpu_custom_call.1} parent=1 // pred_check_branch
      %125 = sbr.rel (0) target = $region57
    $region56: #{tpu_custom_call.1} parent=1 // pred_region
      _
    $region57: #{tpu_custom_call.1} parent=1 // pred_fallthru
      _
    // Predicated region
    $region58: #{tpu_custom_call.1} parent=1 // pred_check
      _
    $region59: #{tpu_custom_call.1} parent=1 // pred_check_branch
      %127 = sbr.rel (0) target = $region61
    $region60: #{tpu_custom_call.1} parent=1 // pred_region
      _
    $region61: #{tpu_custom_call.1} parent=1 // pred_fallthru
      _
    // Predicated region
    $region62: #{tpu_custom_call.1} parent=1 // pred_check
      _
    $region63: #{tpu_custom_call.1} parent=1 // pred_check_branch
      %129 = sbr.rel (0) target = $region65
    $region64: #{tpu_custom_call.1} parent=1 // pred_region
      _
    $region65: #{tpu_custom_call.1} parent=1 // pred_fallthru
      _
    // Predicated region
    $region66: #{tpu_custom_call.1} parent=1 // pred_check
      _
    $region67: #{tpu_custom_call.1} parent=1 // pred_check_branch
      %131 = sbr.rel (0) target = $region69
    $region68: #{tpu_custom_call.1} parent=1 // pred_region
      %s133 = ssub.s32 1024, 1024
      %134 = vsyncadd [#allocation15], %s133
      %s135 = sshll.u32 [#allocation14], 4
      %s136 = int_to_ptr.vmem [resolvable:$true] %s135
      %141 = dma.hbm_to_vmem [thread:$0]  %s16, 1024, %s136, [#allocation15], 64, 64, 4
    $region69: #{tpu_custom_call.1} parent=1 // pred_fallthru
      _
    // Predicated region
    $region70: #{tpu_custom_call.1} parent=1 // pred_check
      _
    $region71: #{tpu_custom_call.1} parent=1 // pred_check_branch
      %143 = sbr.rel (0) target = $region73
    $region72: #{tpu_custom_call.1} parent=1 // pred_region
      _
    $region73: #{tpu_custom_call.1} parent=1 // pred_fallthru
      _
    // Predicated region
    $region74: #{tpu_custom_call.1} parent=1 // pred_check
      _
    $region75: #{tpu_custom_call.1} parent=1 // pred_check_branch
      %145 = sbr.rel (0) target = $region77
    $region76: #{tpu_custom_call.1} parent=1 // pred_region
      %146 = dma.done [#allocation3], 128
    $region77: #{tpu_custom_call.1} parent=1 // pred_fallthru
      _
    // Predicated region
    $region78: #{tpu_custom_call.1} parent=1 // pred_check
      _
    $region79: #{tpu_custom_call.1} parent=1 // pred_check_branch
      %148 = sbr.rel (0) target = $region81
    $region80: #{tpu_custom_call.1} parent=1 // pred_region
      %149 = dma.done [#allocation6], 16
    $region81: #{tpu_custom_call.1} parent=1 // pred_fallthru
      _
    // Predicated region
    $region82: #{tpu_custom_call.1} parent=1 // pred_check
      _
    $region83: #{tpu_custom_call.1} parent=1 // pred_check_branch
      %151 = sbr.rel (0) target = $region85
    $region84: #{tpu_custom_call.1} parent=1 // pred_region
      %152 = dma.done [#allocation6], 16
    $region85: #{tpu_custom_call.1} parent=1 // pred_fallthru
      _
    // Predicated region
    $region86: #{tpu_custom_call.1} parent=1 // pred_check
      _
    $region87: #{tpu_custom_call.1} parent=1 // pred_check_branch
      %154 = sbr.rel (0) target = $region89
    $region88: #{tpu_custom_call.1} parent=1 // pred_region
      %155 = dma.done [#allocation9], 6144
    $region89: #{tpu_custom_call.1} parent=1 // pred_fallthru
      _
    // Predicated region
    $region90: #{tpu_custom_call.1} parent=1 // pred_check
      _
    $region91: #{tpu_custom_call.1} parent=1 // pred_check_branch
      %157 = sbr.rel (0) target = $region93
    $region92: #{tpu_custom_call.1} parent=1 // pred_region
      %158 = dma.done [#allocation9], 2048
    $region93: #{tpu_custom_call.1} parent=1 // pred_fallthru
      _
    // Predicated region
    $region94: #{tpu_custom_call.1} parent=1 // pred_check
      _
    $region95: #{tpu_custom_call.1} parent=1 // pred_check_branch
      %160 = sbr.rel (0) target = $region97
    $region96: #{tpu_custom_call.1} parent=1 // pred_region
      %161 = dma.done [#allocation12], 2048
    $region97: #{tpu_custom_call.1} parent=1 // pred_fallthru
      _
    // Predicated region
    $region98: #{tpu_custom_call.1} parent=1 // pred_check
      _
    $region99: #{tpu_custom_call.1} parent=1 // pred_check_branch
      %163 = sbr.rel (0) target = $region101
    $region100: #{tpu_custom_call.1} parent=1 // pred_region
      %164 = dma.done [#allocation12], 2048
    $region101: #{tpu_custom_call.1} parent=1 // pred_fallthru
      _
    // Predicated region
    $region102: #{tpu_custom_call.1} parent=1 // pred_check
      _
    $region103: #{tpu_custom_call.1} parent=1 // pred_check_branch
      %166 = sbr.rel (0) target = $region105
    $region104: #{tpu_custom_call.1} parent=1 // pred_region
      %167 = dma.done [#allocation15], 1024
    $region105: #{tpu_custom_call.1} parent=1 // pred_fallthru
      _
    %v169 = vlaneseq
    %v170 = vand.u32 %v169, 127
    %vm171 = vcmp.lt.s32.totalorder %v170, 32
    %v172 = vsel %vm171, 1, 0
    %v173 = vcvt.s32.f32 %v172
    %v174 = vld [vmem:[#allocation2] sm:$0xf]
    %v175 = vld [vmem:[#allocation2 + $0x4] sm:$0xf]
    %v176 = vunpack.c.l.bf16 %v174
    %v177 = vunpack.c.l.bf16 %v175
    %v178 = vld [vmem:[#allocation5] sm:$0x1]
    %v179 = vld [vmem:[#allocation7] sm:$0x1]
    %180 = vadd.xlane.f32.xlu0 %v176
    %v181 = vpop.xlane.xlu0 %180
    %182 = vadd.xlane.f32.xlu0 %v177
    %v183 = vpop.xlane.xlu0 %182
    %v184 = vmul.f32 %v181, 0.03125
    %v185 = vmul.f32 %v183, 0.03125
    %v186 = vsub.f32 %v176, %v184
    %v187 = vsub.f32 %v177, %v185
    %v188 = vmul.f32 %v186, %v173
    %v189 = vmul.f32 %v187, %v173
    %v190 = vmul.f32 %v188, %v188
    %v191 = vmul.f32 %v189, %v189
    %192 = vadd.xlane.f32.xlu0 %v190
    %v193 = vpop.xlane.xlu0 %192
    %194 = vadd.xlane.f32.xlu0 %v191
    %v195 = vpop.xlane.xlu0 %194
    %v196 = vmul.f32 %v193, 0.03125
    %v197 = vmul.f32 %v195, 0.03125
    %v198 = vadd.f32 %v196, 1e-12
    %v199 = vadd.f32 %v197, 1e-12
    %v200 = vrsqrt.pop %v198
    %v201 = vrsqrt.pop %v199
    %v202 = vmul.f32 %v188, %v200
    %v203 = vmul.f32 %v189, %v201
    %v205 = vlaneseq
    %v206 = vshrl.u32 %v205, 7
    %v207 = vsub.s32 0, %v206
    %v208 = vrot.slane %v178, %v207
    %v210 = vmul.f32 %v202, %v208
    %v211 = vmul.f32 %v203, %v208
    %v213 = vlaneseq
    %v214 = vshrl.u32 %v213, 7
    %v215 = vsub.s32 0, %v214
    %v216 = vrot.slane %v179, %v215
    %v218 = vadd.f32 %v210, %v216
    %v219 = vadd.f32 %v211, %v216
    %v220 = vld [vmem:[%s1] sm:$0x1]
    %v221 = vld [vmem:[%s1 + $0x1] sm:$0x1]
    %v222 = vpack.c.bf16 %v219, %v218
    %v223 = vld [vmem:[#allocation8] sm:$0xff]
    %v224 = vld [vmem:[#allocation8 + $0x8] sm:$0xf]
    %v225 = vld [vmem:[#allocation8 + $0xc] sm:$0xff]
    %v226 = vld [vmem:[#allocation8 + $0x14] sm:$0xf]
    %v227 = vld [vmem:[#allocation8 + $0x18] sm:$0xff]
    %v228 = vld [vmem:[#allocation8 + $0x20] sm:$0xf]
    %v229 = vld [vmem:[#allocation8 + $0x24] sm:$0xff]
    %v230 = vld [vmem:[#allocation8 + $0x2c] sm:$0xf]
    %v231 = vld [vmem:[#allocation8 + $0x30] sm:$0xff]
    %v232 = vld [vmem:[#allocation8 + $0x38] sm:$0xf]
    %v233 = vld [vmem:[#allocation8 + $0x3c] sm:$0xff]
    %v234 = vld [vmem:[#allocation8 + $0x44] sm:$0xf]
    %v235 = vld [vmem:[#allocation8 + $0x48] sm:$0xff]
    %v236 = vld [vmem:[#allocation8 + $0x50] sm:$0xf]
    %v237 = vld [vmem:[#allocation8 + $0x54] sm:$0xff]
    %v238 = vld [vmem:[#allocation8 + $0x5c] sm:$0xf]
    %v239 = vld [vmem:[#allocation8 + $0x60] sm:$0xff]
    %v240 = vld [vmem:[#allocation8 + $0x68] sm:$0xf]
    %v241 = vld [vmem:[#allocation8 + $0x6c] sm:$0xff]
    %v242 = vld [vmem:[#allocation8 + $0x74] sm:$0xf]
    %v243 = vld [vmem:[#allocation8 + $0x78] sm:$0xff]
    %v244 = vld [vmem:[#allocation8 + $0x80] sm:$0xf]
    %v245 = vld [vmem:[#allocation8 + $0x84] sm:$0xff]
    %v246 = vld [vmem:[#allocation8 + $0x8c] sm:$0xf]
    %v247 = vld [vmem:[#allocation8 + $0x90] sm:$0xff]
    %v248 = vld [vmem:[#allocation8 + $0x98] sm:$0xf]
    %v249 = vld [vmem:[#allocation8 + $0x9c] sm:$0xff]
    %v250 = vld [vmem:[#allocation8 + $0xa4] sm:$0xf]
    %v251 = vld [vmem:[#allocation8 + $0xa8] sm:$0xff]
    %v252 = vld [vmem:[#allocation8 + $0xb0] sm:$0xf]
    %v253 = vld [vmem:[#allocation8 + $0xb4] sm:$0xff]
    %v254 = vld [vmem:[#allocation8 + $0xbc] sm:$0xf]
    %v255 = vld [vmem:[%s5] sm:$0x7]
    %v257 = vlaneseq
    %v258 = vshrl.u32 %v257, 7
    %v259 = vsub.s32 0, %v258
    %v260 = vrot.slane %v255, %v259
    %v261 = vlaneseq
    %v262 = vshrl.u32 %v261, 7
    %v263 = vsub.s32 1, %v262
    %v264 = vrot.slane %v255, %v263
    %v265 = vlaneseq
    %v266 = vshrl.u32 %v265, 7
    %v267 = vsub.s32 2, %v266
    %v268 = vrot.slane %v255, %v267
    %v304 = vunpack.c.l.b16 %v223
    %v305 = vunpack.c.h.b16 %v223
    %v306 = vunpack.c.l.b16 %v224
    %v307 = vunpack.c.l.b16 %v225
    %v308 = vunpack.c.h.b16 %v225
    %v309 = vunpack.c.l.b16 %v226
    %v310 = vunpack.c.l.b16 %v227
    %v311 = vunpack.c.h.b16 %v227
    %v312 = vunpack.c.l.b16 %v228
    %v313 = vunpack.c.l.b16 %v229
    %v314 = vunpack.c.h.b16 %v229
    %v315 = vunpack.c.l.b16 %v230
    %v316 = vunpack.c.l.b16 %v231
    %v317 = vunpack.c.h.b16 %v231
    %v318 = vunpack.c.l.b16 %v232
    %v319 = vunpack.c.l.b16 %v233
    %v320 = vunpack.c.h.b16 %v233
    %v321 = vunpack.c.l.b16 %v234
    %v322 = vunpack.c.l.b16 %v235
    %v323 = vunpack.c.h.b16 %v235
    %v324 = vunpack.c.l.b16 %v236
    %v325 = vunpack.c.l.b16 %v237
    %v326 = vunpack.c.h.b16 %v237
    %v327 = vunpack.c.l.b16 %v238
    %v328 = vunpack.c.l.b16 %v239
    %v329 = vunpack.c.h.b16 %v239
    %v330 = vunpack.c.l.b16 %v240
    %v331 = vunpack.c.l.b16 %v241
    %v332 = vunpack.c.h.b16 %v241
    %v333 = vunpack.c.l.b16 %v242
    %v334 = vunpack.c.l.b16 %v243
    %v335 = vunpack.c.h.b16 %v243
    %v336 = vunpack.c.l.b16 %v244
    %v337 = vunpack.c.l.b16 %v245
    %v338 = vunpack.c.h.b16 %v245
    %v339 = vunpack.c.l.b16 %v246
    %v340 = vunpack.c.l.b16 %v247
    %v341 = vunpack.c.h.b16 %v247
    %v342 = vunpack.c.l.b16 %v248
    %v343 = vunpack.c.l.b16 %v249
    %v344 = vunpack.c.h.b16 %v249
    %v345 = vunpack.c.l.b16 %v250
    %v346 = vunpack.c.l.b16 %v251
    %v347 = vunpack.c.h.b16 %v251
    %v348 = vunpack.c.l.b16 %v252
    %v349 = vunpack.c.l.b16 %v253
    %v350 = vunpack.c.h.b16 %v253
    %v351 = vunpack.c.l.b16 %v254
    %v352 = vpack.c.b16 %v307, %v304
    %v353 = vpack.c.b16 %v308, %v305
    %v354 = vpack.c.b16 %v309, %v306
    %v355 = vpack.c.b16 %v313, %v310
    %v356 = vpack.c.b16 %v314, %v311
    %v357 = vpack.c.b16 %v315, %v312
    %v358 = vpack.c.b16 %v319, %v316
    %v359 = vpack.c.b16 %v320, %v317
    %v360 = vpack.c.b16 %v321, %v318
    %v361 = vpack.c.b16 %v325, %v322
    %v362 = vpack.c.b16 %v326, %v323
    %v363 = vpack.c.b16 %v327, %v324
    %v364 = vpack.c.b16 %v331, %v328
    %v365 = vpack.c.b16 %v332, %v329
    %v366 = vpack.c.b16 %v333, %v330
    %v367 = vpack.c.b16 %v337, %v334
    %v368 = vpack.c.b16 %v338, %v335
    %v369 = vpack.c.b16 %v339, %v336
    %v370 = vpack.c.b16 %v343, %v340
    %v371 = vpack.c.b16 %v344, %v341
    %v372 = vpack.c.b16 %v345, %v342
    %v373 = vpack.c.b16 %v349, %v346
    %v374 = vpack.c.b16 %v350, %v347
    %v375 = vpack.c.b16 %v351, %v348
    %400 = vmatprep.subr.bf16.mxu0 %v353
    %401 = vmatpush1.bf16.msra.mxu0 %v352
    %402 = vmatprep.subr.bf16.mxu0 %v356
    %403 = vmatpush1.bf16.msra.mxu0 %v355
    %404 = vmatprep.subr.bf16.mxu0 %v359
    %405 = vmatpush1.bf16.msra.mxu0 %v358
    %406 = vmatprep.subr.bf16.mxu0 %v362
    %407 = vmatpush1.bf16.msra.mxu0 %v361
    %408 = vmatprep.subr.bf16.mxu0 %v365
    %409 = vmatpush1.bf16.msra.mxu0 %v364
    %410 = vmatprep.subr.bf16.mxu0 %v368
    %411 = vmatpush1.bf16.msra.mxu0 %v367
    %412 = vmatprep.subr.bf16.mxu0 %v371
    %413 = vmatpush1.bf16.msra.mxu0 %v370
    %414 = vmatprep.subr.bf16.mxu0 %v374
    %415 = vmatpush1.bf16.msra.mxu0 %v373
    %416 = vmatprep.subr.bf16.mxu0 0
    %417 = vmatpush1.bf16.msra.mxu0 0
    %418 = vmatprep.subr.bf16.mxu0 0
    %419 = vmatpush1.bf16.msra.mxu0 0
    %420 = vmatprep.subr.bf16.mxu0 0
    %421 = vmatpush1.bf16.msra.mxu0 0
    %422 = vmatprep.subr.bf16.mxu0 0
    %423 = vmatpush1.bf16.msra.mxu0 0
    %424 = vmatprep.subr.bf16.mxu0 0
    %425 = vmatpush1.bf16.msra.mxu0 0
    %426 = vmatprep.subr.bf16.mxu0 0
    %427 = vmatpush1.bf16.msra.mxu0 0
    %428 = vmatprep.subr.bf16.mxu0 0
    %429 = vmatpush1.bf16.msra.mxu0 0
    %430 = vmatprep.subr.bf16.mxu0 0
    %431 = vmatpush1.bf16.msra.mxu0 0
    %432 = vmatprep.mubr.bf16.mxu0 0
    %433 = vmatmul.mubr.bf16.gmra.mrb[0].mxu0 %v222
    %v434 = vpop.f32.mrb[0].mxu0
    %v435 = vadd.f32 %v260, %v434
    %v436 = vpop.f32.mrb[0].mxu0
    %v437 = vadd.f32 %v264, %v436
    %v438 = vpop.f32.mrb[0].mxu0
    %v439 = vadd.f32 %v260, %v438
    %v440 = vpop.f32.mrb[0].mxu0
    %v441 = vadd.f32 %v264, %v440
    %442 = vdwg.mxu0
    %443 = vmatprep.subr.bf16.mxu0 0
    %444 = vmatpush1.bf16.msra.mxu0 %v354
    %445 = vmatprep.subr.bf16.mxu0 0
    %446 = vmatpush1.bf16.msra.mxu0 %v357
    %447 = vmatprep.subr.bf16.mxu0 0
    %448 = vmatpush1.bf16.msra.mxu0 %v360
    %449 = vmatprep.subr.bf16.mxu0 0
    %450 = vmatpush1.bf16.msra.mxu0 %v363
    %451 = vmatprep.subr.bf16.mxu0 0
    %452 = vmatpush1.bf16.msra.mxu0 %v366
    %453 = vmatprep.subr.bf16.mxu0 0
    %454 = vmatpush1.bf16.msra.mxu0 %v369
    %455 = vmatprep.subr.bf16.mxu0 0
    %456 = vmatpush1.bf16.msra.mxu0 %v372
    %457 = vmatprep.subr.bf16.mxu0 0
    %458 = vmatpush1.bf16.msra.mxu0 %v375
    %459 = vmatprep.subr.bf16.mxu0 0
    %460 = vmatpush1.bf16.msra.mxu0 0
    %461 = vmatprep.subr.bf16.mxu0 0
    %462 = vmatpush1.bf16.msra.mxu0 0
    %463 = vmatprep.subr.bf16.mxu0 0
    %464 = vmatpush1.bf16.msra.mxu0 0
    %465 = vmatprep.subr.bf16.mxu0 0
    %466 = vmatpush1.bf16.msra.mxu0 0
    %467 = vmatprep.subr.bf16.mxu0 0
    %468 = vmatpush1.bf16.msra.mxu0 0
    %469 = vmatprep.subr.bf16.mxu0 0
    %470 = vmatpush1.bf16.msra.mxu0 0
    %471 = vmatprep.subr.bf16.mxu0 0
    %472 = vmatpush1.bf16.msra.mxu0 0
    %473 = vmatprep.subr.bf16.mxu0 0
    %474 = vmatpush1.bf16.msra.mxu0 0
    %475 = vmatprep.mubr.bf16.mxu0 0
    %476 = vmatmul.mubr.bf16.gmra.mrb[0].mxu0 %v222
    %v477 = vpop.f32.mrb[0].mxu0
    %v478 = vadd.f32 %v268, %v477
    %v479 = vpop.f32.mrb[0].mxu0
    %v480 = vpop.f32.mrb[0].mxu0
    %v481 = vadd.f32 %v268, %v480
    %v482 = vpop.f32.mrb[0].mxu0
    %483 = vdwg.mxu0
    %v484 = vmul.f32 %v435, 0.35355338
    %v485 = vmul.f32 %v439, 0.35355338
    %v486 = vpack.c.bf16 %v485, %v484
    %v487 = vpack.c.bf16 %v441, %v437
    %v488 = vpack.c.bf16 %v481, %v478
    %v490 = vunpack.c.l.b16 %v486
    %v491 = vunpack.c.h.b16 %v486
    %v492 = vpack.c.b16 %v490, %v490
    %v493 = vpack.c.b16 %v491, %v491
    %v495 = vunpack.c.l.b16 %v487
    %v496 = vunpack.c.h.b16 %v487
    %v497 = vpack.c.b16 %v495, %v495
    %v498 = vpack.c.b16 %v496, %v496
    %v500 = vunpack.c.l.b16 %v488
    %v501 = vunpack.c.h.b16 %v488
    %v502 = vpack.c.b16 %v500, %v500
    %v503 = vpack.c.b16 %v501, %v501
    %v506 = vlaneseq
    %v507 = vshrl.u32 %v506, 7
    %v508 = vsub.s32 0, %v507
    %v509 = vrot.slane %v220, %v508
    %v510 = vlaneseq
    %v511 = vshrl.u32 %v510, 7
    %v512 = vsub.s32 0, %v511
    %v513 = vrot.slane %v221, %v512
    %vm516 = vcmask 261120
    %v518 = vsel %vm516, %v492, 0
    %v521 = vsel %vm516, %v497, 0
    %523 = vmatprep.subr.bf16.mxu0 0
    %524 = vmatpush1.bf16.xpose.msra.mxu0 %v521
    %525 = vmatprep.subr.bf16.mxu0 0
    %526 = vmatpush1.bf16.xpose.msra.mxu0 0
    %527 = vmatprep.subr.bf16.mxu0 0
    %528 = vmatpush1.bf16.xpose.msra.mxu0 0
    %529 = vmatprep.subr.bf16.mxu0 0
    %530 = vmatpush1.bf16.xpose.msra.mxu0 0
    %531 = vmatprep.subr.bf16.mxu0 0
    %532 = vmatpush1.bf16.xpose.msra.mxu0 0
    %533 = vmatprep.subr.bf16.mxu0 0
    %534 = vmatpush1.bf16.xpose.msra.mxu0 0
    %535 = vmatprep.subr.bf16.mxu0 0
    %536 = vmatpush1.bf16.xpose.msra.mxu0 0
    %537 = vmatprep.subr.bf16.mxu0 0
    %538 = vmatpush1.bf16.xpose.msra.mxu0 0
    %539 = vmatprep.subr.bf16.mxu0 0
    %540 = vmatpush1.bf16.xpose.msra.mxu0 0
    %541 = vmatprep.subr.bf16.mxu0 0
    %542 = vmatpush1.bf16.xpose.msra.mxu0 0
    %543 = vmatprep.subr.bf16.mxu0 0
    %544 = vmatpush1.bf16.xpose.msra.mxu0 0
    %545 = vmatprep.subr.bf16.mxu0 0
    %546 = vmatpush1.bf16.xpose.msra.mxu0 0
    %547 = vmatprep.subr.bf16.mxu0 0
    %548 = vmatpush1.bf16.xpose.msra.mxu0 0
    %549 = vmatprep.subr.bf16.mxu0 0
    %550 = vmatpush1.bf16.xpose.msra.mxu0 0
    %551 = vmatprep.subr.bf16.mxu0 0
    %552 = vmatpush1.bf16.xpose.msra.mxu0 0
    %553 = vmatprep.subr.bf16.mxu0 0
    %554 = vmatpush1.bf16.xpose.msra.mxu0 0
    %555 = vmatprep.mubr.bf16.mxu0 0
    %556 = vmatmul.mubr.bf16.gmra.mrb[0].mxu0 %v518
    %v557 = vpop.f32.mrb[0].mxu0
    %v558 = vadd.f32 %v509, %v557
    %v559 = vpop.f32.mrb[0].mxu0
    %v560 = vpop.f32.mrb[0].mxu0
    %v561 = vpop.f32.mrb[0].mxu0
    %562 = vdwg.mxu0
    %v564 = vsel %vm516, %v493, 0
    %v567 = vsel %vm516, %v498, 0
    %569 = vmatprep.subr.bf16.mxu0 0
    %570 = vmatpush1.bf16.xpose.msra.mxu0 %v567
    %571 = vmatprep.subr.bf16.mxu0 0
    %572 = vmatpush1.bf16.xpose.msra.mxu0 0
    %573 = vmatprep.subr.bf16.mxu0 0
    %574 = vmatpush1.bf16.xpose.msra.mxu0 0
    %575 = vmatprep.subr.bf16.mxu0 0
    %576 = vmatpush1.bf16.xpose.msra.mxu0 0
    %577 = vmatprep.subr.bf16.mxu0 0
    %578 = vmatpush1.bf16.xpose.msra.mxu0 0
    %579 = vmatprep.subr.bf16.mxu0 0
    %580 = vmatpush1.bf16.xpose.msra.mxu0 0
    %581 = vmatprep.subr.bf16.mxu0 0
    %582 = vmatpush1.bf16.xpose.msra.mxu0 0
    %583 = vmatprep.subr.bf16.mxu0 0
    %584 = vmatpush1.bf16.xpose.msra.mxu0 0
    %585 = vmatprep.subr.bf16.mxu0 0
    %586 = vmatpush1.bf16.xpose.msra.mxu0 0
    %587 = vmatprep.subr.bf16.mxu0 0
    %588 = vmatpush1.bf16.xpose.msra.mxu0 0
    %589 = vmatprep.subr.bf16.mxu0 0
    %590 = vmatpush1.bf16.xpose.msra.mxu0 0
    %591 = vmatprep.subr.bf16.mxu0 0
    %592 = vmatpush1.bf16.xpose.msra.mxu0 0
    %593 = vmatprep.subr.bf16.mxu0 0
    %594 = vmatpush1.bf16.xpose.msra.mxu0 0
    %595 = vmatprep.subr.bf16.mxu0 0
    %596 = vmatpush1.bf16.xpose.msra.mxu0 0
    %597 = vmatprep.subr.bf16.mxu0 0
    %598 = vmatpush1.bf16.xpose.msra.mxu0 0
    %599 = vmatprep.subr.bf16.mxu0 0
    %600 = vmatpush1.bf16.xpose.msra.mxu0 0
    %601 = vmatprep.mubr.bf16.mxu0 0
    %602 = vmatmul.mubr.bf16.gmra.mrb[0].mxu0 %v564
    %v603 = vpop.f32.mrb[0].mxu0
    %v604 = vadd.f32 %v513, %v603
    %v605 = vpop.f32.mrb[0].mxu0
    %v606 = vpop.f32.mrb[0].mxu0
    %v607 = vpop.f32.mrb[0].mxu0
    %608 = vdwg.mxu0
    %vm609 = vcmask 64512
    %v610 = vsel %vm609, %v558, -inf
    %611 = vmax.xlane.f32.xlu0 %v610
    %v612 = vpop.xlane.xlu0 %611
    %v613 = vsel %vm609, %v604, -inf
    %614 = vmax.xlane.f32.xlu0 %v613
    %v615 = vpop.xlane.xlu0 %614
    %v616 = vsub.f32 %v558, %v612
    %v617 = vsub.f32 %v604, %v615
    %v618 = vmul.f32 %v616, 1.442695
    %v619 = vpow.pop %v618
    %v620 = vmul.f32 %v617, 1.442695
    %v621 = vpow.pop %v620
    %v622 = vsel %vm609, %v619, 0.0
    %623 = vadd.xlane.f32.xlu0 %v622
    %v624 = vpop.xlane.xlu0 %623
    %v625 = vsel %vm609, %v621, 0.0
    %626 = vadd.xlane.f32.xlu0 %v625
    %v627 = vpop.xlane.xlu0 %626
    %v628 = vrcp.pop %v624
    %v629 = vrcp.pop %v627
    %v630 = vmul.f32 %v619, %v628
    %v631 = vmul.f32 %v621, %v629
    %v632 = vpack.c.bf16 %v630, %v630
    %v633 = vpack.c.bf16 %v631, %v631
    %v635 = vsel %vm609, %v632, 0
    %vm637 = vcmask 1043456
    %v639 = vsel %vm637, %v502, 0
    %641 = vmatprep.subr.bf16.mxu0 0
    %642 = vmatpush1.bf16.msra.mxu0 %v639
    %643 = vmatprep.subr.bf16.mxu0 0
    %644 = vmatpush1.bf16.msra.mxu0 0
    %645 = vmatprep.subr.bf16.mxu0 0
    %646 = vmatpush1.bf16.msra.mxu0 0
    %647 = vmatprep.subr.bf16.mxu0 0
    %648 = vmatpush1.bf16.msra.mxu0 0
    %649 = vmatprep.subr.bf16.mxu0 0
    %650 = vmatpush1.bf16.msra.mxu0 0
    %651 = vmatprep.subr.bf16.mxu0 0
    %652 = vmatpush1.bf16.msra.mxu0 0
    %653 = vmatprep.subr.bf16.mxu0 0
    %654 = vmatpush1.bf16.msra.mxu0 0
    %655 = vmatprep.subr.bf16.mxu0 0
    %656 = vmatpush1.bf16.msra.mxu0 0
    %657 = vmatprep.subr.bf16.mxu0 0
    %658 = vmatpush1.bf16.msra.mxu0 0
    %659 = vmatprep.subr.bf16.mxu0 0
    %660 = vmatpush1.bf16.msra.mxu0 0
    %661 = vmatprep.subr.bf16.mxu0 0
    %662 = vmatpush1.bf16.msra.mxu0 0
    %663 = vmatprep.subr.bf16.mxu0 0
    %664 = vmatpush1.bf16.msra.mxu0 0
    %665 = vmatprep.subr.bf16.mxu0 0
    %666 = vmatpush1.bf16.msra.mxu0 0
    %667 = vmatprep.subr.bf16.mxu0 0
    %668 = vmatpush1.bf16.msra.mxu0 0
    %669 = vmatprep.subr.bf16.mxu0 0
    %670 = vmatpush1.bf16.msra.mxu0 0
    %671 = vmatprep.subr.bf16.mxu0 0
    %672 = vmatpush1.bf16.msra.mxu0 0
    %673 = vmatprep.mubr.bf16.mxu0 0
    %674 = vmatmul.mubr.bf16.gmra.mrb[0].mxu0 %v635
    %v675 = vpop.f32.mrb[0].mxu0
    %v676 = vadd.f32 0.0, %v675
    %v677 = vpop.f32.mrb[0].mxu0
    %v678 = vpop.f32.mrb[0].mxu0
    %v679 = vpop.f32.mrb[0].mxu0
    %680 = vdwg.mxu0
    %v682 = vsel %vm609, %v633, 0
    %v685 = vsel %vm637, %v503, 0
    %687 = vmatprep.subr.bf16.mxu0 0
    %688 = vmatpush1.bf16.msra.mxu0 %v685
    %689 = vmatprep.subr.bf16.mxu0 0
    %690 = vmatpush1.bf16.msra.mxu0 0
    %691 = vmatprep.subr.bf16.mxu0 0
    %692 = vmatpush1.bf16.msra.mxu0 0
    %693 = vmatprep.subr.bf16.mxu0 0
    %694 = vmatpush1.bf16.msra.mxu0 0
    %695 = vmatprep.subr.bf16.mxu0 0
    %696 = vmatpush1.bf16.msra.mxu0 0
    %697 = vmatprep.subr.bf16.mxu0 0
    %698 = vmatpush1.bf16.msra.mxu0 0
    %699 = vmatprep.subr.bf16.mxu0 0
    %700 = vmatpush1.bf16.msra.mxu0 0
    %701 = vmatprep.subr.bf16.mxu0 0
    %702 = vmatpush1.bf16.msra.mxu0 0
    %703 = vmatprep.subr.bf16.mxu0 0
    %704 = vmatpush1.bf16.msra.mxu0 0
    %705 = vmatprep.subr.bf16.mxu0 0
    %706 = vmatpush1.bf16.msra.mxu0 0
    %707 = vmatprep.subr.bf16.mxu0 0
    %708 = vmatpush1.bf16.msra.mxu0 0
    %709 = vmatprep.subr.bf16.mxu0 0
    %710 = vmatpush1.bf16.msra.mxu0 0
    %711 = vmatprep.subr.bf16.mxu0 0
    %712 = vmatpush1.bf16.msra.mxu0 0
    %713 = vmatprep.subr.bf16.mxu0 0
    %714 = vmatpush1.bf16.msra.mxu0 0
    %715 = vmatprep.subr.bf16.mxu0 0
    %716 = vmatpush1.bf16.msra.mxu0 0
    %717 = vmatprep.subr.bf16.mxu0 0
    %718 = vmatpush1.bf16.msra.mxu0 0
    %719 = vmatprep.mubr.bf16.mxu0 0
    %720 = vmatmul.mubr.bf16.gmra.mrb[0].mxu0 %v682
    %v721 = vpop.f32.mrb[0].mxu0
    %v722 = vadd.f32 0.0, %v721
    %v723 = vpop.f32.mrb[0].mxu0
    %v724 = vpop.f32.mrb[0].mxu0
    %v725 = vpop.f32.mrb[0].mxu0
    %726 = vdwg.mxu0
    %v727 = vpack.c.bf16 %v722, %v676
    %v728 = vld [vmem:[#allocation10] sm:$0xf]
    %v729 = vld [vmem:[#allocation10 + $0x4] sm:$0xf]
    %v730 = vld [vmem:[#allocation10 + $0x8] sm:$0xf]
    %v731 = vld [vmem:[#allocation10 + $0xc] sm:$0xf]
    %732 = vrot.lane.b32.xlu0 %v492, 96
    %v733 = vpop.permute.xlu0 %732
    %734 = vrot.lane.b32.xlu0 %v497, 96
    %v735 = vpop.permute.xlu0 %734
    %v737 = vsel %vm516, %v733, 0
    %v740 = vsel %vm516, %v735, 0
    %742 = vmatprep.subr.bf16.mxu0 0
    %743 = vmatpush1.bf16.xpose.msra.mxu0 %v740
    %744 = vmatprep.subr.bf16.mxu0 0
    %745 = vmatpush1.bf16.xpose.msra.mxu0 0
    %746 = vmatprep.subr.bf16.mxu0 0
    %747 = vmatpush1.bf16.xpose.msra.mxu0 0
    %748 = vmatprep.subr.bf16.mxu0 0
    %749 = vmatpush1.bf16.xpose.msra.mxu0 0
    %750 = vmatprep.subr.bf16.mxu0 0
    %751 = vmatpush1.bf16.xpose.msra.mxu0 0
    %752 = vmatprep.subr.bf16.mxu0 0
    %753 = vmatpush1.bf16.xpose.msra.mxu0 0
    %754 = vmatprep.subr.bf16.mxu0 0
    %755 = vmatpush1.bf16.xpose.msra.mxu0 0
    %756 = vmatprep.subr.bf16.mxu0 0
    %757 = vmatpush1.bf16.xpose.msra.mxu0 0
    %758 = vmatprep.subr.bf16.mxu0 0
    %759 = vmatpush1.bf16.xpose.msra.mxu0 0
    %760 = vmatprep.subr.bf16.mxu0 0
    %761 = vmatpush1.bf16.xpose.msra.mxu0 0
    %762 = vmatprep.subr.bf16.mxu0 0
    %763 = vmatpush1.bf16.xpose.msra.mxu0 0
    %764 = vmatprep.subr.bf16.mxu0 0
    %765 = vmatpush1.bf16.xpose.msra.mxu0 0
    %766 = vmatprep.subr.bf16.mxu0 0
    %767 = vmatpush1.bf16.xpose.msra.mxu0 0
    %768 = vmatprep.subr.bf16.mxu0 0
    %769 = vmatpush1.bf16.xpose.msra.mxu0 0
    %770 = vmatprep.subr.bf16.mxu0 0
    %771 = vmatpush1.bf16.xpose.msra.mxu0 0
    %772 = vmatprep.subr.bf16.mxu0 0
    %773 = vmatpush1.bf16.xpose.msra.mxu0 0
    %774 = vmatprep.mubr.bf16.mxu0 0
    %775 = vmatmul.mubr.bf16.gmra.mrb[0].mxu0 %v737
    %v776 = vpop.f32.mrb[0].mxu0
    %v777 = vadd.f32 %v509, %v776
    %v778 = vpop.f32.mrb[0].mxu0
    %v779 = vpop.f32.mrb[0].mxu0
    %v780 = vpop.f32.mrb[0].mxu0
    %781 = vdwg.mxu0
    %782 = vrot.lane.b32.xlu0 %v493, 96
    %v783 = vpop.permute.xlu0 %782
    %784 = vrot.lane.b32.xlu0 %v498, 96
    %v785 = vpop.permute.xlu0 %784
    %v787 = vsel %vm516, %v783, 0
    %v790 = vsel %vm516, %v785, 0
    %792 = vmatprep.subr.bf16.mxu0 0
    %793 = vmatpush1.bf16.xpose.msra.mxu0 %v790
    %794 = vmatprep.subr.bf16.mxu0 0
    %795 = vmatpush1.bf16.xpose.msra.mxu0 0
    %796 = vmatprep.subr.bf16.mxu0 0
    %797 = vmatpush1.bf16.xpose.msra.mxu0 0
    %798 = vmatprep.subr.bf16.mxu0 0
    %799 = vmatpush1.bf16.xpose.msra.mxu0 0
    %800 = vmatprep.subr.bf16.mxu0 0
    %801 = vmatpush1.bf16.xpose.msra.mxu0 0
    %802 = vmatprep.subr.bf16.mxu0 0
    %803 = vmatpush1.bf16.xpose.msra.mxu0 0
    %804 = vmatprep.subr.bf16.mxu0 0
    %805 = vmatpush1.bf16.xpose.msra.mxu0 0
    %806 = vmatprep.subr.bf16.mxu0 0
    %807 = vmatpush1.bf16.xpose.msra.mxu0 0
    %808 = vmatprep.subr.bf16.mxu0 0
    %809 = vmatpush1.bf16.xpose.msra.mxu0 0
    %810 = vmatprep.subr.bf16.mxu0 0
    %811 = vmatpush1.bf16.xpose.msra.mxu0 0
    %812 = vmatprep.subr.bf16.mxu0 0
    %813 = vmatpush1.bf16.xpose.msra.mxu0 0
    %814 = vmatprep.subr.bf16.mxu0 0
    %815 = vmatpush1.bf16.xpose.msra.mxu0 0
    %816 = vmatprep.subr.bf16.mxu0 0
    %817 = vmatpush1.bf16.xpose.msra.mxu0 0
    %818 = vmatprep.subr.bf16.mxu0 0
    %819 = vmatpush1.bf16.xpose.msra.mxu0 0
    %820 = vmatprep.subr.bf16.mxu0 0
    %821 = vmatpush1.bf16.xpose.msra.mxu0 0
    %822 = vmatprep.subr.bf16.mxu0 0
    %823 = vmatpush1.bf16.xpose.msra.mxu0 0
    %824 = vmatprep.mubr.bf16.mxu0 0
    %825 = vmatmul.mubr.bf16.gmra.mrb[0].mxu0 %v787
    %v826 = vpop.f32.mrb[0].mxu0
    %v827 = vadd.f32 %v513, %v826
    %v828 = vpop.f32.mrb[0].mxu0
    %v829 = vpop.f32.mrb[0].mxu0
    %v830 = vpop.f32.mrb[0].mxu0
    %831 = vdwg.mxu0
    %v832 = vsel %vm609, %v777, -inf
    %833 = vmax.xlane.f32.xlu0 %v832
    %v834 = vpop.xlane.xlu0 %833
    %v835 = vsel %vm609, %v827, -inf
    %836 = vmax.xlane.f32.xlu0 %v835
    %v837 = vpop.xlane.xlu0 %836
    %v838 = vsub.f32 %v777, %v834
    %v839 = vsub.f32 %v827, %v837
    %v840 = vmul.f32 %v838, 1.442695
    %v841 = vpow.pop %v840
    %v842 = vmul.f32 %v839, 1.442695
    %v843 = vpow.pop %v842
    %v844 = vsel %vm609, %v841, 0.0
    %845 = vadd.xlane.f32.xlu0 %v844
    %v846 = vpop.xlane.xlu0 %845
    %v847 = vsel %vm609, %v843, 0.0
    %848 = vadd.xlane.f32.xlu0 %v847
    %v849 = vpop.xlane.xlu0 %848
    %v850 = vrcp.pop %v846
    %v851 = vrcp.pop %v849
    %v852 = vmul.f32 %v841, %v850
    %v853 = vmul.f32 %v843, %v851
    %v854 = vpack.c.bf16 %v852, %v852
    %v855 = vpack.c.bf16 %v853, %v853
    %856 = vrot.lane.b32.xlu0 %v502, 96
    %v857 = vpop.permute.xlu0 %856
    %v859 = vsel %vm609, %v854, 0
    %v862 = vsel %vm637, %v857, 0
    %864 = vmatprep.subr.bf16.mxu0 0
    %865 = vmatpush1.bf16.msra.mxu0 %v862
    %866 = vmatprep.subr.bf16.mxu0 0
    %867 = vmatpush1.bf16.msra.mxu0 0
    %868 = vmatprep.subr.bf16.mxu0 0
    %869 = vmatpush1.bf16.msra.mxu0 0
    %870 = vmatprep.subr.bf16.mxu0 0
    %871 = vmatpush1.bf16.msra.mxu0 0
    %872 = vmatprep.subr.bf16.mxu0 0
    %873 = vmatpush1.bf16.msra.mxu0 0
    %874 = vmatprep.subr.bf16.mxu0 0
    %875 = vmatpush1.bf16.msra.mxu0 0
    %876 = vmatprep.subr.bf16.mxu0 0
    %877 = vmatpush1.bf16.msra.mxu0 0
    %878 = vmatprep.subr.bf16.mxu0 0
    %879 = vmatpush1.bf16.msra.mxu0 0
    %880 = vmatprep.subr.bf16.mxu0 0
    %881 = vmatpush1.bf16.msra.mxu0 0
    %882 = vmatprep.subr.bf16.mxu0 0
    %883 = vmatpush1.bf16.msra.mxu0 0
    %884 = vmatprep.subr.bf16.mxu0 0
    %885 = vmatpush1.bf16.msra.mxu0 0
    %886 = vmatprep.subr.bf16.mxu0 0
    %887 = vmatpush1.bf16.msra.mxu0 0
    %888 = vmatprep.subr.bf16.mxu0 0
    %889 = vmatpush1.bf16.msra.mxu0 0
    %890 = vmatprep.subr.bf16.mxu0 0
    %891 = vmatpush1.bf16.msra.mxu0 0
    %892 = vmatprep.subr.bf16.mxu0 0
    %893 = vmatpush1.bf16.msra.mxu0 0
    %894 = vmatprep.subr.bf16.mxu0 0
    %895 = vmatpush1.bf16.msra.mxu0 0
    %896 = vmatprep.mubr.bf16.mxu0 0
    %897 = vmatmul.mubr.bf16.gmra.mrb[0].mxu0 %v859
    %v898 = vpop.f32.mrb[0].mxu0
    %v899 = vadd.f32 0.0, %v898
    %v900 = vpop.f32.mrb[0].mxu0
    %v901 = vpop.f32.mrb[0].mxu0
    %v902 = vpop.f32.mrb[0].mxu0
    %903 = vdwg.mxu0
    %904 = vrot.lane.b32.xlu0 %v503, 96
    %v905 = vpop.permute.xlu0 %904
    %v907 = vsel %vm609, %v855, 0
    %v910 = vsel %vm637, %v905, 0
    %912 = vmatprep.subr.bf16.mxu0 0
    %913 = vmatpush1.bf16.msra.mxu0 %v910
    %914 = vmatprep.subr.bf16.mxu0 0
    %915 = vmatpush1.bf16.msra.mxu0 0
    %916 = vmatprep.subr.bf16.mxu0 0
    %917 = vmatpush1.bf16.msra.mxu0 0
    %918 = vmatprep.subr.bf16.mxu0 0
    %919 = vmatpush1.bf16.msra.mxu0 0
    %920 = vmatprep.subr.bf16.mxu0 0
    %921 = vmatpush1.bf16.msra.mxu0 0
    %922 = vmatprep.subr.bf16.mxu0 0
    %923 = vmatpush1.bf16.msra.mxu0 0
    %924 = vmatprep.subr.bf16.mxu0 0
    %925 = vmatpush1.bf16.msra.mxu0 0
    %926 = vmatprep.subr.bf16.mxu0 0
    %927 = vmatpush1.bf16.msra.mxu0 0
    %928 = vmatprep.subr.bf16.mxu0 0
    %929 = vmatpush1.bf16.msra.mxu0 0
    %930 = vmatprep.subr.bf16.mxu0 0
    %931 = vmatpush1.bf16.msra.mxu0 0
    %932 = vmatprep.subr.bf16.mxu0 0
    %933 = vmatpush1.bf16.msra.mxu0 0
    %934 = vmatprep.subr.bf16.mxu0 0
    %935 = vmatpush1.bf16.msra.mxu0 0
    %936 = vmatprep.subr.bf16.mxu0 0
    %937 = vmatpush1.bf16.msra.mxu0 0
    %938 = vmatprep.subr.bf16.mxu0 0
    %939 = vmatpush1.bf16.msra.mxu0 0
    %940 = vmatprep.subr.bf16.mxu0 0
    %941 = vmatpush1.bf16.msra.mxu0 0
    %942 = vmatprep.subr.bf16.mxu0 0
    %943 = vmatpush1.bf16.msra.mxu0 0
    %944 = vmatprep.mubr.bf16.mxu0 0
    %945 = vmatmul.mubr.bf16.gmra.mrb[0].mxu0 %v907
    %v946 = vpop.f32.mrb[0].mxu0
    %v947 = vadd.f32 0.0, %v946
    %v948 = vpop.f32.mrb[0].mxu0
    %v949 = vpop.f32.mrb[0].mxu0
    %v950 = vpop.f32.mrb[0].mxu0
    %951 = vdwg.mxu0
    %v952 = vpack.c.bf16 %v947, %v899
    %v953 = vld [vmem:[#allocation10 + $0x10] sm:$0xf]
    %v954 = vld [vmem:[#allocation10 + $0x14] sm:$0xf]
    %v955 = vld [vmem:[#allocation10 + $0x18] sm:$0xf]
    %v956 = vld [vmem:[#allocation10 + $0x1c] sm:$0xf]
    %v961 = vunpack.c.l.b16 %v953
    %v962 = vunpack.c.l.b16 %v954
    %v963 = vunpack.c.l.b16 %v955
    %v964 = vunpack.c.l.b16 %v956
    %v965 = vpack.c.b16 %v962, %v961
    %v966 = vpack.c.b16 %v964, %v963
    %v970 = vsel %vm516, %v952, 0
    %972 = vmatprep.subr.bf16.mxu0 0
    %973 = vmatpush1.bf16.msra.mxu0 %v965
    %974 = vmatprep.subr.bf16.mxu0 0
    %975 = vmatpush1.bf16.msra.mxu0 %v966
    %976 = vmatprep.subr.bf16.mxu0 0
    %977 = vmatpush1.bf16.msra.mxu0 0
    %978 = vmatprep.subr.bf16.mxu0 0
    %979 = vmatpush1.bf16.msra.mxu0 0
    %980 = vmatprep.subr.bf16.mxu0 0
    %981 = vmatpush1.bf16.msra.mxu0 0
    %982 = vmatprep.subr.bf16.mxu0 0
    %983 = vmatpush1.bf16.msra.mxu0 0
    %984 = vmatprep.subr.bf16.mxu0 0
    %985 = vmatpush1.bf16.msra.mxu0 0
    %986 = vmatprep.subr.bf16.mxu0 0
    %987 = vmatpush1.bf16.msra.mxu0 0
    %988 = vmatprep.subr.bf16.mxu0 0
    %989 = vmatpush1.bf16.msra.mxu0 0
    %990 = vmatprep.subr.bf16.mxu0 0
    %991 = vmatpush1.bf16.msra.mxu0 0
    %992 = vmatprep.subr.bf16.mxu0 0
    %993 = vmatpush1.bf16.msra.mxu0 0
    %994 = vmatprep.subr.bf16.mxu0 0
    %995 = vmatpush1.bf16.msra.mxu0 0
    %996 = vmatprep.subr.bf16.mxu0 0
    %997 = vmatpush1.bf16.msra.mxu0 0
    %998 = vmatprep.subr.bf16.mxu0 0
    %999 = vmatpush1.bf16.msra.mxu0 0
    %1000 = vmatprep.subr.bf16.mxu0 0
    %1001 = vmatpush1.bf16.msra.mxu0 0
    %1002 = vmatprep.subr.bf16.mxu0 0
    %1003 = vmatpush1.bf16.msra.mxu0 0
    %1004 = vmatprep.mubr.bf16.mxu0 0
    %1005 = vmatmul.mubr.bf16.gmra.mrb[0].mxu0 %v970
    %v1006 = vpop.f32.mrb[0].mxu0
    %v1007 = vadd.f32 0.0, %v1006
    %v1008 = vpop.f32.mrb[0].mxu0
    %v1009 = vpop.f32.mrb[0].mxu0
    %v1010 = vadd.f32 0.0, %v1009
    %v1011 = vpop.f32.mrb[0].mxu0
    %1012 = vdwg.mxu0
    %v1017 = vunpack.c.l.b16 %v728
    %v1018 = vunpack.c.l.b16 %v729
    %v1019 = vunpack.c.l.b16 %v730
    %v1020 = vunpack.c.l.b16 %v731
    %v1021 = vpack.c.b16 %v1018, %v1017
    %v1022 = vpack.c.b16 %v1020, %v1019
    %v1026 = vsel %vm516, %v727, 0
    %1028 = vmatprep.subr.bf16.mxu0 0
    %1029 = vmatpush1.bf16.msra.mxu0 %v1021
    %1030 = vmatprep.subr.bf16.mxu0 0
    %1031 = vmatpush1.bf16.msra.mxu0 %v1022
    %1032 = vmatprep.subr.bf16.mxu0 0
    %1033 = vmatpush1.bf16.msra.mxu0 0
    %1034 = vmatprep.subr.bf16.mxu0 0
    %1035 = vmatpush1.bf16.msra.mxu0 0
    %1036 = vmatprep.subr.bf16.mxu0 0
    %1037 = vmatpush1.bf16.msra.mxu0 0
    %1038 = vmatprep.subr.bf16.mxu0 0
    %1039 = vmatpush1.bf16.msra.mxu0 0
    %1040 = vmatprep.subr.bf16.mxu0 0
    %1041 = vmatpush1.bf16.msra.mxu0 0
    %1042 = vmatprep.subr.bf16.mxu0 0
    %1043 = vmatpush1.bf16.msra.mxu0 0
    %1044 = vmatprep.subr.bf16.mxu0 0
    %1045 = vmatpush1.bf16.msra.mxu0 0
    %1046 = vmatprep.subr.bf16.mxu0 0
    %1047 = vmatpush1.bf16.msra.mxu0 0
    %1048 = vmatprep.subr.bf16.mxu0 0
    %1049 = vmatpush1.bf16.msra.mxu0 0
    %1050 = vmatprep.subr.bf16.mxu0 0
    %1051 = vmatpush1.bf16.msra.mxu0 0
    %1052 = vmatprep.subr.bf16.mxu0 0
    %1053 = vmatpush1.bf16.msra.mxu0 0
    %1054 = vmatprep.subr.bf16.mxu0 0
    %1055 = vmatpush1.bf16.msra.mxu0 0
    %1056 = vmatprep.subr.bf16.mxu0 0
    %1057 = vmatpush1.bf16.msra.mxu0 0
    %1058 = vmatprep.subr.bf16.mxu0 0
    %1059 = vmatpush1.bf16.msra.mxu0 0
    %1060 = vmatprep.mubr.bf16.mxu0 0
    %1061 = vmatmul.mubr.bf16.gmra.mrb[0].mxu0 %v1026
    %v1062 = vpop.f32.mrb[0].mxu0
    %v1063 = vadd.f32 %v1007, %v1062
    %v1064 = vpop.f32.mrb[0].mxu0
    %v1065 = vpop.f32.mrb[0].mxu0
    %v1066 = vadd.f32 %v1010, %v1065
    %v1067 = vpop.f32.mrb[0].mxu0
    %1068 = vdwg.mxu0
    %1069 = vrot.lane.b32.xlu0 %v492, 64
    %v1070 = vpop.permute.xlu0 %1069
    %1071 = vrot.lane.b32.xlu0 %v497, 64
    %v1072 = vpop.permute.xlu0 %1071
    %v1074 = vsel %vm516, %v1070, 0
    %v1077 = vsel %vm516, %v1072, 0
    %1079 = vmatprep.subr.bf16.mxu0 0
    %1080 = vmatpush1.bf16.xpose.msra.mxu0 %v1077
    %1081 = vmatprep.subr.bf16.mxu0 0
    %1082 = vmatpush1.bf16.xpose.msra.mxu0 0
    %1083 = vmatprep.subr.bf16.mxu0 0
    %1084 = vmatpush1.bf16.xpose.msra.mxu0 0
    %1085 = vmatprep.subr.bf16.mxu0 0
    %1086 = vmatpush1.bf16.xpose.msra.mxu0 0
    %1087 = vmatprep.subr.bf16.mxu0 0
    %1088 = vmatpush1.bf16.xpose.msra.mxu0 0
    %1089 = vmatprep.subr.bf16.mxu0 0
    %1090 = vmatpush1.bf16.xpose.msra.mxu0 0
    %1091 = vmatprep.subr.bf16.mxu0 0
    %1092 = vmatpush1.bf16.xpose.msra.mxu0 0
    %1093 = vmatprep.subr.bf16.mxu0 0
    %1094 = vmatpush1.bf16.xpose.msra.mxu0 0
    %1095 = vmatprep.subr.bf16.mxu0 0
    %1096 = vmatpush1.bf16.xpose.msra.mxu0 0
    %1097 = vmatprep.subr.bf16.mxu0 0
    %1098 = vmatpush1.bf16.xpose.msra.mxu0 0
    %1099 = vmatprep.subr.bf16.mxu0 0
    %1100 = vmatpush1.bf16.xpose.msra.mxu0 0
    %1101 = vmatprep.subr.bf16.mxu0 0
    %1102 = vmatpush1.bf16.xpose.msra.mxu0 0
    %1103 = vmatprep.subr.bf16.mxu0 0
    %1104 = vmatpush1.bf16.xpose.msra.mxu0 0
    %1105 = vmatprep.subr.bf16.mxu0 0
    %1106 = vmatpush1.bf16.xpose.msra.mxu0 0
    %1107 = vmatprep.subr.bf16.mxu0 0
    %1108 = vmatpush1.bf16.xpose.msra.mxu0 0
    %1109 = vmatprep.subr.bf16.mxu0 0
    %1110 = vmatpush1.bf16.xpose.msra.mxu0 0
    %1111 = vmatprep.mubr.bf16.mxu0 0
    %1112 = vmatmul.mubr.bf16.gmra.mrb[0].mxu0 %v1074
    %v1113 = vpop.f32.mrb[0].mxu0
    %v1114 = vadd.f32 %v509, %v1113
    %v1115 = vpop.f32.mrb[0].mxu0
    %v1116 = vpop.f32.mrb[0].mxu0
    %v1117 = vpop.f32.mrb[0].mxu0
    %1118 = vdwg.mxu0
    %1119 = vrot.lane.b32.xlu0 %v493, 64
    %v1120 = vpop.permute.xlu0 %1119
    %1121 = vrot.lane.b32.xlu0 %v498, 64
    %v1122 = vpop.permute.xlu0 %1121
    %v1124 = vsel %vm516, %v1120, 0
    %v1127 = vsel %vm516, %v1122, 0
    %1129 = vmatprep.subr.bf16.mxu0 0
    %1130 = vmatpush1.bf16.xpose.msra.mxu0 %v1127
    %1131 = vmatprep.subr.bf16.mxu0 0
    %1132 = vmatpush1.bf16.xpose.msra.mxu0 0
    %1133 = vmatprep.subr.bf16.mxu0 0
    %1134 = vmatpush1.bf16.xpose.msra.mxu0 0
    %1135 = vmatprep.subr.bf16.mxu0 0
    %1136 = vmatpush1.bf16.xpose.msra.mxu0 0
    %1137 = vmatprep.subr.bf16.mxu0 0
    %1138 = vmatpush1.bf16.xpose.msra.mxu0 0
    %1139 = vmatprep.subr.bf16.mxu0 0
    %1140 = vmatpush1.bf16.xpose.msra.mxu0 0
    %1141 = vmatprep.subr.bf16.mxu0 0
    %1142 = vmatpush1.bf16.xpose.msra.mxu0 0
    %1143 = vmatprep.subr.bf16.mxu0 0
    %1144 = vmatpush1.bf16.xpose.msra.mxu0 0
    %1145 = vmatprep.subr.bf16.mxu0 0
    %1146 = vmatpush1.bf16.xpose.msra.mxu0 0
    %1147 = vmatprep.subr.bf16.mxu0 0
    %1148 = vmatpush1.bf16.xpose.msra.mxu0 0
    %1149 = vmatprep.subr.bf16.mxu0 0
    %1150 = vmatpush1.bf16.xpose.msra.mxu0 0
    %1151 = vmatprep.subr.bf16.mxu0 0
    %1152 = vmatpush1.bf16.xpose.msra.mxu0 0
    %1153 = vmatprep.subr.bf16.mxu0 0
    %1154 = vmatpush1.bf16.xpose.msra.mxu0 0
    %1155 = vmatprep.subr.bf16.mxu0 0
    %1156 = vmatpush1.bf16.xpose.msra.mxu0 0
    %1157 = vmatprep.subr.bf16.mxu0 0
    %1158 = vmatpush1.bf16.xpose.msra.mxu0 0
    %1159 = vmatprep.subr.bf16.mxu0 0
    %1160 = vmatpush1.bf16.xpose.msra.mxu0 0
    %1161 = vmatprep.mubr.bf16.mxu0 0
    %1162 = vmatmul.mubr.bf16.gmra.mrb[0].mxu0 %v1124
    %v1163 = vpop.f32.mrb[0].mxu0
    %v1164 = vadd.f32 %v513, %v1163
    %v1165 = vpop.f32.mrb[0].mxu0
    %v1166 = vpop.f32.mrb[0].mxu0
    %v1167 = vpop.f32.mrb[0].mxu0
    %1168 = vdwg.mxu0
    %v1169 = vsel %vm609, %v1114, -inf
    %1170 = vmax.xlane.f32.xlu0 %v1169
    %v1171 = vpop.xlane.xlu0 %1170
    %v1172 = vsel %vm609, %v1164, -inf
    %1173 = vmax.xlane.f32.xlu0 %v1172
    %v1174 = vpop.xlane.xlu0 %1173
    %v1175 = vsub.f32 %v1114, %v1171
    %v1176 = vsub.f32 %v1164, %v1174
    %v1177 = vmul.f32 %v1175, 1.442695
    %v1178 = vpow.pop %v1177
    %v1179 = vmul.f32 %v1176, 1.442695
    %v1180 = vpow.pop %v1179
    %v1181 = vsel %vm609, %v1178, 0.0
    %1182 = vadd.xlane.f32.xlu0 %v1181
    %v1183 = vpop.xlane.xlu0 %1182
    %v1184 = vsel %vm609, %v1180, 0.0
    %1185 = vadd.xlane.f32.xlu0 %v1184
    %v1186 = vpop.xlane.xlu0 %1185
    %v1187 = vrcp.pop %v1183
    %v1188 = vrcp.pop %v1186
    %v1189 = vmul.f32 %v1178, %v1187
    %v1190 = vmul.f32 %v1180, %v1188
    %v1191 = vpack.c.bf16 %v1189, %v1189
    %v1192 = vpack.c.bf16 %v1190, %v1190
    %1193 = vrot.lane.b32.xlu0 %v502, 64
    %v1194 = vpop.permute.xlu0 %1193
    %v1196 = vsel %vm609, %v1191, 0
    %v1199 = vsel %vm637, %v1194, 0
    %1201 = vmatprep.subr.bf16.mxu0 0
    %1202 = vmatpush1.bf16.msra.mxu0 %v1199
    %1203 = vmatprep.subr.bf16.mxu0 0
    %1204 = vmatpush1.bf16.msra.mxu0 0
    %1205 = vmatprep.subr.bf16.mxu0 0
    %1206 = vmatpush1.bf16.msra.mxu0 0
    %1207 = vmatprep.subr.bf16.mxu0 0
    %1208 = vmatpush1.bf16.msra.mxu0 0
    %1209 = vmatprep.subr.bf16.mxu0 0
    %1210 = vmatpush1.bf16.msra.mxu0 0
    %1211 = vmatprep.subr.bf16.mxu0 0
    %1212 = vmatpush1.bf16.msra.mxu0 0
    %1213 = vmatprep.subr.bf16.mxu0 0
    %1214 = vmatpush1.bf16.msra.mxu0 0
    %1215 = vmatprep.subr.bf16.mxu0 0
    %1216 = vmatpush1.bf16.msra.mxu0 0
    %1217 = vmatprep.subr.bf16.mxu0 0
    %1218 = vmatpush1.bf16.msra.mxu0 0
    %1219 = vmatprep.subr.bf16.mxu0 0
    %1220 = vmatpush1.bf16.msra.mxu0 0
    %1221 = vmatprep.subr.bf16.mxu0 0
    %1222 = vmatpush1.bf16.msra.mxu0 0
    %1223 = vmatprep.subr.bf16.mxu0 0
    %1224 = vmatpush1.bf16.msra.mxu0 0
    %1225 = vmatprep.subr.bf16.mxu0 0
    %1226 = vmatpush1.bf16.msra.mxu0 0
    %1227 = vmatprep.subr.bf16.mxu0 0
    %1228 = vmatpush1.bf16.msra.mxu0 0
    %1229 = vmatprep.subr.bf16.mxu0 0
    %1230 = vmatpush1.bf16.msra.mxu0 0
    %1231 = vmatprep.subr.bf16.mxu0 0
    %1232 = vmatpush1.bf16.msra.mxu0 0
    %1233 = vmatprep.mubr.bf16.mxu0 0
    %1234 = vmatmul.mubr.bf16.gmra.mrb[0].mxu0 %v1196
    %v1235 = vpop.f32.mrb[0].mxu0
    %v1236 = vadd.f32 0.0, %v1235
    %v1237 = vpop.f32.mrb[0].mxu0
    %v1238 = vpop.f32.mrb[0].mxu0
    %v1239 = vpop.f32.mrb[0].mxu0
    %1240 = vdwg.mxu0
    %1241 = vrot.lane.b32.xlu0 %v503, 64
    %v1242 = vpop.permute.xlu0 %1241
    %v1244 = vsel %vm609, %v1192, 0
    %v1247 = vsel %vm637, %v1242, 0
    %1249 = vmatprep.subr.bf16.mxu0 0
    %1250 = vmatpush1.bf16.msra.mxu0 %v1247
    %1251 = vmatprep.subr.bf16.mxu0 0
    %1252 = vmatpush1.bf16.msra.mxu0 0
    %1253 = vmatprep.subr.bf16.mxu0 0
    %1254 = vmatpush1.bf16.msra.mxu0 0
    %1255 = vmatprep.subr.bf16.mxu0 0
    %1256 = vmatpush1.bf16.msra.mxu0 0
    %1257 = vmatprep.subr.bf16.mxu0 0
    %1258 = vmatpush1.bf16.msra.mxu0 0
    %1259 = vmatprep.subr.bf16.mxu0 0
    %1260 = vmatpush1.bf16.msra.mxu0 0
    %1261 = vmatprep.subr.bf16.mxu0 0
    %1262 = vmatpush1.bf16.msra.mxu0 0
    %1263 = vmatprep.subr.bf16.mxu0 0
    %1264 = vmatpush1.bf16.msra.mxu0 0
    %1265 = vmatprep.subr.bf16.mxu0 0
    %1266 = vmatpush1.bf16.msra.mxu0 0
    %1267 = vmatprep.subr.bf16.mxu0 0
    %1268 = vmatpush1.bf16.msra.mxu0 0
    %1269 = vmatprep.subr.bf16.mxu0 0
    %1270 = vmatpush1.bf16.msra.mxu0 0
    %1271 = vmatprep.subr.bf16.mxu0 0
    %1272 = vmatpush1.bf16.msra.mxu0 0
    %1273 = vmatprep.subr.bf16.mxu0 0
    %1274 = vmatpush1.bf16.msra.mxu0 0
    %1275 = vmatprep.subr.bf16.mxu0 0
    %1276 = vmatpush1.bf16.msra.mxu0 0
    %1277 = vmatprep.subr.bf16.mxu0 0
    %1278 = vmatpush1.bf16.msra.mxu0 0
    %1279 = vmatprep.subr.bf16.mxu0 0
    %1280 = vmatpush1.bf16.msra.mxu0 0
    %1281 = vmatprep.mubr.bf16.mxu0 0
    %1282 = vmatmul.mubr.bf16.gmra.mrb[0].mxu0 %v1244
    %v1283 = vpop.f32.mrb[0].mxu0
    %v1284 = vadd.f32 0.0, %v1283
    %v1285 = vpop.f32.mrb[0].mxu0
    %v1286 = vpop.f32.mrb[0].mxu0
    %v1287 = vpop.f32.mrb[0].mxu0
    %1288 = vdwg.mxu0
    %v1289 = vpack.c.bf16 %v1284, %v1236
    %v1290 = vld [vmem:[#allocation10 + $0x20] sm:$0xf]
    %v1291 = vld [vmem:[#allocation10 + $0x24] sm:$0xf]
    %v1292 = vld [vmem:[#allocation10 + $0x28] sm:$0xf]
    %v1293 = vld [vmem:[#allocation10 + $0x2c] sm:$0xf]
    %v1298 = vunpack.c.l.b16 %v1290
    %v1299 = vunpack.c.l.b16 %v1291
    %v1300 = vunpack.c.l.b16 %v1292
    %v1301 = vunpack.c.l.b16 %v1293
    %v1302 = vpack.c.b16 %v1299, %v1298
    %v1303 = vpack.c.b16 %v1301, %v1300
    %v1307 = vsel %vm516, %v1289, 0
    %1309 = vmatprep.subr.bf16.mxu0 0
    %1310 = vmatpush1.bf16.msra.mxu0 %v1302
    %1311 = vmatprep.subr.bf16.mxu0 0
    %1312 = vmatpush1.bf16.msra.mxu0 %v1303
    %1313 = vmatprep.subr.bf16.mxu0 0
    %1314 = vmatpush1.bf16.msra.mxu0 0
    %1315 = vmatprep.subr.bf16.mxu0 0
    %1316 = vmatpush1.bf16.msra.mxu0 0
    %1317 = vmatprep.subr.bf16.mxu0 0
    %1318 = vmatpush1.bf16.msra.mxu0 0
    %1319 = vmatprep.subr.bf16.mxu0 0
    %1320 = vmatpush1.bf16.msra.mxu0 0
    %1321 = vmatprep.subr.bf16.mxu0 0
    %1322 = vmatpush1.bf16.msra.mxu0 0
    %1323 = vmatprep.subr.bf16.mxu0 0
    %1324 = vmatpush1.bf16.msra.mxu0 0
    %1325 = vmatprep.subr.bf16.mxu0 0
    %1326 = vmatpush1.bf16.msra.mxu0 0
    %1327 = vmatprep.subr.bf16.mxu0 0
    %1328 = vmatpush1.bf16.msra.mxu0 0
    %1329 = vmatprep.subr.bf16.mxu0 0
    %1330 = vmatpush1.bf16.msra.mxu0 0
    %1331 = vmatprep.subr.bf16.mxu0 0
    %1332 = vmatpush1.bf16.msra.mxu0 0
    %1333 = vmatprep.subr.bf16.mxu0 0
    %1334 = vmatpush1.bf16.msra.mxu0 0
    %1335 = vmatprep.subr.bf16.mxu0 0
    %1336 = vmatpush1.bf16.msra.mxu0 0
    %1337 = vmatprep.subr.bf16.mxu0 0
    %1338 = vmatpush1.bf16.msra.mxu0 0
    %1339 = vmatprep.subr.bf16.mxu0 0
    %1340 = vmatpush1.bf16.msra.mxu0 0
    %1341 = vmatprep.mubr.bf16.mxu0 0
    %1342 = vmatmul.mubr.bf16.gmra.mrb[0].mxu0 %v1307
    %v1343 = vpop.f32.mrb[0].mxu0
    %v1344 = vadd.f32 0.0, %v1343
    %v1345 = vpop.f32.mrb[0].mxu0
    %v1346 = vpop.f32.mrb[0].mxu0
    %v1347 = vadd.f32 0.0, %v1346
    %v1348 = vpop.f32.mrb[0].mxu0
    %1349 = vdwg.mxu0
    %v1350 = vadd.f32 %v1063, %v1344
    %v1351 = vadd.f32 %v1066, %v1347
    %1352 = vrot.lane.b32.xlu0 %v492, 32
    %v1353 = vpop.permute.xlu0 %1352
    %1354 = vrot.lane.b32.xlu0 %v497, 32
    %v1355 = vpop.permute.xlu0 %1354
    %v1357 = vsel %vm516, %v1353, 0
    %v1360 = vsel %vm516, %v1355, 0
    %1362 = vmatprep.subr.bf16.mxu0 0
    %1363 = vmatpush1.bf16.xpose.msra.mxu0 %v1360
    %1364 = vmatprep.subr.bf16.mxu0 0
    %1365 = vmatpush1.bf16.xpose.msra.mxu0 0
    %1366 = vmatprep.subr.bf16.mxu0 0
    %1367 = vmatpush1.bf16.xpose.msra.mxu0 0
    %1368 = vmatprep.subr.bf16.mxu0 0
    %1369 = vmatpush1.bf16.xpose.msra.mxu0 0
    %1370 = vmatprep.subr.bf16.mxu0 0
    %1371 = vmatpush1.bf16.xpose.msra.mxu0 0
    %1372 = vmatprep.subr.bf16.mxu0 0
    %1373 = vmatpush1.bf16.xpose.msra.mxu0 0
    %1374 = vmatprep.subr.bf16.mxu0 0
    %1375 = vmatpush1.bf16.xpose.msra.mxu0 0
    %1376 = vmatprep.subr.bf16.mxu0 0
    %1377 = vmatpush1.bf16.xpose.msra.mxu0 0
    %1378 = vmatprep.subr.bf16.mxu0 0
    %1379 = vmatpush1.bf16.xpose.msra.mxu0 0
    %1380 = vmatprep.subr.bf16.mxu0 0
    %1381 = vmatpush1.bf16.xpose.msra.mxu0 0
    %1382 = vmatprep.subr.bf16.mxu0 0
    %1383 = vmatpush1.bf16.xpose.msra.mxu0 0
    %1384 = vmatprep.subr.bf16.mxu0 0
    %1385 = vmatpush1.bf16.xpose.msra.mxu0 0
    %1386 = vmatprep.subr.bf16.mxu0 0
    %1387 = vmatpush1.bf16.xpose.msra.mxu0 0
    %1388 = vmatprep.subr.bf16.mxu0 0
    %1389 = vmatpush1.bf16.xpose.msra.mxu0 0
    %1390 = vmatprep.subr.bf16.mxu0 0
    %1391 = vmatpush1.bf16.xpose.msra.mxu0 0
    %1392 = vmatprep.subr.bf16.mxu0 0
    %1393 = vmatpush1.bf16.xpose.msra.mxu0 0
    %1394 = vmatprep.mubr.bf16.mxu0 0
    %1395 = vmatmul.mubr.bf16.gmra.mrb[0].mxu0 %v1357
    %v1396 = vpop.f32.mrb[0].mxu0
    %v1397 = vadd.f32 %v509, %v1396
    %v1398 = vpop.f32.mrb[0].mxu0
    %v1399 = vpop.f32.mrb[0].mxu0
    %v1400 = vpop.f32.mrb[0].mxu0
    %1401 = vdwg.mxu0
    %1402 = vrot.lane.b32.xlu0 %v493, 32
    %v1403 = vpop.permute.xlu0 %1402
    %1404 = vrot.lane.b32.xlu0 %v498, 32
    %v1405 = vpop.permute.xlu0 %1404
    %v1407 = vsel %vm516, %v1403, 0
    %v1410 = vsel %vm516, %v1405, 0
    %1412 = vmatprep.subr.bf16.mxu0 0
    %1413 = vmatpush1.bf16.xpose.msra.mxu0 %v1410
    %1414 = vmatprep.subr.bf16.mxu0 0
    %1415 = vmatpush1.bf16.xpose.msra.mxu0 0
    %1416 = vmatprep.subr.bf16.mxu0 0
    %1417 = vmatpush1.bf16.xpose.msra.mxu0 0
    %1418 = vmatprep.subr.bf16.mxu0 0
    %1419 = vmatpush1.bf16.xpose.msra.mxu0 0
    %1420 = vmatprep.subr.bf16.mxu0 0
    %1421 = vmatpush1.bf16.xpose.msra.mxu0 0
    %1422 = vmatprep.subr.bf16.mxu0 0
    %1423 = vmatpush1.bf16.xpose.msra.mxu0 0
    %1424 = vmatprep.subr.bf16.mxu0 0
    %1425 = vmatpush1.bf16.xpose.msra.mxu0 0
    %1426 = vmatprep.subr.bf16.mxu0 0
    %1427 = vmatpush1.bf16.xpose.msra.mxu0 0
    %1428 = vmatprep.subr.bf16.mxu0 0
    %1429 = vmatpush1.bf16.xpose.msra.mxu0 0
    %1430 = vmatprep.subr.bf16.mxu0 0
    %1431 = vmatpush1.bf16.xpose.msra.mxu0 0
    %1432 = vmatprep.subr.bf16.mxu0 0
    %1433 = vmatpush1.bf16.xpose.msra.mxu0 0
    %1434 = vmatprep.subr.bf16.mxu0 0
    %1435 = vmatpush1.bf16.xpose.msra.mxu0 0
    %1436 = vmatprep.subr.bf16.mxu0 0
    %1437 = vmatpush1.bf16.xpose.msra.mxu0 0
    %1438 = vmatprep.subr.bf16.mxu0 0
    %1439 = vmatpush1.bf16.xpose.msra.mxu0 0
    %1440 = vmatprep.subr.bf16.mxu0 0
    %1441 = vmatpush1.bf16.xpose.msra.mxu0 0
    %1442 = vmatprep.subr.bf16.mxu0 0
    %1443 = vmatpush1.bf16.xpose.msra.mxu0 0
    %1444 = vmatprep.mubr.bf16.mxu0 0
    %1445 = vmatmul.mubr.bf16.gmra.mrb[0].mxu0 %v1407
    %v1446 = vpop.f32.mrb[0].mxu0
    %v1447 = vadd.f32 %v513, %v1446
    %v1448 = vpop.f32.mrb[0].mxu0
    %v1449 = vpop.f32.mrb[0].mxu0
    %v1450 = vpop.f32.mrb[0].mxu0
    %1451 = vdwg.mxu0
    %v1452 = vsel %vm609, %v1397, -inf
    %1453 = vmax.xlane.f32.xlu0 %v1452
    %v1454 = vpop.xlane.xlu0 %1453
    %v1455 = vsel %vm609, %v1447, -inf
    %1456 = vmax.xlane.f32.xlu0 %v1455
    %v1457 = vpop.xlane.xlu0 %1456
    %v1458 = vsub.f32 %v1397, %v1454
    %v1459 = vsub.f32 %v1447, %v1457
    %v1460 = vmul.f32 %v1458, 1.442695
    %v1461 = vpow.pop %v1460
    %v1462 = vmul.f32 %v1459, 1.442695
    %v1463 = vpow.pop %v1462
    %v1464 = vsel %vm609, %v1461, 0.0
    %1465 = vadd.xlane.f32.xlu0 %v1464
    %v1466 = vpop.xlane.xlu0 %1465
    %v1467 = vsel %vm609, %v1463, 0.0
    %1468 = vadd.xlane.f32.xlu0 %v1467
    %v1469 = vpop.xlane.xlu0 %1468
    %v1470 = vrcp.pop %v1466
    %v1471 = vrcp.pop %v1469
    %v1472 = vmul.f32 %v1461, %v1470
    %v1473 = vmul.f32 %v1463, %v1471
    %v1474 = vpack.c.bf16 %v1472, %v1472
    %v1475 = vpack.c.bf16 %v1473, %v1473
    %1476 = vrot.lane.b32.xlu0 %v502, 32
    %v1477 = vpop.permute.xlu0 %1476
    %v1479 = vsel %vm609, %v1474, 0
    %v1482 = vsel %vm637, %v1477, 0
    %1484 = vmatprep.subr.bf16.mxu0 0
    %1485 = vmatpush1.bf16.msra.mxu0 %v1482
    %1486 = vmatprep.subr.bf16.mxu0 0
    %1487 = vmatpush1.bf16.msra.mxu0 0
    %1488 = vmatprep.subr.bf16.mxu0 0
    %1489 = vmatpush1.bf16.msra.mxu0 0
    %1490 = vmatprep.subr.bf16.mxu0 0
    %1491 = vmatpush1.bf16.msra.mxu0 0
    %1492 = vmatprep.subr.bf16.mxu0 0
    %1493 = vmatpush1.bf16.msra.mxu0 0
    %1494 = vmatprep.subr.bf16.mxu0 0
    %1495 = vmatpush1.bf16.msra.mxu0 0
    %1496 = vmatprep.subr.bf16.mxu0 0
    %1497 = vmatpush1.bf16.msra.mxu0 0
    %1498 = vmatprep.subr.bf16.mxu0 0
    %1499 = vmatpush1.bf16.msra.mxu0 0
    %1500 = vmatprep.subr.bf16.mxu0 0
    %1501 = vmatpush1.bf16.msra.mxu0 0
    %1502 = vmatprep.subr.bf16.mxu0 0
    %1503 = vmatpush1.bf16.msra.mxu0 0
    %1504 = vmatprep.subr.bf16.mxu0 0
    %1505 = vmatpush1.bf16.msra.mxu0 0
    %1506 = vmatprep.subr.bf16.mxu0 0
    %1507 = vmatpush1.bf16.msra.mxu0 0
    %1508 = vmatprep.subr.bf16.mxu0 0
    %1509 = vmatpush1.bf16.msra.mxu0 0
    %1510 = vmatprep.subr.bf16.mxu0 0
    %1511 = vmatpush1.bf16.msra.mxu0 0
    %1512 = vmatprep.subr.bf16.mxu0 0
    %1513 = vmatpush1.bf16.msra.mxu0 0
    %1514 = vmatprep.subr.bf16.mxu0 0
    %1515 = vmatpush1.bf16.msra.mxu0 0
    %1516 = vmatprep.mubr.bf16.mxu0 0
    %1517 = vmatmul.mubr.bf16.gmra.mrb[0].mxu0 %v1479
    %v1518 = vpop.f32.mrb[0].mxu0
    %v1519 = vadd.f32 0.0, %v1518
    %v1520 = vpop.f32.mrb[0].mxu0
    %v1521 = vpop.f32.mrb[0].mxu0
    %v1522 = vpop.f32.mrb[0].mxu0
    %1523 = vdwg.mxu0
    %1524 = vrot.lane.b32.xlu0 %v503, 32
    %v1525 = vpop.permute.xlu0 %1524
    %v1527 = vsel %vm609, %v1475, 0
    %v1530 = vsel %vm637, %v1525, 0
    %1532 = vmatprep.subr.bf16.mxu0 0
    %1533 = vmatpush1.bf16.msra.mxu0 %v1530
    %1534 = vmatprep.subr.bf16.mxu0 0
    %1535 = vmatpush1.bf16.msra.mxu0 0
    %1536 = vmatprep.subr.bf16.mxu0 0
    %1537 = vmatpush1.bf16.msra.mxu0 0
    %1538 = vmatprep.subr.bf16.mxu0 0
    %1539 = vmatpush1.bf16.msra.mxu0 0
    %1540 = vmatprep.subr.bf16.mxu0 0
    %1541 = vmatpush1.bf16.msra.mxu0 0
    %1542 = vmatprep.subr.bf16.mxu0 0
    %1543 = vmatpush1.bf16.msra.mxu0 0
    %1544 = vmatprep.subr.bf16.mxu0 0
    %1545 = vmatpush1.bf16.msra.mxu0 0
    %1546 = vmatprep.subr.bf16.mxu0 0
    %1547 = vmatpush1.bf16.msra.mxu0 0
    %1548 = vmatprep.subr.bf16.mxu0 0
    %1549 = vmatpush1.bf16.msra.mxu0 0
    %1550 = vmatprep.subr.bf16.mxu0 0
    %1551 = vmatpush1.bf16.msra.mxu0 0
    %1552 = vmatprep.subr.bf16.mxu0 0
    %1553 = vmatpush1.bf16.msra.mxu0 0
    %1554 = vmatprep.subr.bf16.mxu0 0
    %1555 = vmatpush1.bf16.msra.mxu0 0
    %1556 = vmatprep.subr.bf16.mxu0 0
    %1557 = vmatpush1.bf16.msra.mxu0 0
    %1558 = vmatprep.subr.bf16.mxu0 0
    %1559 = vmatpush1.bf16.msra.mxu0 0
    %1560 = vmatprep.subr.bf16.mxu0 0
    %1561 = vmatpush1.bf16.msra.mxu0 0
    %1562 = vmatprep.subr.bf16.mxu0 0
    %1563 = vmatpush1.bf16.msra.mxu0 0
    %1564 = vmatprep.mubr.bf16.mxu0 0
    %1565 = vmatmul.mubr.bf16.gmra.mrb[0].mxu0 %v1527
    %v1566 = vpop.f32.mrb[0].mxu0
    %v1567 = vadd.f32 0.0, %v1566
    %v1568 = vpop.f32.mrb[0].mxu0
    %v1569 = vpop.f32.mrb[0].mxu0
    %v1570 = vpop.f32.mrb[0].mxu0
    %1571 = vdwg.mxu0
    %v1572 = vpack.c.bf16 %v1567, %v1519
    %v1573 = vld [vmem:[#allocation10 + $0x30] sm:$0xf]
    %v1574 = vld [vmem:[#allocation10 + $0x34] sm:$0xf]
    %v1575 = vld [vmem:[#allocation10 + $0x38] sm:$0xf]
    %v1576 = vld [vmem:[#allocation10 + $0x3c] sm:$0xf]
    %v1581 = vunpack.c.l.b16 %v1573
    %v1582 = vunpack.c.l.b16 %v1574
    %v1583 = vunpack.c.l.b16 %v1575
    %v1584 = vunpack.c.l.b16 %v1576
    %v1585 = vpack.c.b16 %v1582, %v1581
    %v1586 = vpack.c.b16 %v1584, %v1583
    %v1590 = vsel %vm516, %v1572, 0
    %1592 = vmatprep.subr.bf16.mxu0 0
    %1593 = vmatpush1.bf16.msra.mxu0 %v1585
    %1594 = vmatprep.subr.bf16.mxu0 0
    %1595 = vmatpush1.bf16.msra.mxu0 %v1586
    %1596 = vmatprep.subr.bf16.mxu0 0
    %1597 = vmatpush1.bf16.msra.mxu0 0
    %1598 = vmatprep.subr.bf16.mxu0 0
    %1599 = vmatpush1.bf16.msra.mxu0 0
    %1600 = vmatprep.subr.bf16.mxu0 0
    %1601 = vmatpush1.bf16.msra.mxu0 0
    %1602 = vmatprep.subr.bf16.mxu0 0
    %1603 = vmatpush1.bf16.msra.mxu0 0
    %1604 = vmatprep.subr.bf16.mxu0 0
    %1605 = vmatpush1.bf16.msra.mxu0 0
    %1606 = vmatprep.subr.bf16.mxu0 0
    %1607 = vmatpush1.bf16.msra.mxu0 0
    %1608 = vmatprep.subr.bf16.mxu0 0
    %1609 = vmatpush1.bf16.msra.mxu0 0
    %1610 = vmatprep.subr.bf16.mxu0 0
    %1611 = vmatpush1.bf16.msra.mxu0 0
    %1612 = vmatprep.subr.bf16.mxu0 0
    %1613 = vmatpush1.bf16.msra.mxu0 0
    %1614 = vmatprep.subr.bf16.mxu0 0
    %1615 = vmatpush1.bf16.msra.mxu0 0
    %1616 = vmatprep.subr.bf16.mxu0 0
    %1617 = vmatpush1.bf16.msra.mxu0 0
    %1618 = vmatprep.subr.bf16.mxu0 0
    %1619 = vmatpush1.bf16.msra.mxu0 0
    %1620 = vmatprep.subr.bf16.mxu0 0
    %1621 = vmatpush1.bf16.msra.mxu0 0
    %1622 = vmatprep.subr.bf16.mxu0 0
    %1623 = vmatpush1.bf16.msra.mxu0 0
    %1624 = vmatprep.mubr.bf16.mxu0 0
    %1625 = vmatmul.mubr.bf16.gmra.mrb[0].mxu0 %v1590
    %v1626 = vpop.f32.mrb[0].mxu0
    %v1627 = vadd.f32 0.0, %v1626
    %v1628 = vpop.f32.mrb[0].mxu0
    %v1629 = vpop.f32.mrb[0].mxu0
    %v1630 = vadd.f32 0.0, %v1629
    %v1631 = vpop.f32.mrb[0].mxu0
    %1632 = vdwg.mxu0
    %v1633 = vadd.f32 %v1350, %v1627
    %v1634 = vadd.f32 %v1351, %v1630
    %v1635 = vld [vmem:[%s7] sm:$0x1]
    %v1637 = vlaneseq
    %v1638 = vshrl.u32 %v1637, 7
    %v1639 = vsub.s32 0, %v1638
    %v1640 = vrot.slane %v1635, %v1639
    %v1642 = vadd.f32 %v1633, %v1640
    %v1643 = vadd.f32 %v1634, %v1640
    %v1644 = vadd.f32 %v1642, %v218
    %v1645 = vadd.f32 %v1643, %v219
    %v1646 = vld [vmem:[%s8] sm:$0x1]
    %v1647 = vld [vmem:[%s9] sm:$0x1]
    %1648 = vadd.xlane.f32.xlu0 %v1644
    %v1649 = vpop.xlane.xlu0 %1648
    %1650 = vadd.xlane.f32.xlu0 %v1645
    %v1651 = vpop.xlane.xlu0 %1650
    %v1652 = vmul.f32 %v1649, 0.03125
    %v1653 = vmul.f32 %v1651, 0.03125
    %v1654 = vsub.f32 %v1644, %v1652
    %v1655 = vsub.f32 %v1645, %v1653
    %v1656 = vmul.f32 %v1654, %v173
    %v1657 = vmul.f32 %v1655, %v173
    %v1658 = vmul.f32 %v1656, %v1656
    %v1659 = vmul.f32 %v1657, %v1657
    %1660 = vadd.xlane.f32.xlu0 %v1658
    %v1661 = vpop.xlane.xlu0 %1660
    %1662 = vadd.xlane.f32.xlu0 %v1659
    %v1663 = vpop.xlane.xlu0 %1662
    %v1664 = vmul.f32 %v1661, 0.03125
    %v1665 = vmul.f32 %v1663, 0.03125
    %v1666 = vadd.f32 %v1664, 1e-12
    %v1667 = vadd.f32 %v1665, 1e-12
    %v1668 = vrsqrt.pop %v1666
    %v1669 = vrsqrt.pop %v1667
    %v1670 = vmul.f32 %v1656, %v1668
    %v1671 = vmul.f32 %v1657, %v1669
    %v1673 = vlaneseq
    %v1674 = vshrl.u32 %v1673, 7
    %v1675 = vsub.s32 0, %v1674
    %v1676 = vrot.slane %v1646, %v1675
    %v1678 = vmul.f32 %v1670, %v1676
    %v1679 = vmul.f32 %v1671, %v1676
    %v1681 = vlaneseq
    %v1682 = vshrl.u32 %v1681, 7
    %v1683 = vsub.s32 0, %v1682
    %v1684 = vrot.slane %v1647, %v1683
    %v1686 = vadd.f32 %v1678, %v1684
    %v1687 = vadd.f32 %v1679, %v1684
    %v1688 = vpack.c.bf16 %v1687, %v1686
    %v1689 = vld [vmem:[#allocation11] sm:$0xf]
    %v1690 = vld [vmem:[#allocation11 + $0x4] sm:$0xf]
    %v1691 = vld [vmem:[#allocation11 + $0x8] sm:$0xf]
    %v1692 = vld [vmem:[#allocation11 + $0xc] sm:$0xf]
    %v1693 = vld [vmem:[#allocation11 + $0x10] sm:$0xf]
    %v1694 = vld [vmem:[#allocation11 + $0x14] sm:$0xf]
    %v1695 = vld [vmem:[#allocation11 + $0x18] sm:$0xf]
    %v1696 = vld [vmem:[#allocation11 + $0x1c] sm:$0xf]
    %v1697 = vld [vmem:[#allocation11 + $0x20] sm:$0xf]
    %v1698 = vld [vmem:[#allocation11 + $0x24] sm:$0xf]
    %v1699 = vld [vmem:[#allocation11 + $0x28] sm:$0xf]
    %v1700 = vld [vmem:[#allocation11 + $0x2c] sm:$0xf]
    %v1701 = vld [vmem:[#allocation11 + $0x30] sm:$0xf]
    %v1702 = vld [vmem:[#allocation11 + $0x34] sm:$0xf]
    %v1703 = vld [vmem:[#allocation11 + $0x38] sm:$0xf]
    %v1704 = vld [vmem:[#allocation11 + $0x3c] sm:$0xf]
    %v1705 = vld [vmem:[%s11] sm:$0x1]
    %v1707 = vlaneseq
    %v1708 = vshrl.u32 %v1707, 7
    %v1709 = vsub.s32 0, %v1708
    %v1710 = vrot.slane %v1705, %v1709
    %v1728 = vunpack.c.l.b16 %v1689
    %v1729 = vunpack.c.l.b16 %v1690
    %v1730 = vunpack.c.l.b16 %v1691
    %v1731 = vunpack.c.l.b16 %v1692
    %v1732 = vunpack.c.l.b16 %v1693
    %v1733 = vunpack.c.l.b16 %v1694
    %v1734 = vunpack.c.l.b16 %v1695
    %v1735 = vunpack.c.l.b16 %v1696
    %v1736 = vunpack.c.l.b16 %v1697
    %v1737 = vunpack.c.l.b16 %v1698
    %v1738 = vunpack.c.l.b16 %v1699
    %v1739 = vunpack.c.l.b16 %v1700
    %v1740 = vunpack.c.l.b16 %v1701
    %v1741 = vunpack.c.l.b16 %v1702
    %v1742 = vunpack.c.l.b16 %v1703
    %v1743 = vunpack.c.l.b16 %v1704
    %v1744 = vpack.c.b16 %v1729, %v1728
    %v1745 = vpack.c.b16 %v1731, %v1730
    %v1746 = vpack.c.b16 %v1733, %v1732
    %v1747 = vpack.c.b16 %v1735, %v1734
    %v1748 = vpack.c.b16 %v1737, %v1736
    %v1749 = vpack.c.b16 %v1739, %v1738
    %v1750 = vpack.c.b16 %v1741, %v1740
    %v1751 = vpack.c.b16 %v1743, %v1742
    %1760 = vmatprep.subr.bf16.mxu0 0
    %1761 = vmatpush1.bf16.msra.mxu0 %v1744
    %1762 = vmatprep.subr.bf16.mxu0 0
    %1763 = vmatpush1.bf16.msra.mxu0 %v1745
    %1764 = vmatprep.subr.bf16.mxu0 0
    %1765 = vmatpush1.bf16.msra.mxu0 %v1746
    %1766 = vmatprep.subr.bf16.mxu0 0
    %1767 = vmatpush1.bf16.msra.mxu0 %v1747
    %1768 = vmatprep.subr.bf16.mxu0 0
    %1769 = vmatpush1.bf16.msra.mxu0 %v1748
    %1770 = vmatprep.subr.bf16.mxu0 0
    %1771 = vmatpush1.bf16.msra.mxu0 %v1749
    %1772 = vmatprep.subr.bf16.mxu0 0
    %1773 = vmatpush1.bf16.msra.mxu0 %v1750
    %1774 = vmatprep.subr.bf16.mxu0 0
    %1775 = vmatpush1.bf16.msra.mxu0 %v1751
    %1776 = vmatprep.subr.bf16.mxu0 0
    %1777 = vmatpush1.bf16.msra.mxu0 0
    %1778 = vmatprep.subr.bf16.mxu0 0
    %1779 = vmatpush1.bf16.msra.mxu0 0
    %1780 = vmatprep.subr.bf16.mxu0 0
    %1781 = vmatpush1.bf16.msra.mxu0 0
    %1782 = vmatprep.subr.bf16.mxu0 0
    %1783 = vmatpush1.bf16.msra.mxu0 0
    %1784 = vmatprep.subr.bf16.mxu0 0
    %1785 = vmatpush1.bf16.msra.mxu0 0
    %1786 = vmatprep.subr.bf16.mxu0 0
    %1787 = vmatpush1.bf16.msra.mxu0 0
    %1788 = vmatprep.subr.bf16.mxu0 0
    %1789 = vmatpush1.bf16.msra.mxu0 0
    %1790 = vmatprep.subr.bf16.mxu0 0
    %1791 = vmatpush1.bf16.msra.mxu0 0
    %1792 = vmatprep.mubr.bf16.mxu0 0
    %1793 = vmatmul.mubr.bf16.gmra.mrb[0].mxu0 %v1688
    %v1794 = vpop.f32.mrb[0].mxu0
    %v1795 = vadd.f32 %v1710, %v1794
    %v1796 = vpop.f32.mrb[0].mxu0
    %v1797 = vpop.f32.mrb[0].mxu0
    %v1798 = vadd.f32 %v1710, %v1797
    %v1799 = vpop.f32.mrb[0].mxu0
    %1800 = vdwg.mxu0
    %v1801 = vmul.f32 %v1795, %v1795
    %v1802 = vmul.f32 %v1798, %v1798
    %v1803 = vmul.f32 %v1795, %v1801
    %v1804 = vmul.f32 %v1798, %v1802
    %v1805 = vmul.f32 %v1803, 0.044715
    %v1806 = vmul.f32 %v1804, 0.044715
    %v1807 = vadd.f32 %v1795, %v1805
    %v1808 = vadd.f32 %v1798, %v1806
    %v1809 = vmul.f32 %v1807, 0.7978846
    %v1810 = vmul.f32 %v1808, 0.7978846
    %v1811 = vtanh.pop %v1809
    %v1812 = vtanh.pop %v1810
    %v1813 = vadd.f32 %v1811, 1.0
    %v1814 = vadd.f32 %v1812, 1.0
    %v1815 = vmul.f32 %v1813, 0.5
    %v1816 = vmul.f32 %v1814, 0.5
    %v1817 = vmul.f32 %v1795, %v1815
    %v1818 = vmul.f32 %v1798, %v1816
    %v1819 = vpack.c.bf16 %v1818, %v1817
    %v1820 = vld [vmem:[#allocation13] sm:$0xf]
    %v1821 = vld [vmem:[#allocation13 + $0x4] sm:$0xf]
    %v1822 = vld [vmem:[#allocation13 + $0x8] sm:$0xf]
    %v1823 = vld [vmem:[#allocation13 + $0xc] sm:$0xf]
    %v1824 = vld [vmem:[#allocation13 + $0x10] sm:$0xf]
    %v1825 = vld [vmem:[#allocation13 + $0x14] sm:$0xf]
    %v1826 = vld [vmem:[#allocation13 + $0x18] sm:$0xf]
    %v1827 = vld [vmem:[#allocation13 + $0x1c] sm:$0xf]
    %v1828 = vld [vmem:[#allocation13 + $0x20] sm:$0xf]
    %v1829 = vld [vmem:[#allocation13 + $0x24] sm:$0xf]
    %v1830 = vld [vmem:[#allocation13 + $0x28] sm:$0xf]
    %v1831 = vld [vmem:[#allocation13 + $0x2c] sm:$0xf]
    %v1832 = vld [vmem:[#allocation13 + $0x30] sm:$0xf]
    %v1833 = vld [vmem:[#allocation13 + $0x34] sm:$0xf]
    %v1834 = vld [vmem:[#allocation13 + $0x38] sm:$0xf]
    %v1835 = vld [vmem:[#allocation13 + $0x3c] sm:$0xf]
    %v1836 = vld [vmem:[%s13] sm:$0x1]
    %v1838 = vlaneseq
    %v1839 = vshrl.u32 %v1838, 7
    %v1840 = vsub.s32 0, %v1839
    %v1841 = vrot.slane %v1836, %v1840
    %v1859 = vunpack.c.l.b16 %v1820
    %v1860 = vunpack.c.l.b16 %v1821
    %v1861 = vunpack.c.l.b16 %v1822
    %v1862 = vunpack.c.l.b16 %v1823
    %v1863 = vunpack.c.l.b16 %v1824
    %v1864 = vunpack.c.l.b16 %v1825
    %v1865 = vunpack.c.l.b16 %v1826
    %v1866 = vunpack.c.l.b16 %v1827
    %v1867 = vunpack.c.l.b16 %v1828
    %v1868 = vunpack.c.l.b16 %v1829
    %v1869 = vunpack.c.l.b16 %v1830
    %v1870 = vunpack.c.l.b16 %v1831
    %v1871 = vunpack.c.l.b16 %v1832
    %v1872 = vunpack.c.l.b16 %v1833
    %v1873 = vunpack.c.l.b16 %v1834
    %v1874 = vunpack.c.l.b16 %v1835
    %v1875 = vpack.c.b16 %v1860, %v1859
    %v1876 = vpack.c.b16 %v1862, %v1861
    %v1877 = vpack.c.b16 %v1864, %v1863
    %v1878 = vpack.c.b16 %v1866, %v1865
    %v1879 = vpack.c.b16 %v1868, %v1867
    %v1880 = vpack.c.b16 %v1870, %v1869
    %v1881 = vpack.c.b16 %v1872, %v1871
    %v1882 = vpack.c.b16 %v1874, %v1873
    %1891 = vmatprep.subr.bf16.mxu0 0
    %1892 = vmatpush1.bf16.msra.mxu0 %v1875
    %1893 = vmatprep.subr.bf16.mxu0 0
    %1894 = vmatpush1.bf16.msra.mxu0 %v1876
    %1895 = vmatprep.subr.bf16.mxu0 0
    %1896 = vmatpush1.bf16.msra.mxu0 %v1877
    %1897 = vmatprep.subr.bf16.mxu0 0
    %1898 = vmatpush1.bf16.msra.mxu0 %v1878
    %1899 = vmatprep.subr.bf16.mxu0 0
    %1900 = vmatpush1.bf16.msra.mxu0 %v1879
    %1901 = vmatprep.subr.bf16.mxu0 0
    %1902 = vmatpush1.bf16.msra.mxu0 %v1880
    %1903 = vmatprep.subr.bf16.mxu0 0
    %1904 = vmatpush1.bf16.msra.mxu0 %v1881
    %1905 = vmatprep.subr.bf16.mxu0 0
    %1906 = vmatpush1.bf16.msra.mxu0 %v1882
    %1907 = vmatprep.subr.bf16.mxu0 0
    %1908 = vmatpush1.bf16.msra.mxu0 0
    %1909 = vmatprep.subr.bf16.mxu0 0
    %1910 = vmatpush1.bf16.msra.mxu0 0
    %1911 = vmatprep.subr.bf16.mxu0 0
    %1912 = vmatpush1.bf16.msra.mxu0 0
    %1913 = vmatprep.subr.bf16.mxu0 0
    %1914 = vmatpush1.bf16.msra.mxu0 0
    %1915 = vmatprep.subr.bf16.mxu0 0
    %1916 = vmatpush1.bf16.msra.mxu0 0
    %1917 = vmatprep.subr.bf16.mxu0 0
    %1918 = vmatpush1.bf16.msra.mxu0 0
    %1919 = vmatprep.subr.bf16.mxu0 0
    %1920 = vmatpush1.bf16.msra.mxu0 0
    %1921 = vmatprep.subr.bf16.mxu0 0
    %1922 = vmatpush1.bf16.msra.mxu0 0
    %1923 = vmatprep.mubr.bf16.mxu0 0
    %1924 = vmatmul.mubr.bf16.gmra.mrb[0].mxu0 %v1819
    %v1925 = vpop.f32.mrb[0].mxu0
    %v1926 = vadd.f32 %v1841, %v1925
    %v1927 = vpop.f32.mrb[0].mxu0
    %v1928 = vpop.f32.mrb[0].mxu0
    %v1929 = vadd.f32 %v1841, %v1928
    %v1930 = vpop.f32.mrb[0].mxu0
    %1931 = vdwg.mxu0
    %v1932 = vadd.f32 %v1926, %v1686
    %v1933 = vadd.f32 %v1929, %v1687
    %v1934 = vld [vmem:[%s14] sm:$0x1]
    %v1935 = vld [vmem:[%s15] sm:$0x1]
    %1936 = vadd.xlane.f32.xlu0 %v1932
    %v1937 = vpop.xlane.xlu0 %1936
    %1938 = vadd.xlane.f32.xlu0 %v1933
    %v1939 = vpop.xlane.xlu0 %1938
    %v1940 = vmul.f32 %v1937, 0.03125
    %v1941 = vmul.f32 %v1939, 0.03125
    %v1942 = vsub.f32 %v1932, %v1940
    %v1943 = vsub.f32 %v1933, %v1941
    %v1944 = vmul.f32 %v1942, %v173
    %v1945 = vmul.f32 %v1943, %v173
    %v1946 = vmul.f32 %v1944, %v1944
    %v1947 = vmul.f32 %v1945, %v1945
    %1948 = vadd.xlane.f32.xlu0 %v1946
    %v1949 = vpop.xlane.xlu0 %1948
    %1950 = vadd.xlane.f32.xlu0 %v1947
    %v1951 = vpop.xlane.xlu0 %1950
    %v1952 = vmul.f32 %v1949, 0.03125
    %v1953 = vmul.f32 %v1951, 0.03125
    %v1954 = vadd.f32 %v1952, 1e-12
    %v1955 = vadd.f32 %v1953, 1e-12
    %v1956 = vrsqrt.pop %v1954
    %v1957 = vrsqrt.pop %v1955
    %v1958 = vmul.f32 %v1944, %v1956
    %v1959 = vmul.f32 %v1945, %v1957
    %v1961 = vlaneseq
    %v1962 = vshrl.u32 %v1961, 7
    %v1963 = vsub.s32 0, %v1962
    %v1964 = vrot.slane %v1934, %v1963
    %v1966 = vmul.f32 %v1958, %v1964
    %v1967 = vmul.f32 %v1959, %v1964
    %v1969 = vlaneseq
    %v1970 = vshrl.u32 %v1969, 7
    %v1971 = vsub.s32 0, %v1970
    %v1972 = vrot.slane %v1935, %v1971
    %v1974 = vadd.f32 %v1966, %v1972
    %v1975 = vadd.f32 %v1967, %v1972
    %v1976 = vpack.c.bf16 %v1975, %v1974
    %s1977 = scalar_lea.vmem [#allocation8], 192
    %v1978 = vld [vmem:[%s1977] sm:$0xff]
    %v1979 = vld [vmem:[%s1977 + $0x8] sm:$0xf]
    %v1980 = vld [vmem:[%s1977 + $0xc] sm:$0xff]
    %v1981 = vld [vmem:[%s1977 + $0x14] sm:$0xf]
    %v1982 = vld [vmem:[%s1977 + $0x18] sm:$0xff]
    %v1983 = vld [vmem:[%s1977 + $0x20] sm:$0xf]
    %v1984 = vld [vmem:[%s1977 + $0x24] sm:$0xff]
    %v1985 = vld [vmem:[%s1977 + $0x2c] sm:$0xf]
    %v1986 = vld [vmem:[%s1977 + $0x30] sm:$0xff]
    %v1987 = vld [vmem:[%s1977 + $0x38] sm:$0xf]
    %v1988 = vld [vmem:[%s1977 + $0x3c] sm:$0xff]
    %v1989 = vld [vmem:[%s1977 + $0x44] sm:$0xf]
    %v1990 = vld [vmem:[%s1977 + $0x48] sm:$0xff]
    %v1991 = vld [vmem:[%s1977 + $0x50] sm:$0xf]
    %v1992 = vld [vmem:[%s1977 + $0x54] sm:$0xff]
    %v1993 = vld [vmem:[%s1977 + $0x5c] sm:$0xf]
    %v1994 = vld [vmem:[%s1977 + $0x60] sm:$0xff]
    %v1995 = vld [vmem:[%s1977 + $0x68] sm:$0xf]
    %v1996 = vld [vmem:[%s1977 + $0x6c] sm:$0xff]
    %v1997 = vld [vmem:[%s1977 + $0x74] sm:$0xf]
    %v1998 = vld [vmem:[%s1977 + $0x78] sm:$0xff]
    %v1999 = vld [vmem:[%s1977 + $0x80] sm:$0xf]
    %v2000 = vld [vmem:[%s1977 + $0x84] sm:$0xff]
    %v2001 = vld [vmem:[%s1977 + $0x8c] sm:$0xf]
    %v2002 = vld [vmem:[%s1977 + $0x90] sm:$0xff]
    %v2003 = vld [vmem:[%s1977 + $0x98] sm:$0xf]
    %v2004 = vld [vmem:[%s1977 + $0x9c] sm:$0xff]
    %v2005 = vld [vmem:[%s1977 + $0xa4] sm:$0xf]
    %v2006 = vld [vmem:[%s1977 + $0xa8] sm:$0xff]
    %v2007 = vld [vmem:[%s1977 + $0xb0] sm:$0xf]
    %v2008 = vld [vmem:[%s1977 + $0xb4] sm:$0xff]
    %v2009 = vld [vmem:[%s1977 + $0xbc] sm:$0xf]
    %s2010 = scalar_lea.vmem %s5, 3
    %v2011 = vld [vmem:[%s2010] sm:$0x7]
    %v2013 = vlaneseq
    %v2014 = vshrl.u32 %v2013, 7
    %v2015 = vsub.s32 0, %v2014
    %v2016 = vrot.slane %v2011, %v2015
    %v2017 = vlaneseq
    %v2018 = vshrl.u32 %v2017, 7
    %v2019 = vsub.s32 1, %v2018
    %v2020 = vrot.slane %v2011, %v2019
    %v2021 = vlaneseq
    %v2022 = vshrl.u32 %v2021, 7
    %v2023 = vsub.s32 2, %v2022
    %v2024 = vrot.slane %v2011, %v2023
    %v2060 = vunpack.c.l.b16 %v1978
    %v2061 = vunpack.c.h.b16 %v1978
    %v2062 = vunpack.c.l.b16 %v1979
    %v2063 = vunpack.c.l.b16 %v1980
    %v2064 = vunpack.c.h.b16 %v1980
    %v2065 = vunpack.c.l.b16 %v1981
    %v2066 = vunpack.c.l.b16 %v1982
    %v2067 = vunpack.c.h.b16 %v1982
    %v2068 = vunpack.c.l.b16 %v1983
    %v2069 = vunpack.c.l.b16 %v1984
    %v2070 = vunpack.c.h.b16 %v1984
    %v2071 = vunpack.c.l.b16 %v1985
    %v2072 = vunpack.c.l.b16 %v1986
    %v2073 = vunpack.c.h.b16 %v1986
    %v2074 = vunpack.c.l.b16 %v1987
    %v2075 = vunpack.c.l.b16 %v1988
    %v2076 = vunpack.c.h.b16 %v1988
    %v2077 = vunpack.c.l.b16 %v1989
    %v2078 = vunpack.c.l.b16 %v1990
    %v2079 = vunpack.c.h.b16 %v1990
    %v2080 = vunpack.c.l.b16 %v1991
    %v2081 = vunpack.c.l.b16 %v1992
    %v2082 = vunpack.c.h.b16 %v1992
    %v2083 = vunpack.c.l.b16 %v1993
    %v2084 = vunpack.c.l.b16 %v1994
    %v2085 = vunpack.c.h.b16 %v1994
    %v2086 = vunpack.c.l.b16 %v1995
    %v2087 = vunpack.c.l.b16 %v1996
    %v2088 = vunpack.c.h.b16 %v1996
    %v2089 = vunpack.c.l.b16 %v1997
    %v2090 = vunpack.c.l.b16 %v1998
    %v2091 = vunpack.c.h.b16 %v1998
    %v2092 = vunpack.c.l.b16 %v1999
    %v2093 = vunpack.c.l.b16 %v2000
    %v2094 = vunpack.c.h.b16 %v2000
    %v2095 = vunpack.c.l.b16 %v2001
    %v2096 = vunpack.c.l.b16 %v2002
    %v2097 = vunpack.c.h.b16 %v2002
    %v2098 = vunpack.c.l.b16 %v2003
    %v2099 = vunpack.c.l.b16 %v2004
    %v2100 = vunpack.c.h.b16 %v2004
    %v2101 = vunpack.c.l.b16 %v2005
    %v2102 = vunpack.c.l.b16 %v2006
    %v2103 = vunpack.c.h.b16 %v2006
    %v2104 = vunpack.c.l.b16 %v2007
    %v2105 = vunpack.c.l.b16 %v2008
    %v2106 = vunpack.c.h.b16 %v2008
    %v2107 = vunpack.c.l.b16 %v2009
    %v2108 = vpack.c.b16 %v2063, %v2060
    %v2109 = vpack.c.b16 %v2064, %v2061
    %v2110 = vpack.c.b16 %v2065, %v2062
    %v2111 = vpack.c.b16 %v2069, %v2066
    %v2112 = vpack.c.b16 %v2070, %v2067
    %v2113 = vpack.c.b16 %v2071, %v2068
    %v2114 = vpack.c.b16 %v2075, %v2072
    %v2115 = vpack.c.b16 %v2076, %v2073
    %v2116 = vpack.c.b16 %v2077, %v2074
    %v2117 = vpack.c.b16 %v2081, %v2078
    %v2118 = vpack.c.b16 %v2082, %v2079
    %v2119 = vpack.c.b16 %v2083, %v2080
    %v2120 = vpack.c.b16 %v2087, %v2084
    %v2121 = vpack.c.b16 %v2088, %v2085
    %v2122 = vpack.c.b16 %v2089, %v2086
    %v2123 = vpack.c.b16 %v2093, %v2090
    %v2124 = vpack.c.b16 %v2094, %v2091
    %v2125 = vpack.c.b16 %v2095, %v2092
    %v2126 = vpack.c.b16 %v2099, %v2096
    %v2127 = vpack.c.b16 %v2100, %v2097
    %v2128 = vpack.c.b16 %v2101, %v2098
    %v2129 = vpack.c.b16 %v2105, %v2102
    %v2130 = vpack.c.b16 %v2106, %v2103
    %v2131 = vpack.c.b16 %v2107, %v2104
    %2156 = vmatprep.subr.bf16.mxu0 %v2109
    %2157 = vmatpush1.bf16.msra.mxu0 %v2108
    %2158 = vmatprep.subr.bf16.mxu0 %v2112
    %2159 = vmatpush1.bf16.msra.mxu0 %v2111
    %2160 = vmatprep.subr.bf16.mxu0 %v2115
    %2161 = vmatpush1.bf16.msra.mxu0 %v2114
    %2162 = vmatprep.subr.bf16.mxu0 %v2118
    %2163 = vmatpush1.bf16.msra.mxu0 %v2117
    %2164 = vmatprep.subr.bf16.mxu0 %v2121
    %2165 = vmatpush1.bf16.msra.mxu0 %v2120
    %2166 = vmatprep.subr.bf16.mxu0 %v2124
    %2167 = vmatpush1.bf16.msra.mxu0 %v2123
    %2168 = vmatprep.subr.bf16.mxu0 %v2127
    %2169 = vmatpush1.bf16.msra.mxu0 %v2126
    %2170 = vmatprep.subr.bf16.mxu0 %v2130
    %2171 = vmatpush1.bf16.msra.mxu0 %v2129
    %2172 = vmatprep.subr.bf16.mxu0 0
    %2173 = vmatpush1.bf16.msra.mxu0 0
    %2174 = vmatprep.subr.bf16.mxu0 0
    %2175 = vmatpush1.bf16.msra.mxu0 0
    %2176 = vmatprep.subr.bf16.mxu0 0
    %2177 = vmatpush1.bf16.msra.mxu0 0
    %2178 = vmatprep.subr.bf16.mxu0 0
    %2179 = vmatpush1.bf16.msra.mxu0 0
    %2180 = vmatprep.subr.bf16.mxu0 0
    %2181 = vmatpush1.bf16.msra.mxu0 0
    %2182 = vmatprep.subr.bf16.mxu0 0
    %2183 = vmatpush1.bf16.msra.mxu0 0
    %2184 = vmatprep.subr.bf16.mxu0 0
    %2185 = vmatpush1.bf16.msra.mxu0 0
    %2186 = vmatprep.subr.bf16.mxu0 0
    %2187 = vmatpush1.bf16.msra.mxu0 0
    %2188 = vmatprep.mubr.bf16.mxu0 0
    %2189 = vmatmul.mubr.bf16.gmra.mrb[0].mxu0 %v1976
    %v2190 = vpop.f32.mrb[0].mxu0
    %v2191 = vadd.f32 %v2016, %v2190
    %v2192 = vpop.f32.mrb[0].mxu0
    %v2193 = vadd.f32 %v2020, %v2192
    %v2194 = vpop.f32.mrb[0].mxu0
    %v2195 = vadd.f32 %v2016, %v2194
    %v2196 = vpop.f32.mrb[0].mxu0
    %v2197 = vadd.f32 %v2020, %v2196
    %2198 = vdwg.mxu0
    %2199 = vmatprep.subr.bf16.mxu0 0
    %2200 = vmatpush1.bf16.msra.mxu0 %v2110
    %2201 = vmatprep.subr.bf16.mxu0 0
    %2202 = vmatpush1.bf16.msra.mxu0 %v2113
    %2203 = vmatprep.subr.bf16.mxu0 0
    %2204 = vmatpush1.bf16.msra.mxu0 %v2116
    %2205 = vmatprep.subr.bf16.mxu0 0
    %2206 = vmatpush1.bf16.msra.mxu0 %v2119
    %2207 = vmatprep.subr.bf16.mxu0 0
    %2208 = vmatpush1.bf16.msra.mxu0 %v2122
    %2209 = vmatprep.subr.bf16.mxu0 0
    %2210 = vmatpush1.bf16.msra.mxu0 %v2125
    %2211 = vmatprep.subr.bf16.mxu0 0
    %2212 = vmatpush1.bf16.msra.mxu0 %v2128
    %2213 = vmatprep.subr.bf16.mxu0 0
    %2214 = vmatpush1.bf16.msra.mxu0 %v2131
    %2215 = vmatprep.subr.bf16.mxu0 0
    %2216 = vmatpush1.bf16.msra.mxu0 0
    %2217 = vmatprep.subr.bf16.mxu0 0
    %2218 = vmatpush1.bf16.msra.mxu0 0
    %2219 = vmatprep.subr.bf16.mxu0 0
    %2220 = vmatpush1.bf16.msra.mxu0 0
    %2221 = vmatprep.subr.bf16.mxu0 0
    %2222 = vmatpush1.bf16.msra.mxu0 0
    %2223 = vmatprep.subr.bf16.mxu0 0
    %2224 = vmatpush1.bf16.msra.mxu0 0
    %2225 = vmatprep.subr.bf16.mxu0 0
    %2226 = vmatpush1.bf16.msra.mxu0 0
    %2227 = vmatprep.subr.bf16.mxu0 0
    %2228 = vmatpush1.bf16.msra.mxu0 0
    %2229 = vmatprep.subr.bf16.mxu0 0
    %2230 = vmatpush1.bf16.msra.mxu0 0
    %2231 = vmatprep.mubr.bf16.mxu0 0
    %2232 = vmatmul.mubr.bf16.gmra.mrb[0].mxu0 %v1976
    %v2233 = vpop.f32.mrb[0].mxu0
    %v2234 = vadd.f32 %v2024, %v2233
    %v2235 = vpop.f32.mrb[0].mxu0
    %v2236 = vpop.f32.mrb[0].mxu0
    %v2237 = vadd.f32 %v2024, %v2236
    %v2238 = vpop.f32.mrb[0].mxu0
    %2239 = vdwg.mxu0
    %v2240 = vmul.f32 %v2191, 0.35355338
    %v2241 = vmul.f32 %v2195, 0.35355338
    %v2242 = vpack.c.bf16 %v2241, %v2240
    %v2243 = vpack.c.bf16 %v2197, %v2193
    %v2244 = vpack.c.bf16 %v2237, %v2234
    %v2246 = vunpack.c.l.b16 %v2242
    %v2247 = vunpack.c.h.b16 %v2242
    %v2248 = vpack.c.b16 %v2246, %v2246
    %v2249 = vpack.c.b16 %v2247, %v2247
    %v2251 = vunpack.c.l.b16 %v2243
    %v2252 = vunpack.c.h.b16 %v2243
    %v2253 = vpack.c.b16 %v2251, %v2251
    %v2254 = vpack.c.b16 %v2252, %v2252
    %v2256 = vunpack.c.l.b16 %v2244
    %v2257 = vunpack.c.h.b16 %v2244
    %v2258 = vpack.c.b16 %v2256, %v2256
    %v2259 = vpack.c.b16 %v2257, %v2257
    %v2261 = vsel %vm516, %v2248, 0
    %v2264 = vsel %vm516, %v2253, 0
    %2266 = vmatprep.subr.bf16.mxu0 0
    %2267 = vmatpush1.bf16.xpose.msra.mxu0 %v2264
    %2268 = vmatprep.subr.bf16.mxu0 0
    %2269 = vmatpush1.bf16.xpose.msra.mxu0 0
    %2270 = vmatprep.subr.bf16.mxu0 0
    %2271 = vmatpush1.bf16.xpose.msra.mxu0 0
    %2272 = vmatprep.subr.bf16.mxu0 0
    %2273 = vmatpush1.bf16.xpose.msra.mxu0 0
    %2274 = vmatprep.subr.bf16.mxu0 0
    %2275 = vmatpush1.bf16.xpose.msra.mxu0 0
    %2276 = vmatprep.subr.bf16.mxu0 0
    %2277 = vmatpush1.bf16.xpose.msra.mxu0 0
    %2278 = vmatprep.subr.bf16.mxu0 0
    %2279 = vmatpush1.bf16.xpose.msra.mxu0 0
    %2280 = vmatprep.subr.bf16.mxu0 0
    %2281 = vmatpush1.bf16.xpose.msra.mxu0 0
    %2282 = vmatprep.subr.bf16.mxu0 0
    %2283 = vmatpush1.bf16.xpose.msra.mxu0 0
    %2284 = vmatprep.subr.bf16.mxu0 0
    %2285 = vmatpush1.bf16.xpose.msra.mxu0 0
    %2286 = vmatprep.subr.bf16.mxu0 0
    %2287 = vmatpush1.bf16.xpose.msra.mxu0 0
    %2288 = vmatprep.subr.bf16.mxu0 0
    %2289 = vmatpush1.bf16.xpose.msra.mxu0 0
    %2290 = vmatprep.subr.bf16.mxu0 0
    %2291 = vmatpush1.bf16.xpose.msra.mxu0 0
    %2292 = vmatprep.subr.bf16.mxu0 0
    %2293 = vmatpush1.bf16.xpose.msra.mxu0 0
    %2294 = vmatprep.subr.bf16.mxu0 0
    %2295 = vmatpush1.bf16.xpose.msra.mxu0 0
    %2296 = vmatprep.subr.bf16.mxu0 0
    %2297 = vmatpush1.bf16.xpose.msra.mxu0 0
    %2298 = vmatprep.mubr.bf16.mxu0 0
    %2299 = vmatmul.mubr.bf16.gmra.mrb[0].mxu0 %v2261
    %v2300 = vpop.f32.mrb[0].mxu0
    %v2301 = vadd.f32 %v509, %v2300
    %v2302 = vpop.f32.mrb[0].mxu0
    %v2303 = vpop.f32.mrb[0].mxu0
    %v2304 = vpop.f32.mrb[0].mxu0
    %2305 = vdwg.mxu0
    %v2307 = vsel %vm516, %v2249, 0
    %v2310 = vsel %vm516, %v2254, 0
    %2312 = vmatprep.subr.bf16.mxu0 0
    %2313 = vmatpush1.bf16.xpose.msra.mxu0 %v2310
    %2314 = vmatprep.subr.bf16.mxu0 0
    %2315 = vmatpush1.bf16.xpose.msra.mxu0 0
    %2316 = vmatprep.subr.bf16.mxu0 0
    %2317 = vmatpush1.bf16.xpose.msra.mxu0 0
    %2318 = vmatprep.subr.bf16.mxu0 0
    %2319 = vmatpush1.bf16.xpose.msra.mxu0 0
    %2320 = vmatprep.subr.bf16.mxu0 0
    %2321 = vmatpush1.bf16.xpose.msra.mxu0 0
    %2322 = vmatprep.subr.bf16.mxu0 0
    %2323 = vmatpush1.bf16.xpose.msra.mxu0 0
    %2324 = vmatprep.subr.bf16.mxu0 0
    %2325 = vmatpush1.bf16.xpose.msra.mxu0 0
    %2326 = vmatprep.subr.bf16.mxu0 0
    %2327 = vmatpush1.bf16.xpose.msra.mxu0 0
    %2328 = vmatprep.subr.bf16.mxu0 0
    %2329 = vmatpush1.bf16.xpose.msra.mxu0 0
    %2330 = vmatprep.subr.bf16.mxu0 0
    %2331 = vmatpush1.bf16.xpose.msra.mxu0 0
    %2332 = vmatprep.subr.bf16.mxu0 0
    %2333 = vmatpush1.bf16.xpose.msra.mxu0 0
    %2334 = vmatprep.subr.bf16.mxu0 0
    %2335 = vmatpush1.bf16.xpose.msra.mxu0 0
    %2336 = vmatprep.subr.bf16.mxu0 0
    %2337 = vmatpush1.bf16.xpose.msra.mxu0 0
    %2338 = vmatprep.subr.bf16.mxu0 0
    %2339 = vmatpush1.bf16.xpose.msra.mxu0 0
    %2340 = vmatprep.subr.bf16.mxu0 0
    %2341 = vmatpush1.bf16.xpose.msra.mxu0 0
    %2342 = vmatprep.subr.bf16.mxu0 0
    %2343 = vmatpush1.bf16.xpose.msra.mxu0 0
    %2344 = vmatprep.mubr.bf16.mxu0 0
    %2345 = vmatmul.mubr.bf16.gmra.mrb[0].mxu0 %v2307
    %v2346 = vpop.f32.mrb[0].mxu0
    %v2347 = vadd.f32 %v513, %v2346
    %v2348 = vpop.f32.mrb[0].mxu0
    %v2349 = vpop.f32.mrb[0].mxu0
    %v2350 = vpop.f32.mrb[0].mxu0
    %2351 = vdwg.mxu0
    %v2352 = vsel %vm609, %v2301, -inf
    %2353 = vmax.xlane.f32.xlu0 %v2352
    %v2354 = vpop.xlane.xlu0 %2353
    %v2355 = vsel %vm609, %v2347, -inf
    %2356 = vmax.xlane.f32.xlu0 %v2355
    %v2357 = vpop.xlane.xlu0 %2356
    %v2358 = vsub.f32 %v2301, %v2354
    %v2359 = vsub.f32 %v2347, %v2357
    %v2360 = vmul.f32 %v2358, 1.442695
    %v2361 = vpow.pop %v2360
    %v2362 = vmul.f32 %v2359, 1.442695
    %v2363 = vpow.pop %v2362
    %v2364 = vsel %vm609, %v2361, 0.0
    %2365 = vadd.xlane.f32.xlu0 %v2364
    %v2366 = vpop.xlane.xlu0 %2365
    %v2367 = vsel %vm609, %v2363, 0.0
    %2368 = vadd.xlane.f32.xlu0 %v2367
    %v2369 = vpop.xlane.xlu0 %2368
    %v2370 = vrcp.pop %v2366
    %v2371 = vrcp.pop %v2369
    %v2372 = vmul.f32 %v2361, %v2370
    %v2373 = vmul.f32 %v2363, %v2371
    %v2374 = vpack.c.bf16 %v2372, %v2372
    %v2375 = vpack.c.bf16 %v2373, %v2373
    %v2377 = vsel %vm609, %v2374, 0
    %v2380 = vsel %vm637, %v2258, 0
    %2382 = vmatprep.subr.bf16.mxu0 0
    %2383 = vmatpush1.bf16.msra.mxu0 %v2380
    %2384 = vmatprep.subr.bf16.mxu0 0
    %2385 = vmatpush1.bf16.msra.mxu0 0
    %2386 = vmatprep.subr.bf16.mxu0 0
    %2387 = vmatpush1.bf16.msra.mxu0 0
    %2388 = vmatprep.subr.bf16.mxu0 0
    %2389 = vmatpush1.bf16.msra.mxu0 0
    %2390 = vmatprep.subr.bf16.mxu0 0
    %2391 = vmatpush1.bf16.msra.mxu0 0
    %2392 = vmatprep.subr.bf16.mxu0 0
    %2393 = vmatpush1.bf16.msra.mxu0 0
    %2394 = vmatprep.subr.bf16.mxu0 0
    %2395 = vmatpush1.bf16.msra.mxu0 0
    %2396 = vmatprep.subr.bf16.mxu0 0
    %2397 = vmatpush1.bf16.msra.mxu0 0
    %2398 = vmatprep.subr.bf16.mxu0 0
    %2399 = vmatpush1.bf16.msra.mxu0 0
    %2400 = vmatprep.subr.bf16.mxu0 0
    %2401 = vmatpush1.bf16.msra.mxu0 0
    %2402 = vmatprep.subr.bf16.mxu0 0
    %2403 = vmatpush1.bf16.msra.mxu0 0
    %2404 = vmatprep.subr.bf16.mxu0 0
    %2405 = vmatpush1.bf16.msra.mxu0 0
    %2406 = vmatprep.subr.bf16.mxu0 0
    %2407 = vmatpush1.bf16.msra.mxu0 0
    %2408 = vmatprep.subr.bf16.mxu0 0
    %2409 = vmatpush1.bf16.msra.mxu0 0
    %2410 = vmatprep.subr.bf16.mxu0 0
    %2411 = vmatpush1.bf16.msra.mxu0 0
    %2412 = vmatprep.subr.bf16.mxu0 0
    %2413 = vmatpush1.bf16.msra.mxu0 0
    %2414 = vmatprep.mubr.bf16.mxu0 0
    %2415 = vmatmul.mubr.bf16.gmra.mrb[0].mxu0 %v2377
    %v2416 = vpop.f32.mrb[0].mxu0
    %v2417 = vadd.f32 0.0, %v2416
    %v2418 = vpop.f32.mrb[0].mxu0
    %v2419 = vpop.f32.mrb[0].mxu0
    %v2420 = vpop.f32.mrb[0].mxu0
    %2421 = vdwg.mxu0
    %v2423 = vsel %vm609, %v2375, 0
    %v2426 = vsel %vm637, %v2259, 0
    %2428 = vmatprep.subr.bf16.mxu0 0
    %2429 = vmatpush1.bf16.msra.mxu0 %v2426
    %2430 = vmatprep.subr.bf16.mxu0 0
    %2431 = vmatpush1.bf16.msra.mxu0 0
    %2432 = vmatprep.subr.bf16.mxu0 0
    %2433 = vmatpush1.bf16.msra.mxu0 0
    %2434 = vmatprep.subr.bf16.mxu0 0
    %2435 = vmatpush1.bf16.msra.mxu0 0
    %2436 = vmatprep.subr.bf16.mxu0 0
    %2437 = vmatpush1.bf16.msra.mxu0 0
    %2438 = vmatprep.subr.bf16.mxu0 0
    %2439 = vmatpush1.bf16.msra.mxu0 0
    %2440 = vmatprep.subr.bf16.mxu0 0
    %2441 = vmatpush1.bf16.msra.mxu0 0
    %2442 = vmatprep.subr.bf16.mxu0 0
    %2443 = vmatpush1.bf16.msra.mxu0 0
    %2444 = vmatprep.subr.bf16.mxu0 0
    %2445 = vmatpush1.bf16.msra.mxu0 0
    %2446 = vmatprep.subr.bf16.mxu0 0
    %2447 = vmatpush1.bf16.msra.mxu0 0
    %2448 = vmatprep.subr.bf16.mxu0 0
    %2449 = vmatpush1.bf16.msra.mxu0 0
    %2450 = vmatprep.subr.bf16.mxu0 0
    %2451 = vmatpush1.bf16.msra.mxu0 0
    %2452 = vmatprep.subr.bf16.mxu0 0
    %2453 = vmatpush1.bf16.msra.mxu0 0
    %2454 = vmatprep.subr.bf16.mxu0 0
    %2455 = vmatpush1.bf16.msra.mxu0 0
    %2456 = vmatprep.subr.bf16.mxu0 0
    %2457 = vmatpush1.bf16.msra.mxu0 0
    %2458 = vmatprep.subr.bf16.mxu0 0
    %2459 = vmatpush1.bf16.msra.mxu0 0
    %2460 = vmatprep.mubr.bf16.mxu0 0
    %2461 = vmatmul.mubr.bf16.gmra.mrb[0].mxu0 %v2423
    %v2462 = vpop.f32.mrb[0].mxu0
    %v2463 = vadd.f32 0.0, %v2462
    %v2464 = vpop.f32.mrb[0].mxu0
    %v2465 = vpop.f32.mrb[0].mxu0
    %v2466 = vpop.f32.mrb[0].mxu0
    %2467 = vdwg.mxu0
    %v2468 = vpack.c.bf16 %v2463, %v2417
    %s2469 = scalar_lea.vmem [#allocation10], 64
    %v2470 = vld [vmem:[%s2469] sm:$0xf]
    %v2471 = vld [vmem:[%s2469 + $0x4] sm:$0xf]
    %v2472 = vld [vmem:[%s2469 + $0x8] sm:$0xf]
    %v2473 = vld [vmem:[%s2469 + $0xc] sm:$0xf]
    %2474 = vrot.lane.b32.xlu0 %v2248, 96
    %v2475 = vpop.permute.xlu0 %2474
    %2476 = vrot.lane.b32.xlu0 %v2253, 96
    %v2477 = vpop.permute.xlu0 %2476
    %v2479 = vsel %vm516, %v2475, 0
    %v2482 = vsel %vm516, %v2477, 0
    %2484 = vmatprep.subr.bf16.mxu0 0
    %2485 = vmatpush1.bf16.xpose.msra.mxu0 %v2482
    %2486 = vmatprep.subr.bf16.mxu0 0
    %2487 = vmatpush1.bf16.xpose.msra.mxu0 0
    %2488 = vmatprep.subr.bf16.mxu0 0
    %2489 = vmatpush1.bf16.xpose.msra.mxu0 0
    %2490 = vmatprep.subr.bf16.mxu0 0
    %2491 = vmatpush1.bf16.xpose.msra.mxu0 0
    %2492 = vmatprep.subr.bf16.mxu0 0
    %2493 = vmatpush1.bf16.xpose.msra.mxu0 0
    %2494 = vmatprep.subr.bf16.mxu0 0
    %2495 = vmatpush1.bf16.xpose.msra.mxu0 0
    %2496 = vmatprep.subr.bf16.mxu0 0
    %2497 = vmatpush1.bf16.xpose.msra.mxu0 0
    %2498 = vmatprep.subr.bf16.mxu0 0
    %2499 = vmatpush1.bf16.xpose.msra.mxu0 0
    %2500 = vmatprep.subr.bf16.mxu0 0
    %2501 = vmatpush1.bf16.xpose.msra.mxu0 0
    %2502 = vmatprep.subr.bf16.mxu0 0
    %2503 = vmatpush1.bf16.xpose.msra.mxu0 0
    %2504 = vmatprep.subr.bf16.mxu0 0
    %2505 = vmatpush1.bf16.xpose.msra.mxu0 0
    %2506 = vmatprep.subr.bf16.mxu0 0
    %2507 = vmatpush1.bf16.xpose.msra.mxu0 0
    %2508 = vmatprep.subr.bf16.mxu0 0
    %2509 = vmatpush1.bf16.xpose.msra.mxu0 0
    %2510 = vmatprep.subr.bf16.mxu0 0
    %2511 = vmatpush1.bf16.xpose.msra.mxu0 0
    %2512 = vmatprep.subr.bf16.mxu0 0
    %2513 = vmatpush1.bf16.xpose.msra.mxu0 0
    %2514 = vmatprep.subr.bf16.mxu0 0
    %2515 = vmatpush1.bf16.xpose.msra.mxu0 0
    %2516 = vmatprep.mubr.bf16.mxu0 0
    %2517 = vmatmul.mubr.bf16.gmra.mrb[0].mxu0 %v2479
    %v2518 = vpop.f32.mrb[0].mxu0
    %v2519 = vadd.f32 %v509, %v2518
    %v2520 = vpop.f32.mrb[0].mxu0
    %v2521 = vpop.f32.mrb[0].mxu0
    %v2522 = vpop.f32.mrb[0].mxu0
    %2523 = vdwg.mxu0
    %2524 = vrot.lane.b32.xlu0 %v2249, 96
    %v2525 = vpop.permute.xlu0 %2524
    %2526 = vrot.lane.b32.xlu0 %v2254, 96
    %v2527 = vpop.permute.xlu0 %2526
    %v2529 = vsel %vm516, %v2525, 0
    %v2532 = vsel %vm516, %v2527, 0
    %2534 = vmatprep.subr.bf16.mxu0 0
    %2535 = vmatpush1.bf16.xpose.msra.mxu0 %v2532
    %2536 = vmatprep.subr.bf16.mxu0 0
    %2537 = vmatpush1.bf16.xpose.msra.mxu0 0
    %2538 = vmatprep.subr.bf16.mxu0 0
    %2539 = vmatpush1.bf16.xpose.msra.mxu0 0
    %2540 = vmatprep.subr.bf16.mxu0 0
    %2541 = vmatpush1.bf16.xpose.msra.mxu0 0
    %2542 = vmatprep.subr.bf16.mxu0 0
    %2543 = vmatpush1.bf16.xpose.msra.mxu0 0
    %2544 = vmatprep.subr.bf16.mxu0 0
    %2545 = vmatpush1.bf16.xpose.msra.mxu0 0
    %2546 = vmatprep.subr.bf16.mxu0 0
    %2547 = vmatpush1.bf16.xpose.msra.mxu0 0
    %2548 = vmatprep.subr.bf16.mxu0 0
    %2549 = vmatpush1.bf16.xpose.msra.mxu0 0
    %2550 = vmatprep.subr.bf16.mxu0 0
    %2551 = vmatpush1.bf16.xpose.msra.mxu0 0
    %2552 = vmatprep.subr.bf16.mxu0 0
    %2553 = vmatpush1.bf16.xpose.msra.mxu0 0
    %2554 = vmatprep.subr.bf16.mxu0 0
    %2555 = vmatpush1.bf16.xpose.msra.mxu0 0
    %2556 = vmatprep.subr.bf16.mxu0 0
    %2557 = vmatpush1.bf16.xpose.msra.mxu0 0
    %2558 = vmatprep.subr.bf16.mxu0 0
    %2559 = vmatpush1.bf16.xpose.msra.mxu0 0
    %2560 = vmatprep.subr.bf16.mxu0 0
    %2561 = vmatpush1.bf16.xpose.msra.mxu0 0
    %2562 = vmatprep.subr.bf16.mxu0 0
    %2563 = vmatpush1.bf16.xpose.msra.mxu0 0
    %2564 = vmatprep.subr.bf16.mxu0 0
    %2565 = vmatpush1.bf16.xpose.msra.mxu0 0
    %2566 = vmatprep.mubr.bf16.mxu0 0
    %2567 = vmatmul.mubr.bf16.gmra.mrb[0].mxu0 %v2529
    %v2568 = vpop.f32.mrb[0].mxu0
    %v2569 = vadd.f32 %v513, %v2568
    %v2570 = vpop.f32.mrb[0].mxu0
    %v2571 = vpop.f32.mrb[0].mxu0
    %v2572 = vpop.f32.mrb[0].mxu0
    %2573 = vdwg.mxu0
    %v2574 = vsel %vm609, %v2519, -inf
    %2575 = vmax.xlane.f32.xlu0 %v2574
    %v2576 = vpop.xlane.xlu0 %2575
    %v2577 = vsel %vm609, %v2569, -inf
    %2578 = vmax.xlane.f32.xlu0 %v2577
    %v2579 = vpop.xlane.xlu0 %2578
    %v2580 = vsub.f32 %v2519, %v2576
    %v2581 = vsub.f32 %v2569, %v2579
    %v2582 = vmul.f32 %v2580, 1.442695
    %v2583 = vpow.pop %v2582
    %v2584 = vmul.f32 %v2581, 1.442695
    %v2585 = vpow.pop %v2584
    %v2586 = vsel %vm609, %v2583, 0.0
    %2587 = vadd.xlane.f32.xlu0 %v2586
    %v2588 = vpop.xlane.xlu0 %2587
    %v2589 = vsel %vm609, %v2585, 0.0
    %2590 = vadd.xlane.f32.xlu0 %v2589
    %v2591 = vpop.xlane.xlu0 %2590
    %v2592 = vrcp.pop %v2588
    %v2593 = vrcp.pop %v2591
    %v2594 = vmul.f32 %v2583, %v2592
    %v2595 = vmul.f32 %v2585, %v2593
    %v2596 = vpack.c.bf16 %v2594, %v2594
    %v2597 = vpack.c.bf16 %v2595, %v2595
    %2598 = vrot.lane.b32.xlu0 %v2258, 96
    %v2599 = vpop.permute.xlu0 %2598
    %v2601 = vsel %vm609, %v2596, 0
    %v2604 = vsel %vm637, %v2599, 0
    %2606 = vmatprep.subr.bf16.mxu0 0
    %2607 = vmatpush1.bf16.msra.mxu0 %v2604
    %2608 = vmatprep.subr.bf16.mxu0 0
    %2609 = vmatpush1.bf16.msra.mxu0 0
    %2610 = vmatprep.subr.bf16.mxu0 0
    %2611 = vmatpush1.bf16.msra.mxu0 0
    %2612 = vmatprep.subr.bf16.mxu0 0
    %2613 = vmatpush1.bf16.msra.mxu0 0
    %2614 = vmatprep.subr.bf16.mxu0 0
    %2615 = vmatpush1.bf16.msra.mxu0 0
    %2616 = vmatprep.subr.bf16.mxu0 0
    %2617 = vmatpush1.bf16.msra.mxu0 0
    %2618 = vmatprep.subr.bf16.mxu0 0
    %2619 = vmatpush1.bf16.msra.mxu0 0
    %2620 = vmatprep.subr.bf16.mxu0 0
    %2621 = vmatpush1.bf16.msra.mxu0 0
    %2622 = vmatprep.subr.bf16.mxu0 0
    %2623 = vmatpush1.bf16.msra.mxu0 0
    %2624 = vmatprep.subr.bf16.mxu0 0
    %2625 = vmatpush1.bf16.msra.mxu0 0
    %2626 = vmatprep.subr.bf16.mxu0 0
    %2627 = vmatpush1.bf16.msra.mxu0 0
    %2628 = vmatprep.subr.bf16.mxu0 0
    %2629 = vmatpush1.bf16.msra.mxu0 0
    %2630 = vmatprep.subr.bf16.mxu0 0
    %2631 = vmatpush1.bf16.msra.mxu0 0
    %2632 = vmatprep.subr.bf16.mxu0 0
    %2633 = vmatpush1.bf16.msra.mxu0 0
    %2634 = vmatprep.subr.bf16.mxu0 0
    %2635 = vmatpush1.bf16.msra.mxu0 0
    %2636 = vmatprep.subr.bf16.mxu0 0
    %2637 = vmatpush1.bf16.msra.mxu0 0
    %2638 = vmatprep.mubr.bf16.mxu0 0
    %2639 = vmatmul.mubr.bf16.gmra.mrb[0].mxu0 %v2601
    %v2640 = vpop.f32.mrb[0].mxu0
    %v2641 = vadd.f32 0.0, %v2640
    %v2642 = vpop.f32.mrb[0].mxu0
    %v2643 = vpop.f32.mrb[0].mxu0
    %v2644 = vpop.f32.mrb[0].mxu0
    %2645 = vdwg.mxu0
    %2646 = vrot.lane.b32.xlu0 %v2259, 96
    %v2647 = vpop.permute.xlu0 %2646
    %v2649 = vsel %vm609, %v2597, 0
    %v2652 = vsel %vm637, %v2647, 0
    %2654 = vmatprep.subr.bf16.mxu0 0
    %2655 = vmatpush1.bf16.msra.mxu0 %v2652
    %2656 = vmatprep.subr.bf16.mxu0 0
    %2657 = vmatpush1.bf16.msra.mxu0 0
    %2658 = vmatprep.subr.bf16.mxu0 0
    %2659 = vmatpush1.bf16.msra.mxu0 0
    %2660 = vmatprep.subr.bf16.mxu0 0
    %2661 = vmatpush1.bf16.msra.mxu0 0
    %2662 = vmatprep.subr.bf16.mxu0 0
    %2663 = vmatpush1.bf16.msra.mxu0 0
    %2664 = vmatprep.subr.bf16.mxu0 0
    %2665 = vmatpush1.bf16.msra.mxu0 0
    %2666 = vmatprep.subr.bf16.mxu0 0
    %2667 = vmatpush1.bf16.msra.mxu0 0
    %2668 = vmatprep.subr.bf16.mxu0 0
    %2669 = vmatpush1.bf16.msra.mxu0 0
    %2670 = vmatprep.subr.bf16.mxu0 0
    %2671 = vmatpush1.bf16.msra.mxu0 0
    %2672 = vmatprep.subr.bf16.mxu0 0
    %2673 = vmatpush1.bf16.msra.mxu0 0
    %2674 = vmatprep.subr.bf16.mxu0 0
    %2675 = vmatpush1.bf16.msra.mxu0 0
    %2676 = vmatprep.subr.bf16.mxu0 0
    %2677 = vmatpush1.bf16.msra.mxu0 0
    %2678 = vmatprep.subr.bf16.mxu0 0
    %2679 = vmatpush1.bf16.msra.mxu0 0
    %2680 = vmatprep.subr.bf16.mxu0 0
    %2681 = vmatpush1.bf16.msra.mxu0 0
    %2682 = vmatprep.subr.bf16.mxu0 0
    %2683 = vmatpush1.bf16.msra.mxu0 0
    %2684 = vmatprep.subr.bf16.mxu0 0
    %2685 = vmatpush1.bf16.msra.mxu0 0
    %2686 = vmatprep.mubr.bf16.mxu0 0
    %2687 = vmatmul.mubr.bf16.gmra.mrb[0].mxu0 %v2649
    %v2688 = vpop.f32.mrb[0].mxu0
    %v2689 = vadd.f32 0.0, %v2688
    %v2690 = vpop.f32.mrb[0].mxu0
    %v2691 = vpop.f32.mrb[0].mxu0
    %v2692 = vpop.f32.mrb[0].mxu0
    %2693 = vdwg.mxu0
    %v2694 = vpack.c.bf16 %v2689, %v2641
    %v2695 = vld [vmem:[%s2469 + $0x10] sm:$0xf]
    %v2696 = vld [vmem:[%s2469 + $0x14] sm:$0xf]
    %v2697 = vld [vmem:[%s2469 + $0x18] sm:$0xf]
    %v2698 = vld [vmem:[%s2469 + $0x1c] sm:$0xf]
    %v2703 = vunpack.c.l.b16 %v2695
    %v2704 = vunpack.c.l.b16 %v2696
    %v2705 = vunpack.c.l.b16 %v2697
    %v2706 = vunpack.c.l.b16 %v2698
    %v2707 = vpack.c.b16 %v2704, %v2703
    %v2708 = vpack.c.b16 %v2706, %v2705
    %v2712 = vsel %vm516, %v2694, 0
    %2714 = vmatprep.subr.bf16.mxu0 0
    %2715 = vmatpush1.bf16.msra.mxu0 %v2707
    %2716 = vmatprep.subr.bf16.mxu0 0
    %2717 = vmatpush1.bf16.msra.mxu0 %v2708
    %2718 = vmatprep.subr.bf16.mxu0 0
    %2719 = vmatpush1.bf16.msra.mxu0 0
    %2720 = vmatprep.subr.bf16.mxu0 0
    %2721 = vmatpush1.bf16.msra.mxu0 0
    %2722 = vmatprep.subr.bf16.mxu0 0
    %2723 = vmatpush1.bf16.msra.mxu0 0
    %2724 = vmatprep.subr.bf16.mxu0 0
    %2725 = vmatpush1.bf16.msra.mxu0 0
    %2726 = vmatprep.subr.bf16.mxu0 0
    %2727 = vmatpush1.bf16.msra.mxu0 0
    %2728 = vmatprep.subr.bf16.mxu0 0
    %2729 = vmatpush1.bf16.msra.mxu0 0
    %2730 = vmatprep.subr.bf16.mxu0 0
    %2731 = vmatpush1.bf16.msra.mxu0 0
    %2732 = vmatprep.subr.bf16.mxu0 0
    %2733 = vmatpush1.bf16.msra.mxu0 0
    %2734 = vmatprep.subr.bf16.mxu0 0
    %2735 = vmatpush1.bf16.msra.mxu0 0
    %2736 = vmatprep.subr.bf16.mxu0 0
    %2737 = vmatpush1.bf16.msra.mxu0 0
    %2738 = vmatprep.subr.bf16.mxu0 0
    %2739 = vmatpush1.bf16.msra.mxu0 0
    %2740 = vmatprep.subr.bf16.mxu0 0
    %2741 = vmatpush1.bf16.msra.mxu0 0
    %2742 = vmatprep.subr.bf16.mxu0 0
    %2743 = vmatpush1.bf16.msra.mxu0 0
    %2744 = vmatprep.subr.bf16.mxu0 0
    %2745 = vmatpush1.bf16.msra.mxu0 0
    %2746 = vmatprep.mubr.bf16.mxu0 0
    %2747 = vmatmul.mubr.bf16.gmra.mrb[0].mxu0 %v2712
    %v2748 = vpop.f32.mrb[0].mxu0
    %v2749 = vadd.f32 0.0, %v2748
    %v2750 = vpop.f32.mrb[0].mxu0
    %v2751 = vpop.f32.mrb[0].mxu0
    %v2752 = vadd.f32 0.0, %v2751
    %v2753 = vpop.f32.mrb[0].mxu0
    %2754 = vdwg.mxu0
    %v2759 = vunpack.c.l.b16 %v2470
    %v2760 = vunpack.c.l.b16 %v2471
    %v2761 = vunpack.c.l.b16 %v2472
    %v2762 = vunpack.c.l.b16 %v2473
    %v2763 = vpack.c.b16 %v2760, %v2759
    %v2764 = vpack.c.b16 %v2762, %v2761
    %v2768 = vsel %vm516, %v2468, 0
    %2770 = vmatprep.subr.bf16.mxu0 0
    %2771 = vmatpush1.bf16.msra.mxu0 %v2763
    %2772 = vmatprep.subr.bf16.mxu0 0
    %2773 = vmatpush1.bf16.msra.mxu0 %v2764
    %2774 = vmatprep.subr.bf16.mxu0 0
    %2775 = vmatpush1.bf16.msra.mxu0 0
    %2776 = vmatprep.subr.bf16.mxu0 0
    %2777 = vmatpush1.bf16.msra.mxu0 0
    %2778 = vmatprep.subr.bf16.mxu0 0
    %2779 = vmatpush1.bf16.msra.mxu0 0
    %2780 = vmatprep.subr.bf16.mxu0 0
    %2781 = vmatpush1.bf16.msra.mxu0 0
    %2782 = vmatprep.subr.bf16.mxu0 0
    %2783 = vmatpush1.bf16.msra.mxu0 0
    %2784 = vmatprep.subr.bf16.mxu0 0
    %2785 = vmatpush1.bf16.msra.mxu0 0
    %2786 = vmatprep.subr.bf16.mxu0 0
    %2787 = vmatpush1.bf16.msra.mxu0 0
    %2788 = vmatprep.subr.bf16.mxu0 0
    %2789 = vmatpush1.bf16.msra.mxu0 0
    %2790 = vmatprep.subr.bf16.mxu0 0
    %2791 = vmatpush1.bf16.msra.mxu0 0
    %2792 = vmatprep.subr.bf16.mxu0 0
    %2793 = vmatpush1.bf16.msra.mxu0 0
    %2794 = vmatprep.subr.bf16.mxu0 0
    %2795 = vmatpush1.bf16.msra.mxu0 0
    %2796 = vmatprep.subr.bf16.mxu0 0
    %2797 = vmatpush1.bf16.msra.mxu0 0
    %2798 = vmatprep.subr.bf16.mxu0 0
    %2799 = vmatpush1.bf16.msra.mxu0 0
    %2800 = vmatprep.subr.bf16.mxu0 0
    %2801 = vmatpush1.bf16.msra.mxu0 0
    %2802 = vmatprep.mubr.bf16.mxu0 0
    %2803 = vmatmul.mubr.bf16.gmra.mrb[0].mxu0 %v2768
    %v2804 = vpop.f32.mrb[0].mxu0
    %v2805 = vadd.f32 %v2749, %v2804
    %v2806 = vpop.f32.mrb[0].mxu0
    %v2807 = vpop.f32.mrb[0].mxu0
    %v2808 = vadd.f32 %v2752, %v2807
    %v2809 = vpop.f32.mrb[0].mxu0
    %2810 = vdwg.mxu0
    %2811 = vrot.lane.b32.xlu0 %v2248, 64
    %v2812 = vpop.permute.xlu0 %2811
    %2813 = vrot.lane.b32.xlu0 %v2253, 64
    %v2814 = vpop.permute.xlu0 %2813
    %v2816 = vsel %vm516, %v2812, 0
    %v2819 = vsel %vm516, %v2814, 0
    %2821 = vmatprep.subr.bf16.mxu0 0
    %2822 = vmatpush1.bf16.xpose.msra.mxu0 %v2819
    %2823 = vmatprep.subr.bf16.mxu0 0
    %2824 = vmatpush1.bf16.xpose.msra.mxu0 0
    %2825 = vmatprep.subr.bf16.mxu0 0
    %2826 = vmatpush1.bf16.xpose.msra.mxu0 0
    %2827 = vmatprep.subr.bf16.mxu0 0
    %2828 = vmatpush1.bf16.xpose.msra.mxu0 0
    %2829 = vmatprep.subr.bf16.mxu0 0
    %2830 = vmatpush1.bf16.xpose.msra.mxu0 0
    %2831 = vmatprep.subr.bf16.mxu0 0
    %2832 = vmatpush1.bf16.xpose.msra.mxu0 0
    %2833 = vmatprep.subr.bf16.mxu0 0
    %2834 = vmatpush1.bf16.xpose.msra.mxu0 0
    %2835 = vmatprep.subr.bf16.mxu0 0
    %2836 = vmatpush1.bf16.xpose.msra.mxu0 0
    %2837 = vmatprep.subr.bf16.mxu0 0
    %2838 = vmatpush1.bf16.xpose.msra.mxu0 0
    %2839 = vmatprep.subr.bf16.mxu0 0
    %2840 = vmatpush1.bf16.xpose.msra.mxu0 0
    %2841 = vmatprep.subr.bf16.mxu0 0
    %2842 = vmatpush1.bf16.xpose.msra.mxu0 0
    %2843 = vmatprep.subr.bf16.mxu0 0
    %2844 = vmatpush1.bf16.xpose.msra.mxu0 0
    %2845 = vmatprep.subr.bf16.mxu0 0
    %2846 = vmatpush1.bf16.xpose.msra.mxu0 0
    %2847 = vmatprep.subr.bf16.mxu0 0
    %2848 = vmatpush1.bf16.xpose.msra.mxu0 0
    %2849 = vmatprep.subr.bf16.mxu0 0
    %2850 = vmatpush1.bf16.xpose.msra.mxu0 0
    %2851 = vmatprep.subr.bf16.mxu0 0
    %2852 = vmatpush1.bf16.xpose.msra.mxu0 0
    %2853 = vmatprep.mubr.bf16.mxu0 0
    %2854 = vmatmul.mubr.bf16.gmra.mrb[0].mxu0 %v2816
    %v2855 = vpop.f32.mrb[0].mxu0
    %v2856 = vadd.f32 %v509, %v2855
    %v2857 = vpop.f32.mrb[0].mxu0
    %v2858 = vpop.f32.mrb[0].mxu0
    %v2859 = vpop.f32.mrb[0].mxu0
    %2860 = vdwg.mxu0
    %2861 = vrot.lane.b32.xlu0 %v2249, 64
    %v2862 = vpop.permute.xlu0 %2861
    %2863 = vrot.lane.b32.xlu0 %v2254, 64
    %v2864 = vpop.permute.xlu0 %2863
    %v2866 = vsel %vm516, %v2862, 0
    %v2869 = vsel %vm516, %v2864, 0
    %2871 = vmatprep.subr.bf16.mxu0 0
    %2872 = vmatpush1.bf16.xpose.msra.mxu0 %v2869
    %2873 = vmatprep.subr.bf16.mxu0 0
    %2874 = vmatpush1.bf16.xpose.msra.mxu0 0
    %2875 = vmatprep.subr.bf16.mxu0 0
    %2876 = vmatpush1.bf16.xpose.msra.mxu0 0
    %2877 = vmatprep.subr.bf16.mxu0 0
    %2878 = vmatpush1.bf16.xpose.msra.mxu0 0
    %2879 = vmatprep.subr.bf16.mxu0 0
    %2880 = vmatpush1.bf16.xpose.msra.mxu0 0
    %2881 = vmatprep.subr.bf16.mxu0 0
    %2882 = vmatpush1.bf16.xpose.msra.mxu0 0
    %2883 = vmatprep.subr.bf16.mxu0 0
    %2884 = vmatpush1.bf16.xpose.msra.mxu0 0
    %2885 = vmatprep.subr.bf16.mxu0 0
    %2886 = vmatpush1.bf16.xpose.msra.mxu0 0
    %2887 = vmatprep.subr.bf16.mxu0 0
    %2888 = vmatpush1.bf16.xpose.msra.mxu0 0
    %2889 = vmatprep.subr.bf16.mxu0 0
    %2890 = vmatpush1.bf16.xpose.msra.mxu0 0
    %2891 = vmatprep.subr.bf16.mxu0 0
    %2892 = vmatpush1.bf16.xpose.msra.mxu0 0
    %2893 = vmatprep.subr.bf16.mxu0 0
    %2894 = vmatpush1.bf16.xpose.msra.mxu0 0
    %2895 = vmatprep.subr.bf16.mxu0 0
    %2896 = vmatpush1.bf16.xpose.msra.mxu0 0
    %2897 = vmatprep.subr.bf16.mxu0 0
    %2898 = vmatpush1.bf16.xpose.msra.mxu0 0
    %2899 = vmatprep.subr.bf16.mxu0 0
    %2900 = vmatpush1.bf16.xpose.msra.mxu0 0
    %2901 = vmatprep.subr.bf16.mxu0 0
    %2902 = vmatpush1.bf16.xpose.msra.mxu0 0
    %2903 = vmatprep.mubr.bf16.mxu0 0
    %2904 = vmatmul.mubr.bf16.gmra.mrb[0].mxu0 %v2866
    %v2905 = vpop.f32.mrb[0].mxu0
    %v2906 = vadd.f32 %v513, %v2905
    %v2907 = vpop.f32.mrb[0].mxu0
    %v2908 = vpop.f32.mrb[0].mxu0
    %v2909 = vpop.f32.mrb[0].mxu0
    %2910 = vdwg.mxu0
    %v2911 = vsel %vm609, %v2856, -inf
    %2912 = vmax.xlane.f32.xlu0 %v2911
    %v2913 = vpop.xlane.xlu0 %2912
    %v2914 = vsel %vm609, %v2906, -inf
    %2915 = vmax.xlane.f32.xlu0 %v2914
    %v2916 = vpop.xlane.xlu0 %2915
    %v2917 = vsub.f32 %v2856, %v2913
    %v2918 = vsub.f32 %v2906, %v2916
    %v2919 = vmul.f32 %v2917, 1.442695
    %v2920 = vpow.pop %v2919
    %v2921 = vmul.f32 %v2918, 1.442695
    %v2922 = vpow.pop %v2921
    %v2923 = vsel %vm609, %v2920, 0.0
    %2924 = vadd.xlane.f32.xlu0 %v2923
    %v2925 = vpop.xlane.xlu0 %2924
    %v2926 = vsel %vm609, %v2922, 0.0
    %2927 = vadd.xlane.f32.xlu0 %v2926
    %v2928 = vpop.xlane.xlu0 %2927
    %v2929 = vrcp.pop %v2925
    %v2930 = vrcp.pop %v2928
    %v2931 = vmul.f32 %v2920, %v2929
    %v2932 = vmul.f32 %v2922, %v2930
    %v2933 = vpack.c.bf16 %v2931, %v2931
    %v2934 = vpack.c.bf16 %v2932, %v2932
    %2935 = vrot.lane.b32.xlu0 %v2258, 64
    %v2936 = vpop.permute.xlu0 %2935
    %v2938 = vsel %vm609, %v2933, 0
    %v2941 = vsel %vm637, %v2936, 0
    %2943 = vmatprep.subr.bf16.mxu0 0
    %2944 = vmatpush1.bf16.msra.mxu0 %v2941
    %2945 = vmatprep.subr.bf16.mxu0 0
    %2946 = vmatpush1.bf16.msra.mxu0 0
    %2947 = vmatprep.subr.bf16.mxu0 0
    %2948 = vmatpush1.bf16.msra.mxu0 0
    %2949 = vmatprep.subr.bf16.mxu0 0
    %2950 = vmatpush1.bf16.msra.mxu0 0
    %2951 = vmatprep.subr.bf16.mxu0 0
    %2952 = vmatpush1.bf16.msra.mxu0 0
    %2953 = vmatprep.subr.bf16.mxu0 0
    %2954 = vmatpush1.bf16.msra.mxu0 0
    %2955 = vmatprep.subr.bf16.mxu0 0
    %2956 = vmatpush1.bf16.msra.mxu0 0
    %2957 = vmatprep.subr.bf16.mxu0 0
    %2958 = vmatpush1.bf16.msra.mxu0 0
    %2959 = vmatprep.subr.bf16.mxu0 0
    %2960 = vmatpush1.bf16.msra.mxu0 0
    %2961 = vmatprep.subr.bf16.mxu0 0
    %2962 = vmatpush1.bf16.msra.mxu0 0
    %2963 = vmatprep.subr.bf16.mxu0 0
    %2964 = vmatpush1.bf16.msra.mxu0 0
    %2965 = vmatprep.subr.bf16.mxu0 0
    %2966 = vmatpush1.bf16.msra.mxu0 0
    %2967 = vmatprep.subr.bf16.mxu0 0
    %2968 = vmatpush1.bf16.msra.mxu0 0
    %2969 = vmatprep.subr.bf16.mxu0 0
    %2970 = vmatpush1.bf16.msra.mxu0 0
    %2971 = vmatprep.subr.bf16.mxu0 0
    %2972 = vmatpush1.bf16.msra.mxu0 0
    %2973 = vmatprep.subr.bf16.mxu0 0
    %2974 = vmatpush1.bf16.msra.mxu0 0
    %2975 = vmatprep.mubr.bf16.mxu0 0
    %2976 = vmatmul.mubr.bf16.gmra.mrb[0].mxu0 %v2938
    %v2977 = vpop.f32.mrb[0].mxu0
    %v2978 = vadd.f32 0.0, %v2977
    %v2979 = vpop.f32.mrb[0].mxu0
    %v2980 = vpop.f32.mrb[0].mxu0
    %v2981 = vpop.f32.mrb[0].mxu0
    %2982 = vdwg.mxu0
    %2983 = vrot.lane.b32.xlu0 %v2259, 64
    %v2984 = vpop.permute.xlu0 %2983
    %v2986 = vsel %vm609, %v2934, 0
    %v2989 = vsel %vm637, %v2984, 0
    %2991 = vmatprep.subr.bf16.mxu0 0
    %2992 = vmatpush1.bf16.msra.mxu0 %v2989
    %2993 = vmatprep.subr.bf16.mxu0 0
    %2994 = vmatpush1.bf16.msra.mxu0 0
    %2995 = vmatprep.subr.bf16.mxu0 0
    %2996 = vmatpush1.bf16.msra.mxu0 0
    %2997 = vmatprep.subr.bf16.mxu0 0
    %2998 = vmatpush1.bf16.msra.mxu0 0
    %2999 = vmatprep.subr.bf16.mxu0 0
    %3000 = vmatpush1.bf16.msra.mxu0 0
    %3001 = vmatprep.subr.bf16.mxu0 0
    %3002 = vmatpush1.bf16.msra.mxu0 0
    %3003 = vmatprep.subr.bf16.mxu0 0
    %3004 = vmatpush1.bf16.msra.mxu0 0
    %3005 = vmatprep.subr.bf16.mxu0 0
    %3006 = vmatpush1.bf16.msra.mxu0 0
    %3007 = vmatprep.subr.bf16.mxu0 0
    %3008 = vmatpush1.bf16.msra.mxu0 0
    %3009 = vmatprep.subr.bf16.mxu0 0
    %3010 = vmatpush1.bf16.msra.mxu0 0
    %3011 = vmatprep.subr.bf16.mxu0 0
    %3012 = vmatpush1.bf16.msra.mxu0 0
    %3013 = vmatprep.subr.bf16.mxu0 0
    %3014 = vmatpush1.bf16.msra.mxu0 0
    %3015 = vmatprep.subr.bf16.mxu0 0
    %3016 = vmatpush1.bf16.msra.mxu0 0
    %3017 = vmatprep.subr.bf16.mxu0 0
    %3018 = vmatpush1.bf16.msra.mxu0 0
    %3019 = vmatprep.subr.bf16.mxu0 0
    %3020 = vmatpush1.bf16.msra.mxu0 0
    %3021 = vmatprep.subr.bf16.mxu0 0
    %3022 = vmatpush1.bf16.msra.mxu0 0
    %3023 = vmatprep.mubr.bf16.mxu0 0
    %3024 = vmatmul.mubr.bf16.gmra.mrb[0].mxu0 %v2986
    %v3025 = vpop.f32.mrb[0].mxu0
    %v3026 = vadd.f32 0.0, %v3025
    %v3027 = vpop.f32.mrb[0].mxu0
    %v3028 = vpop.f32.mrb[0].mxu0
    %v3029 = vpop.f32.mrb[0].mxu0
    %3030 = vdwg.mxu0
    %v3031 = vpack.c.bf16 %v3026, %v2978
    %v3032 = vld [vmem:[%s2469 + $0x20] sm:$0xf]
    %v3033 = vld [vmem:[%s2469 + $0x24] sm:$0xf]
    %v3034 = vld [vmem:[%s2469 + $0x28] sm:$0xf]
    %v3035 = vld [vmem:[%s2469 + $0x2c] sm:$0xf]
    %v3040 = vunpack.c.l.b16 %v3032
    %v3041 = vunpack.c.l.b16 %v3033
    %v3042 = vunpack.c.l.b16 %v3034
    %v3043 = vunpack.c.l.b16 %v3035
    %v3044 = vpack.c.b16 %v3041, %v3040
    %v3045 = vpack.c.b16 %v3043, %v3042
    %v3049 = vsel %vm516, %v3031, 0
    %3051 = vmatprep.subr.bf16.mxu0 0
    %3052 = vmatpush1.bf16.msra.mxu0 %v3044
    %3053 = vmatprep.subr.bf16.mxu0 0
    %3054 = vmatpush1.bf16.msra.mxu0 %v3045
    %3055 = vmatprep.subr.bf16.mxu0 0
    %3056 = vmatpush1.bf16.msra.mxu0 0
    %3057 = vmatprep.subr.bf16.mxu0 0
    %3058 = vmatpush1.bf16.msra.mxu0 0
    %3059 = vmatprep.subr.bf16.mxu0 0
    %3060 = vmatpush1.bf16.msra.mxu0 0
    %3061 = vmatprep.subr.bf16.mxu0 0
    %3062 = vmatpush1.bf16.msra.mxu0 0
    %3063 = vmatprep.subr.bf16.mxu0 0
    %3064 = vmatpush1.bf16.msra.mxu0 0
    %3065 = vmatprep.subr.bf16.mxu0 0
    %3066 = vmatpush1.bf16.msra.mxu0 0
    %3067 = vmatprep.subr.bf16.mxu0 0
    %3068 = vmatpush1.bf16.msra.mxu0 0
    %3069 = vmatprep.subr.bf16.mxu0 0
    %3070 = vmatpush1.bf16.msra.mxu0 0
    %3071 = vmatprep.subr.bf16.mxu0 0
    %3072 = vmatpush1.bf16.msra.mxu0 0
    %3073 = vmatprep.subr.bf16.mxu0 0
    %3074 = vmatpush1.bf16.msra.mxu0 0
    %3075 = vmatprep.subr.bf16.mxu0 0
    %3076 = vmatpush1.bf16.msra.mxu0 0
    %3077 = vmatprep.subr.bf16.mxu0 0
    %3078 = vmatpush1.bf16.msra.mxu0 0
    %3079 = vmatprep.subr.bf16.mxu0 0
    %3080 = vmatpush1.bf16.msra.mxu0 0
    %3081 = vmatprep.subr.bf16.mxu0 0
    %3082 = vmatpush1.bf16.msra.mxu0 0
    %3083 = vmatprep.mubr.bf16.mxu0 0
    %3084 = vmatmul.mubr.bf16.gmra.mrb[0].mxu0 %v3049
    %v3085 = vpop.f32.mrb[0].mxu0
    %v3086 = vadd.f32 0.0, %v3085
    %v3087 = vpop.f32.mrb[0].mxu0
    %v3088 = vpop.f32.mrb[0].mxu0
    %v3089 = vadd.f32 0.0, %v3088
    %v3090 = vpop.f32.mrb[0].mxu0
    %3091 = vdwg.mxu0
    %v3092 = vadd.f32 %v2805, %v3086
    %v3093 = vadd.f32 %v2808, %v3089
    %3094 = vrot.lane.b32.xlu0 %v2248, 32
    %v3095 = vpop.permute.xlu0 %3094
    %3096 = vrot.lane.b32.xlu0 %v2253, 32
    %v3097 = vpop.permute.xlu0 %3096
    %v3099 = vsel %vm516, %v3095, 0
    %v3102 = vsel %vm516, %v3097, 0
    %3104 = vmatprep.subr.bf16.mxu0 0
    %3105 = vmatpush1.bf16.xpose.msra.mxu0 %v3102
    %3106 = vmatprep.subr.bf16.mxu0 0
    %3107 = vmatpush1.bf16.xpose.msra.mxu0 0
    %3108 = vmatprep.subr.bf16.mxu0 0
    %3109 = vmatpush1.bf16.xpose.msra.mxu0 0
    %3110 = vmatprep.subr.bf16.mxu0 0
    %3111 = vmatpush1.bf16.xpose.msra.mxu0 0
    %3112 = vmatprep.subr.bf16.mxu0 0
    %3113 = vmatpush1.bf16.xpose.msra.mxu0 0
    %3114 = vmatprep.subr.bf16.mxu0 0
    %3115 = vmatpush1.bf16.xpose.msra.mxu0 0
    %3116 = vmatprep.subr.bf16.mxu0 0
    %3117 = vmatpush1.bf16.xpose.msra.mxu0 0
    %3118 = vmatprep.subr.bf16.mxu0 0
    %3119 = vmatpush1.bf16.xpose.msra.mxu0 0
    %3120 = vmatprep.subr.bf16.mxu0 0
    %3121 = vmatpush1.bf16.xpose.msra.mxu0 0
    %3122 = vmatprep.subr.bf16.mxu0 0
    %3123 = vmatpush1.bf16.xpose.msra.mxu0 0
    %3124 = vmatprep.subr.bf16.mxu0 0
    %3125 = vmatpush1.bf16.xpose.msra.mxu0 0
    %3126 = vmatprep.subr.bf16.mxu0 0
    %3127 = vmatpush1.bf16.xpose.msra.mxu0 0
    %3128 = vmatprep.subr.bf16.mxu0 0
    %3129 = vmatpush1.bf16.xpose.msra.mxu0 0
    %3130 = vmatprep.subr.bf16.mxu0 0
    %3131 = vmatpush1.bf16.xpose.msra.mxu0 0
    %3132 = vmatprep.subr.bf16.mxu0 0
    %3133 = vmatpush1.bf16.xpose.msra.mxu0 0
    %3134 = vmatprep.subr.bf16.mxu0 0
    %3135 = vmatpush1.bf16.xpose.msra.mxu0 0
    %3136 = vmatprep.mubr.bf16.mxu0 0
    %3137 = vmatmul.mubr.bf16.gmra.mrb[0].mxu0 %v3099
    %v3138 = vpop.f32.mrb[0].mxu0
    %v3139 = vadd.f32 %v509, %v3138
    %v3140 = vpop.f32.mrb[0].mxu0
    %v3141 = vpop.f32.mrb[0].mxu0
    %v3142 = vpop.f32.mrb[0].mxu0
    %3143 = vdwg.mxu0
    %3144 = vrot.lane.b32.xlu0 %v2249, 32
    %v3145 = vpop.permute.xlu0 %3144
    %3146 = vrot.lane.b32.xlu0 %v2254, 32
    %v3147 = vpop.permute.xlu0 %3146
    %v3149 = vsel %vm516, %v3145, 0
    %v3152 = vsel %vm516, %v3147, 0
    %3154 = vmatprep.subr.bf16.mxu0 0
    %3155 = vmatpush1.bf16.xpose.msra.mxu0 %v3152
    %3156 = vmatprep.subr.bf16.mxu0 0
    %3157 = vmatpush1.bf16.xpose.msra.mxu0 0
    %3158 = vmatprep.subr.bf16.mxu0 0
    %3159 = vmatpush1.bf16.xpose.msra.mxu0 0
    %3160 = vmatprep.subr.bf16.mxu0 0
    %3161 = vmatpush1.bf16.xpose.msra.mxu0 0
    %3162 = vmatprep.subr.bf16.mxu0 0
    %3163 = vmatpush1.bf16.xpose.msra.mxu0 0
    %3164 = vmatprep.subr.bf16.mxu0 0
    %3165 = vmatpush1.bf16.xpose.msra.mxu0 0
    %3166 = vmatprep.subr.bf16.mxu0 0
    %3167 = vmatpush1.bf16.xpose.msra.mxu0 0
    %3168 = vmatprep.subr.bf16.mxu0 0
    %3169 = vmatpush1.bf16.xpose.msra.mxu0 0
    %3170 = vmatprep.subr.bf16.mxu0 0
    %3171 = vmatpush1.bf16.xpose.msra.mxu0 0
    %3172 = vmatprep.subr.bf16.mxu0 0
    %3173 = vmatpush1.bf16.xpose.msra.mxu0 0
    %3174 = vmatprep.subr.bf16.mxu0 0
    %3175 = vmatpush1.bf16.xpose.msra.mxu0 0
    %3176 = vmatprep.subr.bf16.mxu0 0
    %3177 = vmatpush1.bf16.xpose.msra.mxu0 0
    %3178 = vmatprep.subr.bf16.mxu0 0
    %3179 = vmatpush1.bf16.xpose.msra.mxu0 0
    %3180 = vmatprep.subr.bf16.mxu0 0
    %3181 = vmatpush1.bf16.xpose.msra.mxu0 0
    %3182 = vmatprep.subr.bf16.mxu0 0
    %3183 = vmatpush1.bf16.xpose.msra.mxu0 0
    %3184 = vmatprep.subr.bf16.mxu0 0
    %3185 = vmatpush1.bf16.xpose.msra.mxu0 0
    %3186 = vmatprep.mubr.bf16.mxu0 0
    %3187 = vmatmul.mubr.bf16.gmra.mrb[0].mxu0 %v3149
    %v3188 = vpop.f32.mrb[0].mxu0
    %v3189 = vadd.f32 %v513, %v3188
    %v3190 = vpop.f32.mrb[0].mxu0
    %v3191 = vpop.f32.mrb[0].mxu0
    %v3192 = vpop.f32.mrb[0].mxu0
    %3193 = vdwg.mxu0
    %v3194 = vsel %vm609, %v3139, -inf
    %3195 = vmax.xlane.f32.xlu0 %v3194
    %v3196 = vpop.xlane.xlu0 %3195
    %v3197 = vsel %vm609, %v3189, -inf
    %3198 = vmax.xlane.f32.xlu0 %v3197
    %v3199 = vpop.xlane.xlu0 %3198
    %v3200 = vsub.f32 %v3139, %v3196
    %v3201 = vsub.f32 %v3189, %v3199
    %v3202 = vmul.f32 %v3200, 1.442695
    %v3203 = vpow.pop %v3202
    %v3204 = vmul.f32 %v3201, 1.442695
    %v3205 = vpow.pop %v3204
    %v3206 = vsel %vm609, %v3203, 0.0
    %3207 = vadd.xlane.f32.xlu0 %v3206
    %v3208 = vpop.xlane.xlu0 %3207
    %v3209 = vsel %vm609, %v3205, 0.0
    %3210 = vadd.xlane.f32.xlu0 %v3209
    %v3211 = vpop.xlane.xlu0 %3210
    %v3212 = vrcp.pop %v3208
    %v3213 = vrcp.pop %v3211
    %v3214 = vmul.f32 %v3203, %v3212
    %v3215 = vmul.f32 %v3205, %v3213
    %v3216 = vpack.c.bf16 %v3214, %v3214
    %v3217 = vpack.c.bf16 %v3215, %v3215
    %3218 = vrot.lane.b32.xlu0 %v2258, 32
    %v3219 = vpop.permute.xlu0 %3218
    %v3221 = vsel %vm609, %v3216, 0
    %v3224 = vsel %vm637, %v3219, 0
    %3226 = vmatprep.subr.bf16.mxu0 0
    %3227 = vmatpush1.bf16.msra.mxu0 %v3224
    %3228 = vmatprep.subr.bf16.mxu0 0
    %3229 = vmatpush1.bf16.msra.mxu0 0
    %3230 = vmatprep.subr.bf16.mxu0 0
    %3231 = vmatpush1.bf16.msra.mxu0 0
    %3232 = vmatprep.subr.bf16.mxu0 0
    %3233 = vmatpush1.bf16.msra.mxu0 0
    %3234 = vmatprep.subr.bf16.mxu0 0
    %3235 = vmatpush1.bf16.msra.mxu0 0
    %3236 = vmatprep.subr.bf16.mxu0 0
    %3237 = vmatpush1.bf16.msra.mxu0 0
    %3238 = vmatprep.subr.bf16.mxu0 0
    %3239 = vmatpush1.bf16.msra.mxu0 0
    %3240 = vmatprep.subr.bf16.mxu0 0
    %3241 = vmatpush1.bf16.msra.mxu0 0
    %3242 = vmatprep.subr.bf16.mxu0 0
    %3243 = vmatpush1.bf16.msra.mxu0 0
    %3244 = vmatprep.subr.bf16.mxu0 0
    %3245 = vmatpush1.bf16.msra.mxu0 0
    %3246 = vmatprep.subr.bf16.mxu0 0
    %3247 = vmatpush1.bf16.msra.mxu0 0
    %3248 = vmatprep.subr.bf16.mxu0 0
    %3249 = vmatpush1.bf16.msra.mxu0 0
    %3250 = vmatprep.subr.bf16.mxu0 0
    %3251 = vmatpush1.bf16.msra.mxu0 0
    %3252 = vmatprep.subr.bf16.mxu0 0
    %3253 = vmatpush1.bf16.msra.mxu0 0
    %3254 = vmatprep.subr.bf16.mxu0 0
    %3255 = vmatpush1.bf16.msra.mxu0 0
    %3256 = vmatprep.subr.bf16.mxu0 0
    %3257 = vmatpush1.bf16.msra.mxu0 0
    %3258 = vmatprep.mubr.bf16.mxu0 0
    %3259 = vmatmul.mubr.bf16.gmra.mrb[0].mxu0 %v3221
    %v3260 = vpop.f32.mrb[0].mxu0
    %v3261 = vadd.f32 0.0, %v3260
    %v3262 = vpop.f32.mrb[0].mxu0
    %v3263 = vpop.f32.mrb[0].mxu0
    %v3264 = vpop.f32.mrb[0].mxu0
    %3265 = vdwg.mxu0
    %3266 = vrot.lane.b32.xlu0 %v2259, 32
    %v3267 = vpop.permute.xlu0 %3266
    %v3269 = vsel %vm609, %v3217, 0
    %v3272 = vsel %vm637, %v3267, 0
    %3274 = vmatprep.subr.bf16.mxu0 0
    %3275 = vmatpush1.bf16.msra.mxu0 %v3272
    %3276 = vmatprep.subr.bf16.mxu0 0
    %3277 = vmatpush1.bf16.msra.mxu0 0
    %3278 = vmatprep.subr.bf16.mxu0 0
    %3279 = vmatpush1.bf16.msra.mxu0 0
    %3280 = vmatprep.subr.bf16.mxu0 0
    %3281 = vmatpush1.bf16.msra.mxu0 0
    %3282 = vmatprep.subr.bf16.mxu0 0
    %3283 = vmatpush1.bf16.msra.mxu0 0
    %3284 = vmatprep.subr.bf16.mxu0 0
    %3285 = vmatpush1.bf16.msra.mxu0 0
    %3286 = vmatprep.subr.bf16.mxu0 0
    %3287 = vmatpush1.bf16.msra.mxu0 0
    %3288 = vmatprep.subr.bf16.mxu0 0
    %3289 = vmatpush1.bf16.msra.mxu0 0
    %3290 = vmatprep.subr.bf16.mxu0 0
    %3291 = vmatpush1.bf16.msra.mxu0 0
    %3292 = vmatprep.subr.bf16.mxu0 0
    %3293 = vmatpush1.bf16.msra.mxu0 0
    %3294 = vmatprep.subr.bf16.mxu0 0
    %3295 = vmatpush1.bf16.msra.mxu0 0
    %3296 = vmatprep.subr.bf16.mxu0 0
    %3297 = vmatpush1.bf16.msra.mxu0 0
    %3298 = vmatprep.subr.bf16.mxu0 0
    %3299 = vmatpush1.bf16.msra.mxu0 0
    %3300 = vmatprep.subr.bf16.mxu0 0
    %3301 = vmatpush1.bf16.msra.mxu0 0
    %3302 = vmatprep.subr.bf16.mxu0 0
    %3303 = vmatpush1.bf16.msra.mxu0 0
    %3304 = vmatprep.subr.bf16.mxu0 0
    %3305 = vmatpush1.bf16.msra.mxu0 0
    %3306 = vmatprep.mubr.bf16.mxu0 0
    %3307 = vmatmul.mubr.bf16.gmra.mrb[0].mxu0 %v3269
    %v3308 = vpop.f32.mrb[0].mxu0
    %v3309 = vadd.f32 0.0, %v3308
    %v3310 = vpop.f32.mrb[0].mxu0
    %v3311 = vpop.f32.mrb[0].mxu0
    %v3312 = vpop.f32.mrb[0].mxu0
    %3313 = vdwg.mxu0
    %v3314 = vpack.c.bf16 %v3309, %v3261
    %v3315 = vld [vmem:[%s2469 + $0x30] sm:$0xf]
    %v3316 = vld [vmem:[%s2469 + $0x34] sm:$0xf]
    %v3317 = vld [vmem:[%s2469 + $0x38] sm:$0xf]
    %v3318 = vld [vmem:[%s2469 + $0x3c] sm:$0xf]
    %v3323 = vunpack.c.l.b16 %v3315
    %v3324 = vunpack.c.l.b16 %v3316
    %v3325 = vunpack.c.l.b16 %v3317
    %v3326 = vunpack.c.l.b16 %v3318
    %v3327 = vpack.c.b16 %v3324, %v3323
    %v3328 = vpack.c.b16 %v3326, %v3325
    %v3332 = vsel %vm516, %v3314, 0
    %3334 = vmatprep.subr.bf16.mxu0 0
    %3335 = vmatpush1.bf16.msra.mxu0 %v3327
    %3336 = vmatprep.subr.bf16.mxu0 0
    %3337 = vmatpush1.bf16.msra.mxu0 %v3328
    %3338 = vmatprep.subr.bf16.mxu0 0
    %3339 = vmatpush1.bf16.msra.mxu0 0
    %3340 = vmatprep.subr.bf16.mxu0 0
    %3341 = vmatpush1.bf16.msra.mxu0 0
    %3342 = vmatprep.subr.bf16.mxu0 0
    %3343 = vmatpush1.bf16.msra.mxu0 0
    %3344 = vmatprep.subr.bf16.mxu0 0
    %3345 = vmatpush1.bf16.msra.mxu0 0
    %3346 = vmatprep.subr.bf16.mxu0 0
    %3347 = vmatpush1.bf16.msra.mxu0 0
    %3348 = vmatprep.subr.bf16.mxu0 0
    %3349 = vmatpush1.bf16.msra.mxu0 0
    %3350 = vmatprep.subr.bf16.mxu0 0
    %3351 = vmatpush1.bf16.msra.mxu0 0
    %3352 = vmatprep.subr.bf16.mxu0 0
    %3353 = vmatpush1.bf16.msra.mxu0 0
    %3354 = vmatprep.subr.bf16.mxu0 0
    %3355 = vmatpush1.bf16.msra.mxu0 0
    %3356 = vmatprep.subr.bf16.mxu0 0
    %3357 = vmatpush1.bf16.msra.mxu0 0
    %3358 = vmatprep.subr.bf16.mxu0 0
    %3359 = vmatpush1.bf16.msra.mxu0 0
    %3360 = vmatprep.subr.bf16.mxu0 0
    %3361 = vmatpush1.bf16.msra.mxu0 0
    %3362 = vmatprep.subr.bf16.mxu0 0
    %3363 = vmatpush1.bf16.msra.mxu0 0
    %3364 = vmatprep.subr.bf16.mxu0 0
    %3365 = vmatpush1.bf16.msra.mxu0 0
    %3366 = vmatprep.mubr.bf16.mxu0 0
    %3367 = vmatmul.mubr.bf16.gmra.mrb[0].mxu0 %v3332
    %v3368 = vpop.f32.mrb[0].mxu0
    %v3369 = vadd.f32 0.0, %v3368
    %v3370 = vpop.f32.mrb[0].mxu0
    %v3371 = vpop.f32.mrb[0].mxu0
    %v3372 = vadd.f32 0.0, %v3371
    %v3373 = vpop.f32.mrb[0].mxu0
    %3374 = vdwg.mxu0
    %v3375 = vadd.f32 %v3092, %v3369
    %v3376 = vadd.f32 %v3093, %v3372
    %s3377 = scalar_lea.vmem %s7, 1
    %v3378 = vld [vmem:[%s3377] sm:$0x1]
    %v3380 = vlaneseq
    %v3381 = vshrl.u32 %v3380, 7
    %v3382 = vsub.s32 0, %v3381
    %v3383 = vrot.slane %v3378, %v3382
    %v3385 = vadd.f32 %v3375, %v3383
    %v3386 = vadd.f32 %v3376, %v3383
    %v3387 = vadd.f32 %v3385, %v1974
    %v3388 = vadd.f32 %v3386, %v1975
    %s3389 = scalar_lea.vmem %s8, 1
    %v3390 = vld [vmem:[%s3389] sm:$0x1]
    %s3391 = scalar_lea.vmem %s9, 1
    %v3392 = vld [vmem:[%s3391] sm:$0x1]
    %3393 = vadd.xlane.f32.xlu0 %v3387
    %v3394 = vpop.xlane.xlu0 %3393
    %3395 = vadd.xlane.f32.xlu0 %v3388
    %v3396 = vpop.xlane.xlu0 %3395
    %v3397 = vmul.f32 %v3394, 0.03125
    %v3398 = vmul.f32 %v3396, 0.03125
    %v3399 = vsub.f32 %v3387, %v3397
    %v3400 = vsub.f32 %v3388, %v3398
    %v3401 = vmul.f32 %v3399, %v173
    %v3402 = vmul.f32 %v3400, %v173
    %v3403 = vmul.f32 %v3401, %v3401
    %v3404 = vmul.f32 %v3402, %v3402
    %3405 = vadd.xlane.f32.xlu0 %v3403
    %v3406 = vpop.xlane.xlu0 %3405
    %3407 = vadd.xlane.f32.xlu0 %v3404
    %v3408 = vpop.xlane.xlu0 %3407
    %v3409 = vmul.f32 %v3406, 0.03125
    %v3410 = vmul.f32 %v3408, 0.03125
    %v3411 = vadd.f32 %v3409, 1e-12
    %v3412 = vadd.f32 %v3410, 1e-12
    %v3413 = vrsqrt.pop %v3411
    %v3414 = vrsqrt.pop %v3412
    %v3415 = vmul.f32 %v3401, %v3413
    %v3416 = vmul.f32 %v3402, %v3414
    %v3418 = vlaneseq
    %v3419 = vshrl.u32 %v3418, 7
    %v3420 = vsub.s32 0, %v3419
    %v3421 = vrot.slane %v3390, %v3420
    %v3423 = vmul.f32 %v3415, %v3421
    %v3424 = vmul.f32 %v3416, %v3421
    %v3426 = vlaneseq
    %v3427 = vshrl.u32 %v3426, 7
    %v3428 = vsub.s32 0, %v3427
    %v3429 = vrot.slane %v3392, %v3428
    %v3431 = vadd.f32 %v3423, %v3429
    %v3432 = vadd.f32 %v3424, %v3429
    %v3433 = vpack.c.bf16 %v3432, %v3431
    %s3434 = scalar_lea.vmem [#allocation11], 64
    %v3435 = vld [vmem:[%s3434] sm:$0xf]
    %v3436 = vld [vmem:[%s3434 + $0x4] sm:$0xf]
    %v3437 = vld [vmem:[%s3434 + $0x8] sm:$0xf]
    %v3438 = vld [vmem:[%s3434 + $0xc] sm:$0xf]
    %v3439 = vld [vmem:[%s3434 + $0x10] sm:$0xf]
    %v3440 = vld [vmem:[%s3434 + $0x14] sm:$0xf]
    %v3441 = vld [vmem:[%s3434 + $0x18] sm:$0xf]
    %v3442 = vld [vmem:[%s3434 + $0x1c] sm:$0xf]
    %v3443 = vld [vmem:[%s3434 + $0x20] sm:$0xf]
    %v3444 = vld [vmem:[%s3434 + $0x24] sm:$0xf]
    %v3445 = vld [vmem:[%s3434 + $0x28] sm:$0xf]
    %v3446 = vld [vmem:[%s3434 + $0x2c] sm:$0xf]
    %v3447 = vld [vmem:[%s3434 + $0x30] sm:$0xf]
    %v3448 = vld [vmem:[%s3434 + $0x34] sm:$0xf]
    %v3449 = vld [vmem:[%s3434 + $0x38] sm:$0xf]
    %v3450 = vld [vmem:[%s3434 + $0x3c] sm:$0xf]
    %s3451 = scalar_lea.vmem %s11, 1
    %v3452 = vld [vmem:[%s3451] sm:$0x1]
    %v3454 = vlaneseq
    %v3455 = vshrl.u32 %v3454, 7
    %v3456 = vsub.s32 0, %v3455
    %v3457 = vrot.slane %v3452, %v3456
    %v3475 = vunpack.c.l.b16 %v3435
    %v3476 = vunpack.c.l.b16 %v3436
    %v3477 = vunpack.c.l.b16 %v3437
    %v3478 = vunpack.c.l.b16 %v3438
    %v3479 = vunpack.c.l.b16 %v3439
    %v3480 = vunpack.c.l.b16 %v3440
    %v3481 = vunpack.c.l.b16 %v3441
    %v3482 = vunpack.c.l.b16 %v3442
    %v3483 = vunpack.c.l.b16 %v3443
    %v3484 = vunpack.c.l.b16 %v3444
    %v3485 = vunpack.c.l.b16 %v3445
    %v3486 = vunpack.c.l.b16 %v3446
    %v3487 = vunpack.c.l.b16 %v3447
    %v3488 = vunpack.c.l.b16 %v3448
    %v3489 = vunpack.c.l.b16 %v3449
    %v3490 = vunpack.c.l.b16 %v3450
    %v3491 = vpack.c.b16 %v3476, %v3475
    %v3492 = vpack.c.b16 %v3478, %v3477
    %v3493 = vpack.c.b16 %v3480, %v3479
    %v3494 = vpack.c.b16 %v3482, %v3481
    %v3495 = vpack.c.b16 %v3484, %v3483
    %v3496 = vpack.c.b16 %v3486, %v3485
    %v3497 = vpack.c.b16 %v3488, %v3487
    %v3498 = vpack.c.b16 %v3490, %v3489
    %3507 = vmatprep.subr.bf16.mxu0 0
    %3508 = vmatpush1.bf16.msra.mxu0 %v3491
    %3509 = vmatprep.subr.bf16.mxu0 0
    %3510 = vmatpush1.bf16.msra.mxu0 %v3492
    %3511 = vmatprep.subr.bf16.mxu0 0
    %3512 = vmatpush1.bf16.msra.mxu0 %v3493
    %3513 = vmatprep.subr.bf16.mxu0 0
    %3514 = vmatpush1.bf16.msra.mxu0 %v3494
    %3515 = vmatprep.subr.bf16.mxu0 0
    %3516 = vmatpush1.bf16.msra.mxu0 %v3495
    %3517 = vmatprep.subr.bf16.mxu0 0
    %3518 = vmatpush1.bf16.msra.mxu0 %v3496
    %3519 = vmatprep.subr.bf16.mxu0 0
    %3520 = vmatpush1.bf16.msra.mxu0 %v3497
    %3521 = vmatprep.subr.bf16.mxu0 0
    %3522 = vmatpush1.bf16.msra.mxu0 %v3498
    %3523 = vmatprep.subr.bf16.mxu0 0
    %3524 = vmatpush1.bf16.msra.mxu0 0
    %3525 = vmatprep.subr.bf16.mxu0 0
    %3526 = vmatpush1.bf16.msra.mxu0 0
    %3527 = vmatprep.subr.bf16.mxu0 0
    %3528 = vmatpush1.bf16.msra.mxu0 0
    %3529 = vmatprep.subr.bf16.mxu0 0
    %3530 = vmatpush1.bf16.msra.mxu0 0
    %3531 = vmatprep.subr.bf16.mxu0 0
    %3532 = vmatpush1.bf16.msra.mxu0 0
    %3533 = vmatprep.subr.bf16.mxu0 0
    %3534 = vmatpush1.bf16.msra.mxu0 0
    %3535 = vmatprep.subr.bf16.mxu0 0
    %3536 = vmatpush1.bf16.msra.mxu0 0
    %3537 = vmatprep.subr.bf16.mxu0 0
    %3538 = vmatpush1.bf16.msra.mxu0 0
    %3539 = vmatprep.mubr.bf16.mxu0 0
    %3540 = vmatmul.mubr.bf16.gmra.mrb[0].mxu0 %v3433
    %v3541 = vpop.f32.mrb[0].mxu0
    %v3542 = vadd.f32 %v3457, %v3541
    %v3543 = vpop.f32.mrb[0].mxu0
    %v3544 = vpop.f32.mrb[0].mxu0
    %v3545 = vadd.f32 %v3457, %v3544
    %v3546 = vpop.f32.mrb[0].mxu0
    %3547 = vdwg.mxu0
    %v3548 = vmul.f32 %v3542, %v3542
    %v3549 = vmul.f32 %v3545, %v3545
    %v3550 = vmul.f32 %v3542, %v3548
    %v3551 = vmul.f32 %v3545, %v3549
    %v3552 = vmul.f32 %v3550, 0.044715
    %v3553 = vmul.f32 %v3551, 0.044715
    %v3554 = vadd.f32 %v3542, %v3552
    %v3555 = vadd.f32 %v3545, %v3553
    %v3556 = vmul.f32 %v3554, 0.7978846
    %v3557 = vmul.f32 %v3555, 0.7978846
    %v3558 = vtanh.pop %v3556
    %v3559 = vtanh.pop %v3557
    %v3560 = vadd.f32 %v3558, 1.0
    %v3561 = vadd.f32 %v3559, 1.0
    %v3562 = vmul.f32 %v3560, 0.5
    %v3563 = vmul.f32 %v3561, 0.5
    %v3564 = vmul.f32 %v3542, %v3562
    %v3565 = vmul.f32 %v3545, %v3563
    %v3566 = vpack.c.bf16 %v3565, %v3564
    %s3567 = scalar_lea.vmem [#allocation13], 64
    %v3568 = vld [vmem:[%s3567] sm:$0xf]
    %v3569 = vld [vmem:[%s3567 + $0x4] sm:$0xf]
    %v3570 = vld [vmem:[%s3567 + $0x8] sm:$0xf]
    %v3571 = vld [vmem:[%s3567 + $0xc] sm:$0xf]
    %v3572 = vld [vmem:[%s3567 + $0x10] sm:$0xf]
    %v3573 = vld [vmem:[%s3567 + $0x14] sm:$0xf]
    %v3574 = vld [vmem:[%s3567 + $0x18] sm:$0xf]
    %v3575 = vld [vmem:[%s3567 + $0x1c] sm:$0xf]
    %v3576 = vld [vmem:[%s3567 + $0x20] sm:$0xf]
    %v3577 = vld [vmem:[%s3567 + $0x24] sm:$0xf]
    %v3578 = vld [vmem:[%s3567 + $0x28] sm:$0xf]
    %v3579 = vld [vmem:[%s3567 + $0x2c] sm:$0xf]
    %v3580 = vld [vmem:[%s3567 + $0x30] sm:$0xf]
    %v3581 = vld [vmem:[%s3567 + $0x34] sm:$0xf]
    %v3582 = vld [vmem:[%s3567 + $0x38] sm:$0xf]
    %v3583 = vld [vmem:[%s3567 + $0x3c] sm:$0xf]
    %s3584 = scalar_lea.vmem %s13, 1
    %v3585 = vld [vmem:[%s3584] sm:$0x1]
    %v3587 = vlaneseq
    %v3588 = vshrl.u32 %v3587, 7
    %v3589 = vsub.s32 0, %v3588
    %v3590 = vrot.slane %v3585, %v3589
    %v3608 = vunpack.c.l.b16 %v3568
    %v3609 = vunpack.c.l.b16 %v3569
    %v3610 = vunpack.c.l.b16 %v3570
    %v3611 = vunpack.c.l.b16 %v3571
    %v3612 = vunpack.c.l.b16 %v3572
    %v3613 = vunpack.c.l.b16 %v3573
    %v3614 = vunpack.c.l.b16 %v3574
    %v3615 = vunpack.c.l.b16 %v3575
    %v3616 = vunpack.c.l.b16 %v3576
    %v3617 = vunpack.c.l.b16 %v3577
    %v3618 = vunpack.c.l.b16 %v3578
    %v3619 = vunpack.c.l.b16 %v3579
    %v3620 = vunpack.c.l.b16 %v3580
    %v3621 = vunpack.c.l.b16 %v3581
    %v3622 = vunpack.c.l.b16 %v3582
    %v3623 = vunpack.c.l.b16 %v3583
    %v3624 = vpack.c.b16 %v3609, %v3608
    %v3625 = vpack.c.b16 %v3611, %v3610
    %v3626 = vpack.c.b16 %v3613, %v3612
    %v3627 = vpack.c.b16 %v3615, %v3614
    %v3628 = vpack.c.b16 %v3617, %v3616
    %v3629 = vpack.c.b16 %v3619, %v3618
    %v3630 = vpack.c.b16 %v3621, %v3620
    %v3631 = vpack.c.b16 %v3623, %v3622
    %3640 = vmatprep.subr.bf16.mxu0 0
    %3641 = vmatpush1.bf16.msra.mxu0 %v3624
    %3642 = vmatprep.subr.bf16.mxu0 0
    %3643 = vmatpush1.bf16.msra.mxu0 %v3625
    %3644 = vmatprep.subr.bf16.mxu0 0
    %3645 = vmatpush1.bf16.msra.mxu0 %v3626
    %3646 = vmatprep.subr.bf16.mxu0 0
    %3647 = vmatpush1.bf16.msra.mxu0 %v3627
    %3648 = vmatprep.subr.bf16.mxu0 0
    %3649 = vmatpush1.bf16.msra.mxu0 %v3628
    %3650 = vmatprep.subr.bf16.mxu0 0
    %3651 = vmatpush1.bf16.msra.mxu0 %v3629
    %3652 = vmatprep.subr.bf16.mxu0 0
    %3653 = vmatpush1.bf16.msra.mxu0 %v3630
    %3654 = vmatprep.subr.bf16.mxu0 0
    %3655 = vmatpush1.bf16.msra.mxu0 %v3631
    %3656 = vmatprep.subr.bf16.mxu0 0
    %3657 = vmatpush1.bf16.msra.mxu0 0
    %3658 = vmatprep.subr.bf16.mxu0 0
    %3659 = vmatpush1.bf16.msra.mxu0 0
    %3660 = vmatprep.subr.bf16.mxu0 0
    %3661 = vmatpush1.bf16.msra.mxu0 0
    %3662 = vmatprep.subr.bf16.mxu0 0
    %3663 = vmatpush1.bf16.msra.mxu0 0
    %3664 = vmatprep.subr.bf16.mxu0 0
    %3665 = vmatpush1.bf16.msra.mxu0 0
    %3666 = vmatprep.subr.bf16.mxu0 0
    %3667 = vmatpush1.bf16.msra.mxu0 0
    %3668 = vmatprep.subr.bf16.mxu0 0
    %3669 = vmatpush1.bf16.msra.mxu0 0
    %3670 = vmatprep.subr.bf16.mxu0 0
    %3671 = vmatpush1.bf16.msra.mxu0 0
    %3672 = vmatprep.mubr.bf16.mxu0 0
    %3673 = vmatmul.mubr.bf16.gmra.mrb[0].mxu0 %v3566
    %v3674 = vpop.f32.mrb[0].mxu0
    %v3675 = vadd.f32 %v3590, %v3674
    %v3676 = vpop.f32.mrb[0].mxu0
    %v3677 = vpop.f32.mrb[0].mxu0
    %v3678 = vadd.f32 %v3590, %v3677
    %v3679 = vpop.f32.mrb[0].mxu0
    %3680 = vdwg.mxu0
    %v3681 = vadd.f32 %v3675, %v3431
    %v3682 = vadd.f32 %v3678, %v3432
    %s3683 = scalar_lea.vmem %s14, 1
    %v3684 = vld [vmem:[%s3683] sm:$0x1]
    %s3685 = scalar_lea.vmem %s15, 1
    %v3686 = vld [vmem:[%s3685] sm:$0x1]
    %3687 = vadd.xlane.f32.xlu0 %v3681
    %v3688 = vpop.xlane.xlu0 %3687
    %3689 = vadd.xlane.f32.xlu0 %v3682
    %v3690 = vpop.xlane.xlu0 %3689
    %v3691 = vmul.f32 %v3688, 0.03125
    %v3692 = vmul.f32 %v3690, 0.03125
    %v3693 = vsub.f32 %v3681, %v3691
    %v3694 = vsub.f32 %v3682, %v3692
    %v3695 = vmul.f32 %v3693, %v173
    %v3696 = vmul.f32 %v3694, %v173
    %v3697 = vmul.f32 %v3695, %v3695
    %v3698 = vmul.f32 %v3696, %v3696
    %3699 = vadd.xlane.f32.xlu0 %v3697
    %v3700 = vpop.xlane.xlu0 %3699
    %3701 = vadd.xlane.f32.xlu0 %v3698
    %v3702 = vpop.xlane.xlu0 %3701
    %v3703 = vmul.f32 %v3700, 0.03125
    %v3704 = vmul.f32 %v3702, 0.03125
    %v3705 = vadd.f32 %v3703, 1e-12
    %v3706 = vadd.f32 %v3704, 1e-12
    %v3707 = vrsqrt.pop %v3705
    %v3708 = vrsqrt.pop %v3706
    %v3709 = vmul.f32 %v3695, %v3707
    %v3710 = vmul.f32 %v3696, %v3708
    %v3712 = vlaneseq
    %v3713 = vshrl.u32 %v3712, 7
    %v3714 = vsub.s32 0, %v3713
    %v3715 = vrot.slane %v3684, %v3714
    %v3717 = vmul.f32 %v3709, %v3715
    %v3718 = vmul.f32 %v3710, %v3715
    %v3720 = vlaneseq
    %v3721 = vshrl.u32 %v3720, 7
    %v3722 = vsub.s32 0, %v3721
    %v3723 = vrot.slane %v3686, %v3722
    %v3725 = vadd.f32 %v3717, %v3723
    %v3726 = vadd.f32 %v3718, %v3723
    %3727 = vst [vmem:[#allocation16] sm:$0xff] %v3725
    %3728 = vst [vmem:[#allocation16 + $0x8] sm:$0xff] %v3726
    %v3729 = vpack.c.bf16 %v3725, %v3725
    %v3730 = vpack.c.bf16 %v3726, %v3726
    %v3731 = vld [vmem:[#allocation14] sm:$0xf]
    %v3732 = vld [vmem:[#allocation14 + $0x4] sm:$0xf]
    %v3733 = vld [vmem:[#allocation14 + $0x8] sm:$0xf]
    %v3734 = vld [vmem:[#allocation14 + $0xc] sm:$0xf]
    %v3735 = vld [vmem:[#allocation14 + $0x10] sm:$0xf]
    %v3736 = vld [vmem:[#allocation14 + $0x14] sm:$0xf]
    %v3737 = vld [vmem:[#allocation14 + $0x18] sm:$0xf]
    %v3738 = vld [vmem:[#allocation14 + $0x1c] sm:$0xf]
    %v3739 = vld [vmem:[#allocation14 + $0x20] sm:$0xf]
    %v3740 = vld [vmem:[#allocation14 + $0x24] sm:$0xf]
    %v3741 = vld [vmem:[#allocation14 + $0x28] sm:$0xf]
    %v3742 = vld [vmem:[#allocation14 + $0x2c] sm:$0xf]
    %v3743 = vld [vmem:[#allocation14 + $0x30] sm:$0xf]
    %v3744 = vld [vmem:[#allocation14 + $0x34] sm:$0xf]
    %v3745 = vld [vmem:[#allocation14 + $0x38] sm:$0xf]
    %v3746 = vld [vmem:[#allocation14 + $0x3c] sm:$0xf]
    %v3747 = vld [vmem:[%s17] sm:$0x1]
    %v3749 = vlaneseq
    %v3750 = vshrl.u32 %v3749, 7
    %v3751 = vsub.s32 0, %v3750
    %v3752 = vrot.slane %v3747, %v3751
    %v3756 = vunpack.c.l.b16 %v3729
    %v3757 = vunpack.c.l.b16 %v3730
    %v3758 = vrot.slane %v3757, 7
    %vm3759 = vcmask 1041409
    %v3760 = vsel %vm3759, %v3758, %v3756
    %v3761 = vpack.c.b16 %v3760, %v3760
    %v3779 = vunpack.c.l.b16 %v3731
    %v3780 = vunpack.c.l.b16 %v3732
    %v3781 = vunpack.c.l.b16 %v3733
    %v3782 = vunpack.c.l.b16 %v3734
    %v3783 = vunpack.c.l.b16 %v3735
    %v3784 = vunpack.c.l.b16 %v3736
    %v3785 = vunpack.c.l.b16 %v3737
    %v3786 = vunpack.c.l.b16 %v3738
    %v3787 = vunpack.c.l.b16 %v3739
    %v3788 = vunpack.c.l.b16 %v3740
    %v3789 = vunpack.c.l.b16 %v3741
    %v3790 = vunpack.c.l.b16 %v3742
    %v3791 = vunpack.c.l.b16 %v3743
    %v3792 = vunpack.c.l.b16 %v3744
    %v3793 = vunpack.c.l.b16 %v3745
    %v3794 = vunpack.c.l.b16 %v3746
    %v3795 = vpack.c.b16 %v3780, %v3779
    %v3796 = vpack.c.b16 %v3782, %v3781
    %v3797 = vpack.c.b16 %v3784, %v3783
    %v3798 = vpack.c.b16 %v3786, %v3785
    %v3799 = vpack.c.b16 %v3788, %v3787
    %v3800 = vpack.c.b16 %v3790, %v3789
    %v3801 = vpack.c.b16 %v3792, %v3791
    %v3802 = vpack.c.b16 %v3794, %v3793
    %3811 = vmatprep.subr.bf16.mxu0 0
    %3812 = vmatpush1.bf16.msra.mxu0 %v3795
    %3813 = vmatprep.subr.bf16.mxu0 0
    %3814 = vmatpush1.bf16.msra.mxu0 %v3796
    %3815 = vmatprep.subr.bf16.mxu0 0
    %3816 = vmatpush1.bf16.msra.mxu0 %v3797
    %3817 = vmatprep.subr.bf16.mxu0 0
    %3818 = vmatpush1.bf16.msra.mxu0 %v3798
    %3819 = vmatprep.subr.bf16.mxu0 0
    %3820 = vmatpush1.bf16.msra.mxu0 %v3799
    %3821 = vmatprep.subr.bf16.mxu0 0
    %3822 = vmatpush1.bf16.msra.mxu0 %v3800
    %3823 = vmatprep.subr.bf16.mxu0 0
    %3824 = vmatpush1.bf16.msra.mxu0 %v3801
    %3825 = vmatprep.subr.bf16.mxu0 0
    %3826 = vmatpush1.bf16.msra.mxu0 %v3802
    %3827 = vmatprep.subr.bf16.mxu0 0
    %3828 = vmatpush1.bf16.msra.mxu0 0
    %3829 = vmatprep.subr.bf16.mxu0 0
    %3830 = vmatpush1.bf16.msra.mxu0 0
    %3831 = vmatprep.subr.bf16.mxu0 0
    %3832 = vmatpush1.bf16.msra.mxu0 0
    %3833 = vmatprep.subr.bf16.mxu0 0
    %3834 = vmatpush1.bf16.msra.mxu0 0
    %3835 = vmatprep.subr.bf16.mxu0 0
    %3836 = vmatpush1.bf16.msra.mxu0 0
    %3837 = vmatprep.subr.bf16.mxu0 0
    %3838 = vmatpush1.bf16.msra.mxu0 0
    %3839 = vmatprep.subr.bf16.mxu0 0
    %3840 = vmatpush1.bf16.msra.mxu0 0
    %3841 = vmatprep.subr.bf16.mxu0 0
    %3842 = vmatpush1.bf16.msra.mxu0 0
    %3843 = vmatprep.mubr.bf16.mxu0 0
    %3844 = vmatmul.mubr.bf16.gmra.mrb[0].mxu0 %v3761
    %v3845 = vpop.f32.mrb[0].mxu0
    %v3846 = vadd.f32 %v3752, %v3845
    %v3847 = vpop.f32.mrb[0].mxu0
    %v3848 = vpop.f32.mrb[0].mxu0
    %v3849 = vpop.f32.mrb[0].mxu0
    %3850 = vdwg.mxu0
    %3851 = vst [vmem:[#allocation17] sm:$0x3] %v3846
    // Predicated region
    $region106: #{tpu_custom_call.1} parent=1 // pred_check
      _
    $region107: #{tpu_custom_call.1} parent=1 // pred_check_branch
      %3853 = sbr.rel (0) target = $region109
    $region108: #{tpu_custom_call.1} parent=1 // pred_region
      %s3855 = ssub.s32 256, 256
      %3856 = vsyncadd [#allocation4], %s3855
      %s3857 = sshll.u32 [#allocation16], 4
      %s3858 = int_to_ptr.vmem [resolvable:$true] %s3857
      %3863 = dma.vmem_to_hbm [thread:$0]  %s3858, 256, %s18, [#allocation4], 128, 128, 8
    $region109: #{tpu_custom_call.1} parent=1 // pred_fallthru
      _
    // Predicated region
    $region110: #{tpu_custom_call.1} parent=1 // pred_check
      _
    $region111: #{tpu_custom_call.1} parent=1 // pred_check_branch
      %3865 = sbr.rel (0) target = $region113
    $region112: #{tpu_custom_call.1} parent=1 // pred_region
      %s3867 = ssub.s32 32, 32
      %3868 = vsyncadd [#allocation18], %s3867
      %s3870 = sshll.u32 [#allocation17], 4
      %s3871 = int_to_ptr.vmem [resolvable:$true] %s3870
      %3873 = dma.vmem_to_hbm [thread:$0]  %s3871, 32, %s19, [#allocation18]
    $region113: #{tpu_custom_call.1} parent=1 // pred_fallthru
      _
    // Predicated region
    $region114: #{tpu_custom_call.1} parent=1 // pred_check
      _
    $region115: #{tpu_custom_call.1} parent=1 // pred_check_branch
      %3875 = sbr.rel (0) target = $region117
    $region116: #{tpu_custom_call.1} parent=1 // pred_region
      %3876 = dma.done [#allocation4], 256
    $region117: #{tpu_custom_call.1} parent=1 // pred_fallthru
      _
    // Predicated region
    $region118: #{tpu_custom_call.1} parent=1 // pred_check
      _
    $region119: #{tpu_custom_call.1} parent=1 // pred_check_branch
      %3878 = sbr.rel (0) target = $region121
    $region120: #{tpu_custom_call.1} parent=1 // pred_region
      %3879 = dma.done [#allocation18], 32
    $region121: #{tpu_custom_call.1} parent=1 // pred_fallthru
      _
    %3880 = vsyncpa [#allocation3], 1
    %3881 = vsyncpa [#allocation6], 1
    %3882 = vsyncpa [#allocation9], 1
    %3883 = vsyncpa [#allocation12], 1
    %3884 = vsyncpa [#allocation15], 1
    %3885 = vsyncpa [#allocation4], 1
    %3886 = vsyncpa [#allocation18], 1

</llo_original>
